<compile_context>
chip_gen: v7x
topology: tpu7x:2x2x1
jax: 0.10.0
libtpu: 0.0.40
codegen_flags: <defaults>
</compile_context>

<pallas_src>
import functools

import jax
import jax.numpy as jnp
from jax import lax
from jax.experimental import pallas as pl
from jax.experimental.pallas import tpu as pltpu

EPS = 1e-5                       # nn.BatchNorm2d default eps
LANE = 128                       # Cout padded to a multiple of this (lane width)
VMEM_LIMIT = 48 * 1024 * 1024    # < 64 MiB physical VMEM on v7x; fine on v5e/v6e
TILE_BUDGET = 16 * 1024 * 1024   # per-step VMEM budget used to pick the row tile
# Flip to jnp.bfloat16 on v6e/v7x for ~2x MXU throughput and half the matmul
# operand DMA bytes (stats / BN folding stay f32; loosen the test tolerance).
MATMUL_DTYPE = jnp.float32


def _round_up(x, m):
    return (x + m - 1) // m * m


def _pick_row_tile(Ho, Wo, C, Cp):
    """Largest divisor of Ho whose per-step VMEM footprint fits TILE_BUDGET."""
    def tile_bytes(th):
        win = (2 * th + 2) * (Wo + 1) * 2 * C * 4   # one input window block
        acc = th * Wo * Cp * 4                      # f32 accumulator / y block
        slab = th * Wo * 2 * C * 4                  # one (TH*Wo, 2C) slab temp
        wgt = 16 * C * Cp * 4                       # weight block
        # double-buffered input/output/weight blocks + in-kernel temporaries
        # (window copy for the fused bn path, ~2 live slabs, accumulator).
        return 2 * win + 2 * acc + 2 * wgt + (win + 2 * slab + acc)
    for th in range(Ho, 0, -1):
        if Ho % th == 0 and tile_bytes(th) <= TILE_BUDGET:
            return th
    return 1


# ---------------------------------------------------------------------------
# Fused conv(k=4, s=2, p=1) + per-tile (sum, sumsq) statistics.
# Optionally applies the previous layer's BN affine + ReLU to the loaded
# input window (with a border mask so the zero padding stays exactly zero).
# ---------------------------------------------------------------------------
def _conv_stats_kernel(x_ref, w_ref, *rest, TH, Wo, C, Hp, fuse_in_bn):
    """One (image, row-tile) step.

    x_ref : (1, 2*TH+2, Wo+1, 2C)  zero-padded input rows, column-phase layout
    w_ref : (16*C, Cp)             weight, K order = (kh, kw=(jh,jp), cin)
    [insc_ref, insh_ref : (1, 2C)  previous-layer BN scale/shift (fused path)]
    y_ref : (1, TH, Wo, Cp)        raw (pre-BN) conv output tile
    st_ref: (1, 1, 2, Cp)          per-tile partial (sum, sumsq)
    """
    if fuse_in_bn:
        insc_ref, insh_ref, y_ref, st_ref = rest
    else:
        y_ref, st_ref = rest

    win = x_ref[0]                                   # (2TH+2, Wo+1, 2C)

    if fuse_in_bn:
        # Previous layer's BatchNorm affine + ReLU, fused into this pass.
        win = jnp.maximum(win * insc_ref[0] + insh_ref[0], 0.0)
        # The HBM buffer was padded with zeros *before* the affine, so force
        # the conv padding border back to exactly zero.
        grow = (lax.broadcasted_iota(jnp.int32, win.shape, 0)
                + 2 * TH * pl.program_id(1))          # global padded row
        pair = lax.broadcasted_iota(jnp.int32, win.shape, 1)
        chan = lax.broadcasted_iota(jnp.int32, win.shape, 2)
        border = ((grow == 0) | (grow == Hp - 1)
                  | ((pair == 0) & (chan < C))        # padded column 0
                  | ((pair == Wo) & (chan >= C)))     # padded column W+1
        win = jnp.where(border, 0.0, win)

    # Split window rows into (row-pair, parity) so every (kh, jh) group of the
    # 4x4 / stride-2 stencil becomes a unit-stride slab: no patch matrix, no
    # concatenate -- 8 small matmul-accumulates (K = 2C each) on the MXU.
    winr = win.reshape(TH + 1, 2, Wo + 1, 2 * C)

    acc = None
    for g in range(8):                   # g = kh*2 + jh
        kh, jh = divmod(g, 2)
        ih, ip = divmod(kh, 2)           # kh = 2*ih + ip
        slab = lax.slice(winr, (ih, ip, jh, 0),
                         (ih + TH, ip + 1, jh + Wo, 2 * C))
        slab = slab.reshape(TH * Wo, 2 * C)
        wg = w_ref[g * 2 * C:(g + 1) * 2 * C, :]     # (2C, Cp) static slice
        part = jnp.dot(slab.astype(MATMUL_DTYPE), wg,
                       preferred_element_type=jnp.float32)
        acc = part if acc is None else acc + part    # (TH*Wo, Cp) f32

    y_ref[...] = acc.reshape(1, TH, Wo, acc.shape[-1]).astype(y_ref.dtype)

    # Per-tile partial (sum, sum-of-squares) for the two-pass BatchNorm.
    st = jnp.concatenate(
        [jnp.sum(acc, axis=0, keepdims=True),
         jnp.sum(acc * acc, axis=0, keepdims=True)], axis=0)     # (2, Cp)
    st_ref[...] = st.reshape(st_ref.shape)


def conv4x4s2_stats(x_nhwc, wmat, Cp, *, in_scale=None, in_shift=None):
    """k=4, s=2, p=1 conv of an NHWC tensor against wmat [16*C, Cp].

    If in_scale/in_shift are given, relu(x*scale + shift) (the previous
    layer's training-mode BN + ReLU) is applied to the input inside the
    kernel.  Returns (y_raw [N,Ho,Wo,Cp] f32, stats [N,n_t,2,Cp] f32).
    """
    N, H, W, C = x_nhwc.shape
    assert H % 2 == 0 and W % 2 == 0
    Ho, Wo = H // 2, W // 2
    K = 16 * C
    assert wmat.shape == (K, Cp), (wmat.shape, K, Cp)
    fused = in_scale is not None

    # Zero pad (p=1), then re-view as a column-phase layout: the reshape is a
    # pure row-major regrouping (no transpose, no data expansion).
    # NOTE: for conv1 the minor dim (2*Cin) is lane-sparse when Cin is tiny;
    # acceptable because conv1 is a small share of the total work.
    xq = jnp.pad(x_nhwc, ((0, 0), (1, 1), (1, 1), (0, 0))).reshape(
        N, H + 2, Wo + 1, 2 * C)
    Hp = H + 2

    TH = _pick_row_tile(Ho, Wo, C, Cp)
    n_t = Ho // TH

    if n_t == 1:
        # Whole image in one row tile: plain blocked spec (no overlap needed).
        x_spec = pl.BlockSpec((1, Hp, Wo + 1, 2 * C), lambda n, t: (n, 0, 0, 0))
    else:
        # Overlapping (2*TH+2)-row window per tile: element-indexed row axis
        # gives the 2-row conv halo for free from the DMA (no in-kernel concat).
        x_spec = pl.BlockSpec((1, pl.Element(2 * TH + 2), Wo + 1, 2 * C),
                              lambda n, t: (n, 2 * TH * t, 0, 0))
    w_spec = pl.BlockSpec((K, Cp), lambda n, t: (0, 0))

    in_specs = [x_spec, w_spec]
    args = [xq, wmat.astype(MATMUL_DTYPE)]
    if fused:
        # Channel layout of the window is (phase, cin) -> duplicate the
        # per-channel vectors for both column phases.
        vec_spec = pl.BlockSpec((1, 2 * C), lambda n, t: (0, 0))
        in_specs += [vec_spec, vec_spec]
        args += [jnp.tile(in_scale, 2).reshape(1, 2 * C),
                 jnp.tile(in_shift, 2).reshape(1, 2 * C)]

    kernel = functools.partial(_conv_stats_kernel, TH=TH, Wo=Wo, C=C, Hp=Hp,
                               fuse_in_bn=fused)
    y_raw, stats = pl.pallas_call(
        kernel,
        grid=(N, n_t),
        in_specs=in_specs,
        out_specs=[
            pl.BlockSpec((1, TH, Wo, Cp), lambda n, t: (n, t, 0, 0)),
            pl.BlockSpec((1, 1, 2, Cp), lambda n, t: (n, t, 0, 0)),
        ],
        out_shape=[
            jax.ShapeDtypeStruct((N, Ho, Wo, Cp), jnp.float32),
            jax.ShapeDtypeStruct((N, n_t, 2, Cp), jnp.float32),
        ],
        compiler_params=pltpu.CompilerParams(
            dimension_semantics=("parallel", "parallel"),
            vmem_limit_bytes=VMEM_LIMIT),
    )(*args)
    return y_raw, stats


def _bn_scale_shift(stats, gamma_p, beta_p, count):
    """(sum, sumsq) partials -> per-channel affine (scale, shift).  Tiny XLA op."""
    s = jnp.sum(stats, axis=(0, 1))                          # (2, Cp)
    mean = s[0] / count
    var = jnp.maximum(s[1] / count - mean * mean, 0.0)       # biased batch variance
    scale = gamma_p * lax.rsqrt(var + EPS)
    shift = beta_p - mean * scale
    return scale, shift


# ---------------------------------------------------------------------------
# Forward pass of the block.
# ---------------------------------------------------------------------------
def residual_upsample_block(x, params):
    """x: [N, Cin, H, W] f32 (NCHW) -> [N, Cout, H//4, W//4] f32 (NCHW)."""
    N, Cin, H, W = x.shape
    assert H % 4 == 0 and W % 4 == 0
    Cout = params["w1"].shape[0]
    Cp = _round_up(Cout, LANE)

    # Parameter repacking (tiny, XLA side): conv weights -> [16*C, Cp] matmul
    # layout, row order (kh, kw, cin) == (kh, jh, jp, cin), lane-padded along
    # Cout (and along Cin for conv2, whose input is already lane-padded).
    # Conv biases are dropped: a per-channel constant before training-mode BN
    # is exactly cancelled by the mean subtraction.
    w1 = jnp.transpose(params["w1"], (2, 3, 1, 0))                      # (4,4,Cin,Cout)
    w1 = jnp.pad(w1, ((0, 0), (0, 0), (0, 0), (0, Cp - Cout))).reshape(16 * Cin, Cp)
    w2 = jnp.transpose(params["w2"], (2, 3, 1, 0))                      # (4,4,Cout,Cout)
    w2 = jnp.pad(w2, ((0, 0), (0, 0), (0, Cp - Cout), (0, Cp - Cout))).reshape(16 * Cp, Cp)
    g1 = jnp.pad(params["g1"], (0, Cp - Cout))
    be1 = jnp.pad(params["be1"], (0, Cp - Cout))
    g2 = jnp.pad(params["g2"], (0, Cp - Cout))
    be2 = jnp.pad(params["be2"], (0, Cp - Cout))

    # NCHW -> NHWC once; everything below stays channels-last.
    xh = jnp.transpose(x, (0, 2, 3, 1))

    # conv1 + batch stats.
    y1_raw, st1 = conv4x4s2_stats(xh, w1, Cp)
    sc1, sh1 = _bn_scale_shift(st1, g1, be1, N * (H // 2) * (W // 2))

    # conv2 with bn1 + ReLU fused into the input path (no standalone bn pass,
    # no extra HBM round trip of the largest intermediate) + batch stats.
    y2_raw, st2 = conv4x4s2_stats(y1_raw, w2, Cp, in_scale=sc1, in_shift=sh1)
    sc2, sh2 = _bn_scale_shift(st2, g2, be2, N * (H // 4) * (W // 4))

    # bn2 is a trivial per-channel affine: let XLA fuse it into the final
    # lane-padding slice + NHWC->NCHW transpose (cheaper than another pass).
    y2 = y2_raw * sc2 + sh2
    out = jnp.transpose(y2[..., :Cout], (0, 3, 1, 2))

    # TODO(synk): the reference `x += residual` is shape-incompatible as
    # written (two stride-2 convs shrink H,W by 4x; PyTorch would raise), so
    # the residual add is intentionally not performed rather than faked.
    return out


# ---------------------------------------------------------------------------
# Pure-JAX reference (same semantics) for validation.
# ---------------------------------------------------------------------------
def _reference(x, params):
    def conv(x, w, b):
        y = lax.conv_general_dilated(
            x, w, window_strides=(2, 2), padding=((1, 1), (1, 1)),
            dimension_numbers=("NCHW", "OIHW", "NCHW"),
            precision=lax.Precision.HIGHEST,
        )
        return y + b[None, :, None, None]

    def bn(x, g, be):
        mean = jnp.mean(x, axis=(0, 2, 3), keepdims=True)
        var = jnp.mean((x - mean) ** 2, axis=(0, 2, 3), keepdims=True)
        return (x - mean) * lax.rsqrt(var + EPS) * g[None, :, None, None] + be[None, :, None, None]

    y = jnp.maximum(bn(conv(x, params["w1"], params["b1"]), params["g1"], params["be1"]), 0.0)
    y = bn(conv(y, params["w2"], params["b2"]), params["g2"], params["be2"])
    return y


if __name__ == "__main__":
    key = jax.random.PRNGKey(0)
    kx, kw1, kb1, kw2, kb2 = jax.random.split(key, 5)

    N, Cin, H, W = 2, 4, 16, 16
    Cout = 4

    x = jax.random.normal(kx, (N, Cin, H, W), jnp.float32)

    # Deterministic synthetic parameters (PyTorch-default-like scales; BN
    # weight=1, bias=0 as in nn.BatchNorm2d default init).
    fan1 = Cin * 16
    fan2 = Cout * 16
    params = dict(
        w1=jax.random.uniform(kw1, (Cout, Cin, 4, 4), jnp.float32, -1.0, 1.0) / jnp.sqrt(fan1),
        b1=jax.random.uniform(kb1, (Cout,), jnp.float32, -1.0, 1.0) / jnp.sqrt(fan1),
        g1=jnp.ones((Cout,), jnp.float32),
        be1=jnp.zeros((Cout,), jnp.float32),
        w2=jax.random.uniform(kw2, (Cout, Cout, 4, 4), jnp.float32, -1.0, 1.0) / jnp.sqrt(fan2),
        b2=jax.random.uniform(kb2, (Cout,), jnp.float32, -1.0, 1.0) / jnp.sqrt(fan2),
        g2=jnp.ones((Cout,), jnp.float32),
        be2=jnp.zeros((Cout,), jnp.float32),
    )

    fwd = jax.jit(residual_upsample_block)
    out = jax.block_until_ready(fwd(x, params))
    ref = _reference(x, params)

    assert out.shape == (N, Cout, H // 4, W // 4), out.shape
    max_err = float(jnp.max(jnp.abs(out - ref)))
    # Tolerance covers the MXU f32 matmul path vs. the HIGHEST-precision XLA
    # reference conv (and the sum/sumsq batch-variance formulation).
    assert jnp.allclose(out, ref, atol=2e-2, rtol=2e-2), max_err
    print("KERNEL_OK")
</pallas_src>

<mosaic_0001>
module attributes {stable_mosaic.version = 11 : i64} {
  func.func @_conv_stats_kernel(%arg0: i32, %arg1: i32, %arg2: memref<1x18x9x8xf32, #tpu.memory_space<vmem>>, %arg3: memref<64x128xf32, #tpu.memory_space<vmem>>, %arg4: memref<1x8x8x128xf32, #tpu.memory_space<vmem>>, %arg5: memref<1x1x2x128xf32, #tpu.memory_space<vmem>>) attributes {dimension_semantics = [#tpu.dimension_semantics<parallel>, #tpu.dimension_semantics<parallel>], iteration_bounds = array<i64: 2, 1>, scalar_prefetch = 0 : i64, scratch_operands = 0 : i64, tpu.core_type = #tpu.core_type<tc>, window_params = [{transform_indices = @transform_0, window_bounds = array<i64: 1, 18, 9, 8>}, {pipeline_mode = #tpu.pipeline_mode<synchronous>, transform_indices = @transform_1, window_bounds = array<i64: 64, 128>}, {transform_indices = @transform_2, window_bounds = array<i64: 1, 8, 8, 128>}, {transform_indices = @transform_3, window_bounds = array<i64: 1, 1, 2, 128>}]} {
    %c0 = arith.constant 0 : index
    %c0_0 = arith.constant 0 : index
    %c0_1 = arith.constant 0 : index
    %c0_2 = arith.constant 0 : index
    %0 = vector.load %arg2[%c0, %c0_0, %c0_1, %c0_2] : memref<1x18x9x8xf32, #tpu.memory_space<vmem>>, vector<1x18x9x8xf32>
    %1 = vector.shape_cast %0 : vector<1x18x9x8xf32> to vector<18x9x8xf32>
    %2 = vector.shape_cast %1 : vector<18x9x8xf32> to vector<9x2x9x8xf32>
    %3 = vector.extract_strided_slice %2 {offsets = [0, 0, 0, 0], sizes = [8, 1, 8, 8], strides = [1, 1, 1, 1]} : vector<9x2x9x8xf32> to vector<8x1x8x8xf32>
    %4 = vector.shape_cast %3 : vector<8x1x8x8xf32> to vector<64x8xf32>
    %c0_3 = arith.constant 0 : index
    %c0_4 = arith.constant 0 : index
    %5 = vector.load %arg3[%c0_3, %c0_4] : memref<64x128xf32, #tpu.memory_space<vmem>>, vector<8x128xf32>
    %cst = arith.constant dense<0.000000e+00> : vector<64x128xf32>
    %6 = tpu.matmul %4, %5, %cst {dimension_numbers = #tpu.dot_dimension_numbers<[1], [0], [0], [1], [0, 0, 1, 1], [], []>} : vector<64x8xf32>, vector<8x128xf32>, vector<64x128xf32> -> vector<64x128xf32>
    %7 = vector.extract_strided_slice %2 {offsets = [0, 0, 1, 0], sizes = [8, 1, 8, 8], strides = [1, 1, 1, 1]} : vector<9x2x9x8xf32> to vector<8x1x8x8xf32>
    %8 = vector.shape_cast %7 : vector<8x1x8x8xf32> to vector<64x8xf32>
    %c8 = arith.constant 8 : index
    %c0_5 = arith.constant 0 : index
    %9 = vector.load %arg3[%c8, %c0_5] : memref<64x128xf32, #tpu.memory_space<vmem>>, vector<8x128xf32>
    %cst_6 = arith.constant dense<0.000000e+00> : vector<64x128xf32>
    %10 = tpu.matmul %8, %9, %cst_6 {dimension_numbers = #tpu.dot_dimension_numbers<[1], [0], [0], [1], [0, 0, 1, 1], [], []>} : vector<64x8xf32>, vector<8x128xf32>, vector<64x128xf32> -> vector<64x128xf32>
    %11 = arith.addf %6, %10 : vector<64x128xf32>
    %12 = vector.extract_strided_slice %2 {offsets = [0, 1, 0, 0], sizes = [8, 1, 8, 8], strides = [1, 1, 1, 1]} : vector<9x2x9x8xf32> to vector<8x1x8x8xf32>
    %13 = vector.shape_cast %12 : vector<8x1x8x8xf32> to vector<64x8xf32>
    %c16 = arith.constant 16 : index
    %c0_7 = arith.constant 0 : index
    %14 = vector.load %arg3[%c16, %c0_7] : memref<64x128xf32, #tpu.memory_space<vmem>>, vector<8x128xf32>
    %cst_8 = arith.constant dense<0.000000e+00> : vector<64x128xf32>
    %15 = tpu.matmul %13, %14, %cst_8 {dimension_numbers = #tpu.dot_dimension_numbers<[1], [0], [0], [1], [0, 0, 1, 1], [], []>} : vector<64x8xf32>, vector<8x128xf32>, vector<64x128xf32> -> vector<64x128xf32>
    %16 = arith.addf %11, %15 : vector<64x128xf32>
    %17 = vector.extract_strided_slice %2 {offsets = [0, 1, 1, 0], sizes = [8, 1, 8, 8], strides = [1, 1, 1, 1]} : vector<9x2x9x8xf32> to vector<8x1x8x8xf32>
    %18 = vector.shape_cast %17 : vector<8x1x8x8xf32> to vector<64x8xf32>
    %c24 = arith.constant 24 : index
    %c0_9 = arith.constant 0 : index
    %19 = vector.load %arg3[%c24, %c0_9] : memref<64x128xf32, #tpu.memory_space<vmem>>, vector<8x128xf32>
    %cst_10 = arith.constant dense<0.000000e+00> : vector<64x128xf32>
    %20 = tpu.matmul %18, %19, %cst_10 {dimension_numbers = #tpu.dot_dimension_numbers<[1], [0], [0], [1], [0, 0, 1, 1], [], []>} : vector<64x8xf32>, vector<8x128xf32>, vector<64x128xf32> -> vector<64x128xf32>
    %21 = arith.addf %16, %20 : vector<64x128xf32>
    %22 = vector.extract_strided_slice %2 {offsets = [1, 0, 0, 0], sizes = [8, 1, 8, 8], strides = [1, 1, 1, 1]} : vector<9x2x9x8xf32> to vector<8x1x8x8xf32>
    %23 = vector.shape_cast %22 : vector<8x1x8x8xf32> to vector<64x8xf32>
    %c32 = arith.constant 32 : index
    %c0_11 = arith.constant 0 : index
    %24 = vector.load %arg3[%c32, %c0_11] : memref<64x128xf32, #tpu.memory_space<vmem>>, vector<8x128xf32>
    %cst_12 = arith.constant dense<0.000000e+00> : vector<64x128xf32>
    %25 = tpu.matmul %23, %24, %cst_12 {dimension_numbers = #tpu.dot_dimension_numbers<[1], [0], [0], [1], [0, 0, 1, 1], [], []>} : vector<64x8xf32>, vector<8x128xf32>, vector<64x128xf32> -> vector<64x128xf32>
    %26 = arith.addf %21, %25 : vector<64x128xf32>
    %27 = vector.extract_strided_slice %2 {offsets = [1, 0, 1, 0], sizes = [8, 1, 8, 8], strides = [1, 1, 1, 1]} : vector<9x2x9x8xf32> to vector<8x1x8x8xf32>
    %28 = vector.shape_cast %27 : vector<8x1x8x8xf32> to vector<64x8xf32>
    %c40 = arith.constant 40 : index
    %c0_13 = arith.constant 0 : index
    %29 = vector.load %arg3[%c40, %c0_13] : memref<64x128xf32, #tpu.memory_space<vmem>>, vector<8x128xf32>
    %cst_14 = arith.constant dense<0.000000e+00> : vector<64x128xf32>
    %30 = tpu.matmul %28, %29, %cst_14 {dimension_numbers = #tpu.dot_dimension_numbers<[1], [0], [0], [1], [0, 0, 1, 1], [], []>} : vector<64x8xf32>, vector<8x128xf32>, vector<64x128xf32> -> vector<64x128xf32>
    %31 = arith.addf %26, %30 : vector<64x128xf32>
    %32 = vector.extract_strided_slice %2 {offsets = [1, 1, 0, 0], sizes = [8, 1, 8, 8], strides = [1, 1, 1, 1]} : vector<9x2x9x8xf32> to vector<8x1x8x8xf32>
    %33 = vector.shape_cast %32 : vector<8x1x8x8xf32> to vector<64x8xf32>
    %c48 = arith.constant 48 : index
    %c0_15 = arith.constant 0 : index
    %34 = vector.load %arg3[%c48, %c0_15] : memref<64x128xf32, #tpu.memory_space<vmem>>, vector<8x128xf32>
    %cst_16 = arith.constant dense<0.000000e+00> : vector<64x128xf32>
    %35 = tpu.matmul %33, %34, %cst_16 {dimension_numbers = #tpu.dot_dimension_numbers<[1], [0], [0], [1], [0, 0, 1, 1], [], []>} : vector<64x8xf32>, vector<8x128xf32>, vector<64x128xf32> -> vector<64x128xf32>
    %36 = arith.addf %31, %35 : vector<64x128xf32>
    %37 = vector.extract_strided_slice %2 {offsets = [1, 1, 1, 0], sizes = [8, 1, 8, 8], strides = [1, 1, 1, 1]} : vector<9x2x9x8xf32> to vector<8x1x8x8xf32>
    %38 = vector.shape_cast %37 : vector<8x1x8x8xf32> to vector<64x8xf32>
    %c56 = arith.constant 56 : index
    %c0_17 = arith.constant 0 : index
    %39 = vector.load %arg3[%c56, %c0_17] : memref<64x128xf32, #tpu.memory_space<vmem>>, vector<8x128xf32>
    %cst_18 = arith.constant dense<0.000000e+00> : vector<64x128xf32>
    %40 = tpu.matmul %38, %39, %cst_18 {dimension_numbers = #tpu.dot_dimension_numbers<[1], [0], [0], [1], [0, 0, 1, 1], [], []>} : vector<64x8xf32>, vector<8x128xf32>, vector<64x128xf32> -> vector<64x128xf32>
    %41 = arith.addf %36, %40 : vector<64x128xf32>
    %42 = vector.shape_cast %41 : vector<64x128xf32> to vector<1x8x8x128xf32>
    %c0_19 = arith.constant 0 : index
    %c0_20 = arith.constant 0 : index
    %c0_21 = arith.constant 0 : index
    %c0_22 = arith.constant 0 : index
    %43 = vector.load %arg4[%c0_19, %c0_20, %c0_21, %c0_22] : memref<1x8x8x128xf32, #tpu.memory_space<vmem>>, vector<1x8x8x128xf32>
    tpu.vector_store %arg4[%c0_19, %c0_20, %c0_21, %c0_22], %42 {strides = array<i32>} : memref<1x8x8x128xf32, #tpu.memory_space<vmem>>, vector<1x8x8x128xf32>,
    %cst_23 = arith.constant dense<0.000000e+00> : vector<128xf32>
    %44 = vector.multi_reduction <add>, %41, %cst_23 [0] : vector<64x128xf32> to vector<128xf32>
    %45 = vector.shape_cast %44 : vector<128xf32> to vector<1x128xf32>
    %46 = arith.mulf %41, %41 : vector<64x128xf32>
    %cst_24 = arith.constant dense<0.000000e+00> : vector<128xf32>
    %47 = vector.multi_reduction <add>, %46, %cst_24 [0] : vector<64x128xf32> to vector<128xf32>
    %48 = vector.shape_cast %47 : vector<128xf32> to vector<1x128xf32>
    %49 = tpu.concatenate %45, %48 in 0 : vector<1x128xf32>, vector<1x128xf32> -> vector<2x128xf32>
    %50 = vector.shape_cast %49 : vector<2x128xf32> to vector<1x1x2x128xf32>
    %c0_25 = arith.constant 0 : index
    %c0_26 = arith.constant 0 : index
    %c0_27 = arith.constant 0 : index
    %c0_28 = arith.constant 0 : index
    %51 = vector.load %arg5[%c0_25, %c0_26, %c0_27, %c0_28] : memref<1x1x2x128xf32, #tpu.memory_space<vmem>>, vector<1x1x2x128xf32>
    tpu.vector_store %arg5[%c0_25, %c0_26, %c0_27, %c0_28], %50 {strides = array<i32>} : memref<1x1x2x128xf32, #tpu.memory_space<vmem>>, vector<1x1x2x128xf32>,
    return
  }
  func.func @transform_0(%arg0: i32, %arg1: i32) -> (i32, i32, i32, i32) {
    %c0_i32 = arith.constant 0 : i32
    %c0_i32_0 = arith.constant 0 : i32
    %c0_i32_1 = arith.constant 0 : i32
    %c0_i32_2 = arith.constant 0 : i32
    return %arg0, %c0_i32, %c0_i32_0, %c0_i32_1 : i32, i32, i32, i32
  }
  func.func @transform_1(%arg0: i32, %arg1: i32) -> (i32, i32) {
    %c0_i32 = arith.constant 0 : i32
    %c0_i32_0 = arith.constant 0 : i32
    %c0_i32_1 = arith.constant 0 : i32
    return %c0_i32, %c0_i32_0 : i32, i32
  }
  func.func @transform_2(%arg0: i32, %arg1: i32) -> (i32, i32, i32, i32) {
    %c0_i32 = arith.constant 0 : i32
    %c0_i32_0 = arith.constant 0 : i32
    %c0_i32_1 = arith.constant 0 : i32
    return %arg0, %arg1, %c0_i32, %c0_i32_0 : i32, i32, i32, i32
  }
  func.func @transform_3(%arg0: i32, %arg1: i32) -> (i32, i32, i32, i32) {
    %c0_i32 = arith.constant 0 : i32
    %c0_i32_0 = arith.constant 0 : i32
    %c0_i32_1 = arith.constant 0 : i32
    return %arg0, %arg1, %c0_i32, %c0_i32_0 : i32, i32, i32, i32
  }
}

module attributes {stable_mosaic.version = 11 : i64} {
  func.func @_conv_stats_kernel(%arg0: i32, %arg1: i32, %arg2: memref<1x10x5x256xf32, #tpu.memory_space<vmem>>, %arg3: memref<2048x128xf32, #tpu.memory_space<vmem>>, %arg4: memref<1x256xf32, #tpu.memory_space<vmem>>, %arg5: memref<1x256xf32, #tpu.memory_space<vmem>>, %arg6: memref<1x4x4x128xf32, #tpu.memory_space<vmem>>, %arg7: memref<1x1x2x128xf32, #tpu.memory_space<vmem>>) attributes {dimension_semantics = [#tpu.dimension_semantics<parallel>, #tpu.dimension_semantics<parallel>], iteration_bounds = array<i64: 2, 1>, scalar_prefetch = 0 : i64, scratch_operands = 0 : i64, tpu.core_type = #tpu.core_type<tc>, window_params = [{transform_indices = @transform_0, window_bounds = array<i64: 1, 10, 5, 256>}, {pipeline_mode = #tpu.pipeline_mode<synchronous>, transform_indices = @transform_1, window_bounds = array<i64: 2048, 128>}, {pipeline_mode = #tpu.pipeline_mode<synchronous>, transform_indices = @transform_2, window_bounds = array<i64: 1, 256>}, {pipeline_mode = #tpu.pipeline_mode<synchronous>, transform_indices = @transform_3, window_bounds = array<i64: 1, 256>}, {transform_indices = @transform_4, window_bounds = array<i64: 1, 4, 4, 128>}, {transform_indices = @transform_5, window_bounds = array<i64: 1, 1, 2, 128>}]} {
    %c0 = arith.constant 0 : index
    %c0_0 = arith.constant 0 : index
    %c0_1 = arith.constant 0 : index
    %c0_2 = arith.constant 0 : index
    %0 = vector.load %arg2[%c0, %c0_0, %c0_1, %c0_2] : memref<1x10x5x256xf32, #tpu.memory_space<vmem>>, vector<1x10x5x256xf32>
    %1 = vector.shape_cast %0 : vector<1x10x5x256xf32> to vector<10x5x256xf32>
    %c0_3 = arith.constant 0 : index
    %c0_4 = arith.constant 0 : index
    %2 = vector.load %arg4[%c0_3, %c0_4] : memref<1x256xf32, #tpu.memory_space<vmem>>, vector<1x256xf32>
    %3 = vector.shape_cast %2 : vector<1x256xf32> to vector<256xf32>
    %4 = vector.shape_cast %3 : vector<256xf32> to vector<1x1x256xf32>
    %5 = vector.broadcast %4 : vector<1x1x256xf32> to vector<10x5x256xf32>
    %6 = arith.mulf %1, %5 : vector<10x5x256xf32>
    %c0_5 = arith.constant 0 : index
    %c0_6 = arith.constant 0 : index
    %7 = vector.load %arg5[%c0_5, %c0_6] : memref<1x256xf32, #tpu.memory_space<vmem>>, vector<1x256xf32>
    %8 = vector.shape_cast %7 : vector<1x256xf32> to vector<256xf32>
    %9 = vector.shape_cast %8 : vector<256xf32> to vector<1x1x256xf32>
    %10 = vector.broadcast %9 : vector<1x1x256xf32> to vector<10x5x256xf32>
    %11 = arith.addf %6, %10 : vector<10x5x256xf32>
    %cst = arith.constant 0.000000e+00 : f32
    %12 = vector.broadcast %cst : f32 to vector<10x5x256xf32>
    %13 = arith.maximumf %11, %12 : vector<10x5x256xf32>
    %14 = tpu.iota {dimensions = array<i32: 0>} : vector<10x5x256xi32>
    %c8_i32 = arith.constant 8 : i32
    %15 = arith.muli %c8_i32, %arg1 : i32
    %16 = vector.broadcast %15 : i32 to vector<10x5x256xi32>
    %17 = arith.addi %14, %16 : vector<10x5x256xi32>
    %18 = tpu.iota {dimensions = array<i32: 1>} : vector<10x5x256xi32>
    %19 = tpu.iota {dimensions = array<i32: 2>} : vector<10x5x256xi32>
    %c0_i32 = arith.constant 0 : i32
    %20 = vector.broadcast %c0_i32 : i32 to vector<10x5x256xi32>
    %21 = arith.cmpi eq, %17, %20 : vector<10x5x256xi32>
    %c9_i32 = arith.constant 9 : i32
    %22 = vector.broadcast %c9_i32 : i32 to vector<10x5x256xi32>
    %23 = arith.cmpi eq, %17, %22 : vector<10x5x256xi32>
    %24 = arith.ori %21, %23 : vector<10x5x256xi1>
    %c0_i32_7 = arith.constant 0 : i32
    %25 = vector.broadcast %c0_i32_7 : i32 to vector<10x5x256xi32>
    %26 = arith.cmpi eq, %18, %25 : vector<10x5x256xi32>
    %c128_i32 = arith.constant 128 : i32
    %27 = vector.broadcast %c128_i32 : i32 to vector<10x5x256xi32>
    %28 = arith.cmpi slt, %19, %27 : vector<10x5x256xi32>
    %29 = arith.andi %26, %28 : vector<10x5x256xi1>
    %30 = arith.ori %24, %29 : vector<10x5x256xi1>
    %c4_i32 = arith.constant 4 : i32
    %31 = vector.broadcast %c4_i32 : i32 to vector<10x5x256xi32>
    %32 = arith.cmpi eq, %18, %31 : vector<10x5x256xi32>
    %c128_i32_8 = arith.constant 128 : i32
    %33 = vector.broadcast %c128_i32_8 : i32 to vector<10x5x256xi32>
    %34 = arith.cmpi sge, %19, %33 : vector<10x5x256xi32>
    %35 = arith.andi %32, %34 : vector<10x5x256xi1>
    %36 = arith.ori %30, %35 : vector<10x5x256xi1>
    %cst_9 = arith.constant 0.000000e+00 : f32
    %37 = vector.broadcast %cst_9 : f32 to vector<10x5x256xf32>
    %38 = arith.select %36, %37, %13 : vector<10x5x256xi1>, vector<10x5x256xf32>
    %39 = vector.shape_cast %38 : vector<10x5x256xf32> to vector<5x2x5x256xf32>
    %40 = vector.extract_strided_slice %39 {offsets = [0, 0, 0, 0], sizes = [4, 1, 4, 256], strides = [1, 1, 1, 1]} : vector<5x2x5x256xf32> to vector<4x1x4x256xf32>
    %41 = vector.shape_cast %40 : vector<4x1x4x256xf32> to vector<16x256xf32>
    %c0_10 = arith.constant 0 : index
    %c0_11 = arith.constant 0 : index
    %42 = vector.load %arg3[%c0_10, %c0_11] : memref<2048x128xf32, #tpu.memory_space<vmem>>, vector<256x128xf32>
    %cst_12 = arith.constant dense<0.000000e+00> : vector<16x128xf32>
    %43 = tpu.matmul %41, %42, %cst_12 {dimension_numbers = #tpu.dot_dimension_numbers<[1], [0], [0], [1], [0, 0, 1, 1], [], []>} : vector<16x256xf32>, vector<256x128xf32>, vector<16x128xf32> -> vector<16x128xf32>
    %44 = vector.extract_strided_slice %39 {offsets = [0, 0, 1, 0], sizes = [4, 1, 4, 256], strides = [1, 1, 1, 1]} : vector<5x2x5x256xf32> to vector<4x1x4x256xf32>
    %45 = vector.shape_cast %44 : vector<4x1x4x256xf32> to vector<16x256xf32>
    %c256 = arith.constant 256 : index
    %c0_13 = arith.constant 0 : index
    %46 = vector.load %arg3[%c256, %c0_13] : memref<2048x128xf32, #tpu.memory_space<vmem>>, vector<256x128xf32>
    %cst_14 = arith.constant dense<0.000000e+00> : vector<16x128xf32>
    %47 = tpu.matmul %45, %46, %cst_14 {dimension_numbers = #tpu.dot_dimension_numbers<[1], [0], [0], [1], [0, 0, 1, 1], [], []>} : vector<16x256xf32>, vector<256x128xf32>, vector<16x128xf32> -> vector<16x128xf32>
    %48 = arith.addf %43, %47 : vector<16x128xf32>
    %49 = vector.extract_strided_slice %39 {offsets = [0, 1, 0, 0], sizes = [4, 1, 4, 256], strides = [1, 1, 1, 1]} : vector<5x2x5x256xf32> to vector<4x1x4x256xf32>
    %50 = vector.shape_cast %49 : vector<4x1x4x256xf32> to vector<16x256xf32>
    %c512 = arith.constant 512 : index
    %c0_15 = arith.constant 0 : index
    %51 = vector.load %arg3[%c512, %c0_15] : memref<2048x128xf32, #tpu.memory_space<vmem>>, vector<256x128xf32>
    %cst_16 = arith.constant dense<0.000000e+00> : vector<16x128xf32>
    %52 = tpu.matmul %50, %51, %cst_16 {dimension_numbers = #tpu.dot_dimension_numbers<[1], [0], [0], [1], [0, 0, 1, 1], [], []>} : vector<16x256xf32>, vector<256x128xf32>, vector<16x128xf32> -> vector<16x128xf32>
    %53 = arith.addf %48, %52 : vector<16x128xf32>
    %54 = vector.extract_strided_slice %39 {offsets = [0, 1, 1, 0], sizes = [4, 1, 4, 256], strides = [1, 1, 1, 1]} : vector<5x2x5x256xf32> to vector<4x1x4x256xf32>
    %55 = vector.shape_cast %54 : vector<4x1x4x256xf32> to vector<16x256xf32>
    %c768 = arith.constant 768 : index
    %c0_17 = arith.constant 0 : index
    %56 = vector.load %arg3[%c768, %c0_17] : memref<2048x128xf32, #tpu.memory_space<vmem>>, vector<256x128xf32>
    %cst_18 = arith.constant dense<0.000000e+00> : vector<16x128xf32>
    %57 = tpu.matmul %55, %56, %cst_18 {dimension_numbers = #tpu.dot_dimension_numbers<[1], [0], [0], [1], [0, 0, 1, 1], [], []>} : vector<16x256xf32>, vector<256x128xf32>, vector<16x128xf32> -> vector<16x128xf32>
    %58 = arith.addf %53, %57 : vector<16x128xf32>
    %59 = vector.extract_strided_slice %39 {offsets = [1, 0, 0, 0], sizes = [4, 1, 4, 256], strides = [1, 1, 1, 1]} : vector<5x2x5x256xf32> to vector<4x1x4x256xf32>
    %60 = vector.shape_cast %59 : vector<4x1x4x256xf32> to vector<16x256xf32>
    %c1024 = arith.constant 1024 : index
    %c0_19 = arith.constant 0 : index
    %61 = vector.load %arg3[%c1024, %c0_19] : memref<2048x128xf32, #tpu.memory_space<vmem>>, vector<256x128xf32>
    %cst_20 = arith.constant dense<0.000000e+00> : vector<16x128xf32>
    %62 = tpu.matmul %60, %61, %cst_20 {dimension_numbers = #tpu.dot_dimension_numbers<[1], [0], [0], [1], [0, 0, 1, 1], [], []>} : vector<16x256xf32>, vector<256x128xf32>, vector<16x128xf32> -> vector<16x128xf32>
    %63 = arith.addf %58, %62 : vector<16x128xf32>
    %64 = vector.extract_strided_slice %39 {offsets = [1, 0, 1, 0], sizes = [4, 1, 4, 256], strides = [1, 1, 1, 1]} : vector<5x2x5x256xf32> to vector<4x1x4x256xf32>
    %65 = vector.shape_cast %64 : vector<4x1x4x256xf32> to vector<16x256xf32>
    %c1280 = arith.constant 1280 : index
    %c0_21 = arith.constant 0 : index
    %66 = vector.load %arg3[%c1280, %c0_21] : memref<2048x128xf32, #tpu.memory_space<vmem>>, vector<256x128xf32>
    %cst_22 = arith.constant dense<0.000000e+00> : vector<16x128xf32>
    %67 = tpu.matmul %65, %66, %cst_22 {dimension_numbers = #tpu.dot_dimension_numbers<[1], [0], [0], [1], [0, 0, 1, 1], [], []>} : vector<16x256xf32>, vector<256x128xf32>, vector<16x128xf32> -> vector<16x128xf32>
    %68 = arith.addf %63, %67 : vector<16x128xf32>
    %69 = vector.extract_strided_slice %39 {offsets = [1, 1, 0, 0], sizes = [4, 1, 4, 256], strides = [1, 1, 1, 1]} : vector<5x2x5x256xf32> to vector<4x1x4x256xf32>
    %70 = vector.shape_cast %69 : vector<4x1x4x256xf32> to vector<16x256xf32>
    %c1536 = arith.constant 1536 : index
    %c0_23 = arith.constant 0 : index
    %71 = vector.load %arg3[%c1536, %c0_23] : memref<2048x128xf32, #tpu.memory_space<vmem>>, vector<256x128xf32>
    %cst_24 = arith.constant dense<0.000000e+00> : vector<16x128xf32>
    %72 = tpu.matmul %70, %71, %cst_24 {dimension_numbers = #tpu.dot_dimension_numbers<[1], [0], [0], [1], [0, 0, 1, 1], [], []>} : vector<16x256xf32>, vector<256x128xf32>, vector<16x128xf32> -> vector<16x128xf32>
    %73 = arith.addf %68, %72 : vector<16x128xf32>
    %74 = vector.extract_strided_slice %39 {offsets = [1, 1, 1, 0], sizes = [4, 1, 4, 256], strides = [1, 1, 1, 1]} : vector<5x2x5x256xf32> to vector<4x1x4x256xf32>
    %75 = vector.shape_cast %74 : vector<4x1x4x256xf32> to vector<16x256xf32>
    %c1792 = arith.constant 1792 : index
    %c0_25 = arith.constant 0 : index
    %76 = vector.load %arg3[%c1792, %c0_25] : memref<2048x128xf32, #tpu.memory_space<vmem>>, vector<256x128xf32>
    %cst_26 = arith.constant dense<0.000000e+00> : vector<16x128xf32>
    %77 = tpu.matmul %75, %76, %cst_26 {dimension_numbers = #tpu.dot_dimension_numbers<[1], [0], [0], [1], [0, 0, 1, 1], [], []>} : vector<16x256xf32>, vector<256x128xf32>, vector<16x128xf32> -> vector<16x128xf32>
    %78 = arith.addf %73, %77 : vector<16x128xf32>
    %79 = vector.shape_cast %78 : vector<16x128xf32> to vector<1x4x4x128xf32>
    %c0_27 = arith.constant 0 : index
    %c0_28 = arith.constant 0 : index
    %c0_29 = arith.constant 0 : index
    %c0_30 = arith.constant 0 : index
    %80 = vector.load %arg6[%c0_27, %c0_28, %c0_29, %c0_30] : memref<1x4x4x128xf32, #tpu.memory_space<vmem>>, vector<1x4x4x128xf32>
    tpu.vector_store %arg6[%c0_27, %c0_28, %c0_29, %c0_30], %79 {strides = array<i32>} : memref<1x4x4x128xf32, #tpu.memory_space<vmem>>, vector<1x4x4x128xf32>,
    %cst_31 = arith.constant dense<0.000000e+00> : vector<128xf32>
    %81 = vector.multi_reduction <add>, %78, %cst_31 [0] : vector<16x128xf32> to vector<128xf32>
    %82 = vector.shape_cast %81 : vector<128xf32> to vector<1x128xf32>
    %83 = arith.mulf %78, %78 : vector<16x128xf32>
    %cst_32 = arith.constant dense<0.000000e+00> : vector<128xf32>
    %84 = vector.multi_reduction <add>, %83, %cst_32 [0] : vector<16x128xf32> to vector<128xf32>
    %85 = vector.shape_cast %84 : vector<128xf32> to vector<1x128xf32>
    %86 = tpu.concatenate %82, %85 in 0 : vector<1x128xf32>, vector<1x128xf32> -> vector<2x128xf32>
    %87 = vector.shape_cast %86 : vector<2x128xf32> to vector<1x1x2x128xf32>
    %c0_33 = arith.constant 0 : index
    %c0_34 = arith.constant 0 : index
    %c0_35 = arith.constant 0 : index
    %c0_36 = arith.constant 0 : index
    %88 = vector.load %arg7[%c0_33, %c0_34, %c0_35, %c0_36] : memref<1x1x2x128xf32, #tpu.memory_space<vmem>>, vector<1x1x2x128xf32>
    tpu.vector_store %arg7[%c0_33, %c0_34, %c0_35, %c0_36], %87 {strides = array<i32>} : memref<1x1x2x128xf32, #tpu.memory_space<vmem>>, vector<1x1x2x128xf32>,
    return
  }
  func.func @transform_0(%arg0: i32, %arg1: i32) -> (i32, i32, i32, i32) {
    %c0_i32 = arith.constant 0 : i32
    %c0_i32_0 = arith.constant 0 : i32
    %c0_i32_1 = arith.constant 0 : i32
    %c0_i32_2 = arith.constant 0 : i32
    return %arg0, %c0_i32, %c0_i32_0, %c0_i32_1 : i32, i32, i32, i32
  }
  func.func @transform_1(%arg0: i32, %arg1: i32) -> (i32, i32) {
    %c0_i32 = arith.constant 0 : i32
    %c0_i32_0 = arith.constant 0 : i32
    %c0_i32_1 = arith.constant 0 : i32
    return %c0_i32, %c0_i32_0 : i32, i32
  }
  func.func @transform_2(%arg0: i32, %arg1: i32) -> (i32, i32) {
    %c0_i32 = arith.constant 0 : i32
    %c0_i32_0 = arith.constant 0 : i32
    %c0_i32_1 = arith.constant 0 : i32
    return %c0_i32, %c0_i32_0 : i32, i32
  }
  func.func @transform_3(%arg0: i32, %arg1: i32) -> (i32, i32) {
    %c0_i32 = arith.constant 0 : i32
    %c0_i32_0 = arith.constant 0 : i32
    %c0_i32_1 = arith.constant 0 : i32
    return %c0_i32, %c0_i32_0 : i32, i32
  }
  func.func @transform_4(%arg0: i32, %arg1: i32) -> (i32, i32, i32, i32) {
    %c0_i32 = arith.constant 0 : i32
    %c0_i32_0 = arith.constant 0 : i32
    %c0_i32_1 = arith.constant 0 : i32
    return %arg0, %arg1, %c0_i32, %c0_i32_0 : i32, i32, i32, i32
  }
  func.func @transform_5(%arg0: i32, %arg1: i32) -> (i32, i32, i32, i32) {
    %c0_i32 = arith.constant 0 : i32
    %c0_i32_0 = arith.constant 0 : i32
    %c0_i32_1 = arith.constant 0 : i32
    return %arg0, %arg1, %c0_i32, %c0_i32_0 : i32, i32, i32, i32
  }
}

</mosaic_0001>

<llo_original>
// kernel: tile.18
$region0: #{tile.18}
  #allocation0 [shape = 's32[1]{0}', space=sflag, size = 0x4, scoped, tag = 'scoped memory for tile.18']
  %s0 = inlined_call_operand.vmem [shape: f32[128], index: 0, kind: input, shape index: {}]
  %s1 = inlined_call_operand.vmem [shape: f32[2,128], index: 1, kind: output, shape index: {}]
  // Predicated region
  $region2: #{tile.18} parent=0 // pred_check
    _
  $region3: #{tile.18} parent=0 // pred_check_branch
    %3 = sbr.rel (0) target = $region5
  $region4: #{tile.18} parent=0 // pred_region
    _
  $region5: #{tile.18} parent=0 // pred_fallthru
    _
  %v4 = vld [vmem:[%s0] ss:$0 sm:$0xff]
  %5 = vst [vmem:[%s1] sm:$0x3] %v4

// kernel: residual_upsample_block.2
$region0: #{residual_upsample_block.2}
  #allocation0 [shape = 'u32[]', space=smem, size = 0x4, offset = 0x4, fixed_abs, tag = 'smem constant byte address 0x4 - core index']
  #allocation1 [shape = 'u32[144,128]{1,0:T(1,128)}', space=vmem, size = 0x12000, scoped, tag = 'internal scratch']
  %s0 = inlined_call_operand.vmem [shape: f32[2,18,9,8], index: 0, kind: input, shape index: {}]
  %s1 = inlined_call_operand.vmem [shape: f32[64,128], index: 1, kind: input, shape index: {}]
  %s2 = inlined_call_operand.vmem [shape: f32[2,8,8,128], index: 2, kind: output, shape index: {0}]
  %s3 = inlined_call_operand.vmem [shape: f32[2,1,2,128], index: 3, kind: output, shape index: {1}]
  %4 = xla_tuple %s2, %s3
  %s5 = sld [smem:[#allocation0]]
  $region49: #{residual_upsample_block.2} parent=0
    _
  %s7 = ssub.s32 1, %s5
  %s8 = scalar_select 0, %s7, %s5
  loop: start=0, step=1, limit=4
  $region2: #{residual_upsample_block.2} parent=0 // loop_pre_header
    _
  $region3: #{residual_upsample_block.2} parent=0 // loop_header
    %s10 = sphi 0, %s14
    %p11 = scmp.ge.s32.totalorder %s10, 4
    %s17 = sphi 0, %s29
    %s18 = sphi 0, %s25
    %s19 = sphi 0, %s17
    %s20 = sphi 0, %s18
    %s21 = sphi 0, %s19
    %s22 = sphi 0, %s20
    %s32 = sphi 0, %s34
    %s35 = sphi 0, %s32
    %s36 = sphi 0, %s35
    %s52 = sphi 0, %s36
    %s56 = sphi 0, %s56
    %s58 = sphi 0, %s56
    %s59 = sphi 0, %s58
    %s73 = sphi 0, %s59
    %s81 = sphi 0, %s83
    %s84 = sphi 0, %s81
    %s85 = sphi 0, %s84
    %s101 = sphi 0, %s85
    %s109 = sphi 0, %s111
    %s112 = sphi 0, %s109
    %s113 = sphi 0, %s112
    %s129 = sphi 0, %s113
  $region4: #{residual_upsample_block.2} parent=0 // loop_header_branch
    %13 = sbr.rel (%p11) target = $region8
  $region5: #{residual_upsample_block.2} parent=0 // loop_body
    %s15 = ssub.s32 %s10, 1
    %s16 = ssub.s32 %s10, 2
    %s23 = sadd.s32 1, %s18
    %p24 = scmp.ge.s32.totalorder %s23, 1
    %s25 = scalar_select %p24, 0, %s23
    %s26 = sadd.s32 1, %s17
    %s27 = scalar_select %p24, %s26, %s17
    %p28 = scmp.ge.s32.totalorder %s27, 2
    %s29 = scalar_select %p28, 0, %s27
    %s30 = ssub.s32 %s17, %s29
    %p31 = scmp.eq.s32.totalorder %s30, 0
    %s33 = sadd.s32 %s32, 1
    %s34 = scalar_select %p31, %s32, %s33
    %p37 = pneg %p31
    %p38 = scmp.eq.s32.totalorder %s10, 1
    %p39 = por %p37, %p38
    %p40 = scmp.ne.s32.totalorder %s32, %s35
    %p41 = scmp.eq.s32.totalorder %s10, 0
    %p42 = por %p40, %p41
    %p43 = scmp.ne.s32.totalorder %s32, %s35
    %p44 = scmp.eq.s32.totalorder %s15, 1
    %p45 = por %p43, %p44
    %p46 = scmp.ne.s32.totalorder %s35, %s36
    %p47 = scmp.eq.s32.totalorder %s15, 0
    %p48 = por %p46, %p47
    %p49 = scmp.ne.s32.totalorder %s35, %s36
    %p50 = scmp.eq.s32.totalorder %s16, 1
    %p51 = por %p49, %p50
    %p53 = scmp.ne.s32.totalorder %s36, %s52
    %p54 = scmp.eq.s32.totalorder %s16, 0
    %p55 = por %p53, %p54
    %s57 = sadd.s32 %s56, 1
    %p60 = scmp.eq.s32.totalorder %s10, 1
    %p61 = scmp.ne.s32.totalorder %s56, %s58
    %p62 = scmp.eq.s32.totalorder %s10, 0
    %p63 = por %p61, %p62
    %p64 = scmp.ne.s32.totalorder %s56, %s58
    %p65 = scmp.eq.s32.totalorder %s15, 1
    %p66 = por %p64, %p65
    %p67 = scmp.ne.s32.totalorder %s58, %s59
    %p68 = scmp.eq.s32.totalorder %s15, 0
    %p69 = por %p67, %p68
    %p70 = scmp.ne.s32.totalorder %s58, %s59
    %p71 = scmp.eq.s32.totalorder %s16, 1
    %p72 = por %p70, %p71
    %p74 = scmp.ne.s32.totalorder %s59, %s73
    %p75 = scmp.eq.s32.totalorder %s16, 0
    %p76 = por %p74, %p75
    %s77 = ssub.s32 %s17, %s29
    %s78 = ssub.s32 %s18, %s25
    %s79 = sor.u32 %s77, %s78
    %p80 = scmp.eq.s32.totalorder %s79, 0
    %s82 = sadd.s32 %s81, 1
    %s83 = scalar_select %p80, %s81, %s82
    %p86 = pneg %p80
    %p87 = scmp.eq.s32.totalorder %s10, 1
    %p88 = por %p86, %p87
    %p89 = scmp.ne.s32.totalorder %s81, %s84
    %p90 = scmp.eq.s32.totalorder %s10, 0
    %p91 = por %p89, %p90
    %p92 = scmp.ne.s32.totalorder %s81, %s84
    %p93 = scmp.eq.s32.totalorder %s15, 1
    %p94 = por %p92, %p93
    %p95 = scmp.ne.s32.totalorder %s84, %s85
    %p96 = scmp.eq.s32.totalorder %s15, 0
    %p97 = por %p95, %p96
    %p98 = scmp.ne.s32.totalorder %s84, %s85
    %p99 = scmp.eq.s32.totalorder %s16, 1
    %p100 = por %p98, %p99
    %p102 = scmp.ne.s32.totalorder %s85, %s101
    %p103 = scmp.eq.s32.totalorder %s16, 0
    %p104 = por %p102, %p103
    %s105 = ssub.s32 %s17, %s29
    %s106 = ssub.s32 %s18, %s25
    %s107 = sor.u32 %s105, %s106
    %p108 = scmp.eq.s32.totalorder %s107, 0
    %s110 = sadd.s32 %s109, 1
    %s111 = scalar_select %p108, %s109, %s110
    %p114 = pneg %p108
    %p115 = scmp.eq.s32.totalorder %s10, 1
    %p116 = por %p114, %p115
    %p117 = scmp.ne.s32.totalorder %s109, %s112
    %p118 = scmp.eq.s32.totalorder %s10, 0
    %p119 = por %p117, %p118
    %p120 = scmp.ne.s32.totalorder %s109, %s112
    %p121 = scmp.eq.s32.totalorder %s15, 1
    %p122 = por %p120, %p121
    %p123 = scmp.ne.s32.totalorder %s112, %s113
    %p124 = scmp.eq.s32.totalorder %s15, 0
    %p125 = por %p123, %p124
    %p126 = scmp.ne.s32.totalorder %s112, %s113
    %p127 = scmp.eq.s32.totalorder %s16, 1
    %p128 = por %p126, %p127
    %p130 = scmp.ne.s32.totalorder %s113, %s129
    %p131 = scmp.eq.s32.totalorder %s16, 0
    %p132 = por %p130, %p131
    %p133 = scmp.le.s32.totalorder 1, %s10
    %p134 = scmp.lt.s32.totalorder %s10, 3
    %p135 = pnand %p133, %p134
    %p136 = pneg %p135
    // Predicated region
    $region9: #{residual_upsample_block.2} parent=5 // pred_check
      _
    $region10: #{residual_upsample_block.2} parent=5 // pred_check_branch
      %138 = sbr.rel (%p135) target = $region12
    $region11: #{residual_upsample_block.2} parent=5 // pred_region
      %s139 = ssub.s32 %s10, 1
      // Predicated region
      $region13: #{residual_upsample_block.2} parent=11 // pred_check
        %p140 = pneg %p69
      $region14: #{residual_upsample_block.2} parent=11 // pred_check_branch
        %142 = sbr.rel (%p140) target = $region16
      $region15: #{residual_upsample_block.2} parent=11 // pred_region
        _
      $region16: #{residual_upsample_block.2} parent=11 // pred_fallthru
        _
    $region12: #{residual_upsample_block.2} parent=5 // pred_fallthru
      _
    %p143 = scmp.lt.s32.totalorder %s10, 2
    // Predicated region
    $region17: #{residual_upsample_block.2} parent=5 // pred_check
      %p144 = pneg %p143
    $region18: #{residual_upsample_block.2} parent=5 // pred_check_branch
      %146 = sbr.rel (%p144) target = $region20
    $region19: #{residual_upsample_block.2} parent=5 // pred_region
      // Predicated region
      $region21: #{residual_upsample_block.2} parent=19 // pred_check
        %p147 = pneg %p42
      $region22: #{residual_upsample_block.2} parent=19 // pred_check_branch
        %149 = sbr.rel (%p147) target = $region24
      $region23: #{residual_upsample_block.2} parent=19 // pred_region
        %p150 = scmp.lt.s32.totalorder %s17, 1
        %s151 = scalar_select %p150, %s17, 1
        %s152 = smul.addr %s151, 36
        %s153 = smul.addr %s152, 8
        %s154 = scalar_lea.vmem %s0, %s153
      $region24: #{residual_upsample_block.2} parent=19 // pred_fallthru
        _
    $region20: #{residual_upsample_block.2} parent=5 // pred_fallthru
      _
    %p155 = scmp.le.s32.totalorder 1, %s10
    %p156 = scmp.lt.s32.totalorder %s10, 3
    %p157 = pnand %p155, %p156
    %p158 = pneg %p157
    // Predicated region
    $region25: #{residual_upsample_block.2} parent=5 // pred_check
      _
    $region26: #{residual_upsample_block.2} parent=5 // pred_check_branch
      %160 = sbr.rel (%p157) target = $region28
    $region27: #{residual_upsample_block.2} parent=5 // pred_region
      %s161 = ssub.s32 %s10, 1
      %p162 = scmp.lt.s32.totalorder %s19, 1
      %s163 = scalar_select %p162, %s19, 1
      %s164 = smul.addr %s163, 36
      %s165 = smul.addr %s164, 8
      %s166 = scalar_lea.vmem %s0, %s165
      %p167 = pneg %p48
      %p168 = pneg %p45
      %p169 = pneg %p69
      %p170 = pneg %p66
      %p171 = pneg %p97
      %p172 = pneg %p94
      %s173 = smul.u32 8, %s20
      %p174 = scmp.lt.s32.totalorder %s19, 1
      %s175 = scalar_select %p174, %s19, 1
      %p176 = scmp.lt.s32.totalorder %s173, 7
      %s177 = scalar_select %p176, %s173, 7
      %s178 = smul.addr %s175, 8
      %s179 = sadd.s32 %s177, %s178
      %s180 = smul.addr %s179, 8
      %s181 = scalar_lea.vmem %s2, %s180
      %p182 = pneg %p125
      %p183 = pneg %p122
      %p184 = scmp.lt.s32.totalorder %s19, 1
      %s185 = scalar_select %p184, %s19, 1
      %p186 = scmp.lt.s32.totalorder %s20, 0
      %s187 = scalar_select %p186, %s20, 0
      %s188 = sadd.s32 %s187, %s185
      %s189 = smul.addr %s188, 2
      %s190 = scalar_lea.vmem %s3, %s189
      %p191 = scmp.lt.s32.totalorder %s19, 1
      %s192 = scalar_select %p191, %s19, 1
      %s193 = smul.addr %s192, 36
      %s194 = smul.addr %s193, 8
      %s195 = scalar_lea.vmem %s0, %s194
      %s196 = smul.u32 8, %s20
      %p197 = scmp.lt.s32.totalorder %s19, 1
      %s198 = scalar_select %p197, %s19, 1
      %p199 = scmp.lt.s32.totalorder %s196, 7
      %s200 = scalar_select %p199, %s196, 7
      %s201 = smul.addr %s198, 8
      %s202 = sadd.s32 %s200, %s201
      %s203 = smul.addr %s202, 8
      %s204 = scalar_lea.vmem %s2, %s203
      %s205 = smul.u32 8, %s20
      %p206 = scmp.lt.s32.totalorder %s19, 1
      %s207 = scalar_select %p206, %s19, 1
      %p208 = scmp.lt.s32.totalorder %s20, 0
      %s209 = scalar_select %p208, %s20, 0
      %s210 = sadd.s32 %s209, %s207
      %s211 = smul.addr %s210, 2
      %s212 = scalar_lea.vmem %s3, %s211
      %v213 = vld [vmem:[%s195] sm:$0xff]
      %v214 = vld [vmem:[%s195 + $0x8] sm:$0x1]
      %v215 = vld [vmem:[%s195 + $0x10] sm:$0xff]
      %v216 = vld [vmem:[%s195 + $0x18] sm:$0x1]
      %v217 = vld [vmem:[%s195 + $0x20] sm:$0xff]
      %v218 = vld [vmem:[%s195 + $0x28] sm:$0x1]
      %v219 = vld [vmem:[%s195 + $0x30] sm:$0xff]
      %v220 = vld [vmem:[%s195 + $0x38] sm:$0x1]
      %v221 = vld [vmem:[%s195 + $0x40] sm:$0xff]
      %v222 = vld [vmem:[%s195 + $0x48] sm:$0x1]
      %v223 = vld [vmem:[%s195 + $0x50] sm:$0xff]
      %v224 = vld [vmem:[%s195 + $0x58] sm:$0x1]
      %v225 = vld [vmem:[%s195 + $0x60] sm:$0xff]
      %v226 = vld [vmem:[%s195 + $0x68] sm:$0x1]
      %v227 = vld [vmem:[%s195 + $0x70] sm:$0xff]
      %v228 = vld [vmem:[%s195 + $0x78] sm:$0x1]
      %v229 = vld [vmem:[%s195 + $0x80] sm:$0xff]
      %v230 = vld [vmem:[%s195 + $0x88] sm:$0x1]
      %v231 = vld [vmem:[%s195 + $0x90] sm:$0xff]
      %v232 = vld [vmem:[%s195 + $0x98] sm:$0x1]
      %v233 = vld [vmem:[%s195 + $0xa0] sm:$0xff]
      %v234 = vld [vmem:[%s195 + $0xa8] sm:$0x1]
      %v235 = vld [vmem:[%s195 + $0xb0] sm:$0xff]
      %v236 = vld [vmem:[%s195 + $0xb8] sm:$0x1]
      %v237 = vld [vmem:[%s195 + $0xc0] sm:$0xff]
      %v238 = vld [vmem:[%s195 + $0xc8] sm:$0x1]
      %v239 = vld [vmem:[%s195 + $0xd0] sm:$0xff]
      %v240 = vld [vmem:[%s195 + $0xd8] sm:$0x1]
      %v241 = vld [vmem:[%s195 + $0xe0] sm:$0xff]
      %v242 = vld [vmem:[%s195 + $0xe8] sm:$0x1]
      %v243 = vld [vmem:[%s195 + $0xf0] sm:$0xff]
      %v244 = vld [vmem:[%s195 + $0xf8] sm:$0x1]
      %v245 = vld [vmem:[%s195 + $0x100] sm:$0xff]
      %v246 = vld [vmem:[%s195 + $0x108] sm:$0x1]
      %v247 = vld [vmem:[%s195 + $0x110] sm:$0xff]
      %v248 = vld [vmem:[%s195 + $0x118] sm:$0x1]
      %v249 = vld [vmem:[%s1] sm:$0xff]
      %vm266 = vcmask 1046528
      %v267 = vrot.slane %v213, 1
      %v268 = vrot.slane %v214, 1
      %v269 = vsel %vm266, %v267, %v268
      %v270 = vrot.slane %v217, 1
      %v271 = vrot.slane %v218, 1
      %v272 = vsel %vm266, %v270, %v271
      %v273 = vrot.slane %v221, 1
      %v274 = vrot.slane %v222, 1
      %v275 = vsel %vm266, %v273, %v274
      %v276 = vrot.slane %v225, 1
      %v277 = vrot.slane %v226, 1
      %v278 = vsel %vm266, %v276, %v277
      %v279 = vrot.slane %v229, 1
      %v280 = vrot.slane %v230, 1
      %v281 = vsel %vm266, %v279, %v280
      %v282 = vrot.slane %v233, 1
      %v283 = vrot.slane %v234, 1
      %v284 = vsel %vm266, %v282, %v283
      %v285 = vrot.slane %v237, 1
      %v286 = vrot.slane %v238, 1
      %v287 = vsel %vm266, %v285, %v286
      %v288 = vrot.slane %v241, 1
      %v289 = vrot.slane %v242, 1
      %v290 = vsel %vm266, %v288, %v289
      %v291 = vld [vmem:[%s1 + $0x8] sm:$0xff]
      %vm292 = vcmask 64512
      %v293 = vsel %vm292, %v269, 0
      %v295 = vsel %vm292, %v272, 0
      %v297 = vsel %vm292, %v275, 0
      %v299 = vsel %vm292, %v278, 0
      %v301 = vsel %vm292, %v281, 0
      %v303 = vsel %vm292, %v284, 0
      %v305 = vsel %vm292, %v287, 0
      %v307 = vsel %vm292, %v290, 0
      %309 = vmatprep.subr.mxu0 0.0
      %310 = vmatpush1.msra.mxu0 %v291
      %311 = vmatprep.subr.mxu0 0.0
      %312 = vmatpush1.msra.mxu0 0.0
      %313 = vmatprep.subr.mxu0 0.0
      %314 = vmatpush1.msra.mxu0 0.0
      %315 = vmatprep.subr.mxu0 0.0
      %316 = vmatpush1.msra.mxu0 0.0
      %317 = vmatprep.subr.mxu0 0.0
      %318 = vmatpush1.msra.mxu0 0.0
      %319 = vmatprep.subr.mxu0 0.0
      %320 = vmatpush1.msra.mxu0 0.0
      %321 = vmatprep.subr.mxu0 0.0
      %322 = vmatpush1.msra.mxu0 0.0
      %323 = vmatprep.subr.mxu0 0.0
      %324 = vmatpush1.msra.mxu0 0.0
      %325 = vmatprep.subr.mxu0 0.0
      %326 = vmatpush1.msra.mxu0 0.0
      %327 = vmatprep.subr.mxu0 0.0
      %328 = vmatpush1.msra.mxu0 0.0
      %329 = vmatprep.subr.mxu0 0.0
      %330 = vmatpush1.msra.mxu0 0.0
      %331 = vmatprep.subr.mxu0 0.0
      %332 = vmatpush1.msra.mxu0 0.0
      %333 = vmatprep.subr.mxu0 0.0
      %334 = vmatpush1.msra.mxu0 0.0
      %335 = vmatprep.subr.mxu0 0.0
      %336 = vmatpush1.msra.mxu0 0.0
      %337 = vmatprep.subr.mxu0 0.0
      %338 = vmatpush1.msra.mxu0 0.0
      %339 = vmatprep.subr.mxu0 0.0
      %340 = vmatpush1.msra.mxu0 0.0
      %341 = vmatprep.subr.mxu0 0.0
      %342 = vmatpush1.msra.mxu0 0.0
      %343 = vmatprep.subr.mxu0 0.0
      %344 = vmatpush1.msra.mxu0 0.0
      %345 = vmatprep.subr.mxu0 0.0
      %346 = vmatpush1.msra.mxu0 0.0
      %347 = vmatprep.subr.mxu0 0.0
      %348 = vmatpush1.msra.mxu0 0.0
      %349 = vmatprep.subr.mxu0 0.0
      %350 = vmatpush1.msra.mxu0 0.0
      %351 = vmatprep.subr.mxu0 0.0
      %352 = vmatpush1.msra.mxu0 0.0
      %353 = vmatprep.subr.mxu0 0.0
      %354 = vmatpush1.msra.mxu0 0.0
      %355 = vmatprep.subr.mxu0 0.0
      %356 = vmatpush1.msra.mxu0 0.0
      %357 = vmatprep.subr.mxu0 0.0
      %358 = vmatpush1.msra.mxu0 0.0
      %359 = vmatprep.subr.mxu0 0.0
      %360 = vmatpush1.msra.mxu0 0.0
      %361 = vmatprep.subr.mxu0 0.0
      %362 = vmatpush1.msra.mxu0 0.0
      %363 = vmatprep.subr.mxu0 0.0
      %364 = vmatpush1.msra.mxu0 0.0
      %365 = vmatprep.subr.mxu0 0.0
      %366 = vmatpush1.msra.mxu0 0.0
      %367 = vmatprep.subr.mxu0 0.0
      %368 = vmatpush1.msra.mxu0 0.0
      %369 = vmatprep.subr.mxu0 0.0
      %370 = vmatpush1.msra.mxu0 0.0
      %371 = vmatprep.subr.mxu0 0.0
      %372 = vmatpush1.msra.mxu0 0.0
      %373 = vmatprep.mubr.f32.mxu0 0.0
      %374 = vmatmul.mubr.f32.gmra.mrb[0].mxu0 %v293
      %v375 = vpop.f32.mrb[0].mxu0
      %v376 = vadd.f32 0.0, %v375
      %v377 = vpop.f32.mrb[0].mxu0
      %378 = vmatprep.mubr.f32.mxu0 0.0
      %379 = vmatmul.mubr.f32.gmra.mrb[0].mxu0 %v295
      %v380 = vpop.f32.mrb[0].mxu0
      %v381 = vadd.f32 0.0, %v380
      %v382 = vpop.f32.mrb[0].mxu0
      %383 = vmatprep.mubr.f32.mxu0 0.0
      %384 = vmatmul.mubr.f32.gmra.mrb[0].mxu0 %v297
      %v385 = vpop.f32.mrb[0].mxu0
      %v386 = vadd.f32 0.0, %v385
      %v387 = vpop.f32.mrb[0].mxu0
      %388 = vmatprep.mubr.f32.mxu0 0.0
      %389 = vmatmul.mubr.f32.gmra.mrb[0].mxu0 %v299
      %v390 = vpop.f32.mrb[0].mxu0
      %v391 = vadd.f32 0.0, %v390
      %v392 = vpop.f32.mrb[0].mxu0
      %393 = vmatprep.mubr.f32.mxu0 0.0
      %394 = vmatmul.mubr.f32.gmra.mrb[0].mxu0 %v301
      %v395 = vpop.f32.mrb[0].mxu0
      %v396 = vadd.f32 0.0, %v395
      %v397 = vpop.f32.mrb[0].mxu0
      %398 = vmatprep.mubr.f32.mxu0 0.0
      %399 = vmatmul.mubr.f32.gmra.mrb[0].mxu0 %v303
      %v400 = vpop.f32.mrb[0].mxu0
      %v401 = vadd.f32 0.0, %v400
      %v402 = vpop.f32.mrb[0].mxu0
      %403 = vmatprep.mubr.f32.mxu0 0.0
      %404 = vmatmul.mubr.f32.gmra.mrb[0].mxu0 %v305
      %v405 = vpop.f32.mrb[0].mxu0
      %v406 = vadd.f32 0.0, %v405
      %v407 = vpop.f32.mrb[0].mxu0
      %408 = vmatprep.mubr.f32.mxu0 0.0
      %409 = vmatmul.mubr.f32.gmra.mrb[0].mxu0 %v307
      %v410 = vpop.f32.mrb[0].mxu0
      %v411 = vadd.f32 0.0, %v410
      %v412 = vpop.f32.mrb[0].mxu0
      %413 = vdwg.mxu0
      %v414 = vsel %vm292, %v213, 0
      %v416 = vsel %vm292, %v217, 0
      %v418 = vsel %vm292, %v221, 0
      %v420 = vsel %vm292, %v225, 0
      %v422 = vsel %vm292, %v229, 0
      %v424 = vsel %vm292, %v233, 0
      %v426 = vsel %vm292, %v237, 0
      %v428 = vsel %vm292, %v241, 0
      %430 = vmatprep.subr.mxu0 0.0
      %431 = vmatpush1.msra.mxu0 %v249
      %432 = vmatprep.subr.mxu0 0.0
      %433 = vmatpush1.msra.mxu0 0.0
      %434 = vmatprep.subr.mxu0 0.0
      %435 = vmatpush1.msra.mxu0 0.0
      %436 = vmatprep.subr.mxu0 0.0
      %437 = vmatpush1.msra.mxu0 0.0
      %438 = vmatprep.subr.mxu0 0.0
      %439 = vmatpush1.msra.mxu0 0.0
      %440 = vmatprep.subr.mxu0 0.0
      %441 = vmatpush1.msra.mxu0 0.0
      %442 = vmatprep.subr.mxu0 0.0
      %443 = vmatpush1.msra.mxu0 0.0
      %444 = vmatprep.subr.mxu0 0.0
      %445 = vmatpush1.msra.mxu0 0.0
      %446 = vmatprep.subr.mxu0 0.0
      %447 = vmatpush1.msra.mxu0 0.0
      %448 = vmatprep.subr.mxu0 0.0
      %449 = vmatpush1.msra.mxu0 0.0
      %450 = vmatprep.subr.mxu0 0.0
      %451 = vmatpush1.msra.mxu0 0.0
      %452 = vmatprep.subr.mxu0 0.0
      %453 = vmatpush1.msra.mxu0 0.0
      %454 = vmatprep.subr.mxu0 0.0
      %455 = vmatpush1.msra.mxu0 0.0
      %456 = vmatprep.subr.mxu0 0.0
      %457 = vmatpush1.msra.mxu0 0.0
      %458 = vmatprep.subr.mxu0 0.0
      %459 = vmatpush1.msra.mxu0 0.0
      %460 = vmatprep.subr.mxu0 0.0
      %461 = vmatpush1.msra.mxu0 0.0
      %462 = vmatprep.subr.mxu0 0.0
      %463 = vmatpush1.msra.mxu0 0.0
      %464 = vmatprep.subr.mxu0 0.0
      %465 = vmatpush1.msra.mxu0 0.0
      %466 = vmatprep.subr.mxu0 0.0
      %467 = vmatpush1.msra.mxu0 0.0
      %468 = vmatprep.subr.mxu0 0.0
      %469 = vmatpush1.msra.mxu0 0.0
      %470 = vmatprep.subr.mxu0 0.0
      %471 = vmatpush1.msra.mxu0 0.0
      %472 = vmatprep.subr.mxu0 0.0
      %473 = vmatpush1.msra.mxu0 0.0
      %474 = vmatprep.subr.mxu0 0.0
      %475 = vmatpush1.msra.mxu0 0.0
      %476 = vmatprep.subr.mxu0 0.0
      %477 = vmatpush1.msra.mxu0 0.0
      %478 = vmatprep.subr.mxu0 0.0
      %479 = vmatpush1.msra.mxu0 0.0
      %480 = vmatprep.subr.mxu0 0.0
      %481 = vmatpush1.msra.mxu0 0.0
      %482 = vmatprep.subr.mxu0 0.0
      %483 = vmatpush1.msra.mxu0 0.0
      %484 = vmatprep.subr.mxu0 0.0
      %485 = vmatpush1.msra.mxu0 0.0
      %486 = vmatprep.subr.mxu0 0.0
      %487 = vmatpush1.msra.mxu0 0.0
      %488 = vmatprep.subr.mxu0 0.0
      %489 = vmatpush1.msra.mxu0 0.0
      %490 = vmatprep.subr.mxu0 0.0
      %491 = vmatpush1.msra.mxu0 0.0
      %492 = vmatprep.subr.mxu0 0.0
      %493 = vmatpush1.msra.mxu0 0.0
      %494 = vmatprep.mubr.f32.mxu0 0.0
      %495 = vmatmul.mubr.f32.gmra.mrb[0].mxu0 %v414
      %v496 = vpop.f32.mrb[0].mxu0
      %v497 = vadd.f32 %v376, %v496
      %v498 = vpop.f32.mrb[0].mxu0
      %499 = vmatprep.mubr.f32.mxu0 0.0
      %500 = vmatmul.mubr.f32.gmra.mrb[0].mxu0 %v416
      %v501 = vpop.f32.mrb[0].mxu0
      %v502 = vadd.f32 %v381, %v501
      %v503 = vpop.f32.mrb[0].mxu0
      %504 = vmatprep.mubr.f32.mxu0 0.0
      %505 = vmatmul.mubr.f32.gmra.mrb[0].mxu0 %v418
      %v506 = vpop.f32.mrb[0].mxu0
      %v507 = vadd.f32 %v386, %v506
      %v508 = vpop.f32.mrb[0].mxu0
      %509 = vmatprep.mubr.f32.mxu0 0.0
      %510 = vmatmul.mubr.f32.gmra.mrb[0].mxu0 %v420
      %v511 = vpop.f32.mrb[0].mxu0
      %v512 = vadd.f32 %v391, %v511
      %v513 = vpop.f32.mrb[0].mxu0
      %514 = vmatprep.mubr.f32.mxu0 0.0
      %515 = vmatmul.mubr.f32.gmra.mrb[0].mxu0 %v422
      %v516 = vpop.f32.mrb[0].mxu0
      %v517 = vadd.f32 %v396, %v516
      %v518 = vpop.f32.mrb[0].mxu0
      %519 = vmatprep.mubr.f32.mxu0 0.0
      %520 = vmatmul.mubr.f32.gmra.mrb[0].mxu0 %v424
      %v521 = vpop.f32.mrb[0].mxu0
      %v522 = vadd.f32 %v401, %v521
      %v523 = vpop.f32.mrb[0].mxu0
      %524 = vmatprep.mubr.f32.mxu0 0.0
      %525 = vmatmul.mubr.f32.gmra.mrb[0].mxu0 %v426
      %v526 = vpop.f32.mrb[0].mxu0
      %v527 = vadd.f32 %v406, %v526
      %v528 = vpop.f32.mrb[0].mxu0
      %529 = vmatprep.mubr.f32.mxu0 0.0
      %530 = vmatmul.mubr.f32.gmra.mrb[0].mxu0 %v428
      %v531 = vpop.f32.mrb[0].mxu0
      %v532 = vadd.f32 %v411, %v531
      %v533 = vpop.f32.mrb[0].mxu0
      %534 = vdwg.mxu0
      %v535 = vld [vmem:[%s1 + $0x10] sm:$0xff]
      %v537 = vsel %vm292, %v215, 0
      %v540 = vsel %vm292, %v219, 0
      %v543 = vsel %vm292, %v223, 0
      %v546 = vsel %vm292, %v227, 0
      %v549 = vsel %vm292, %v231, 0
      %v552 = vsel %vm292, %v235, 0
      %v555 = vsel %vm292, %v239, 0
      %v558 = vsel %vm292, %v243, 0
      %560 = vmatprep.subr.mxu0 0.0
      %561 = vmatpush1.msra.mxu0 %v535
      %562 = vmatprep.subr.mxu0 0.0
      %563 = vmatpush1.msra.mxu0 0.0
      %564 = vmatprep.subr.mxu0 0.0
      %565 = vmatpush1.msra.mxu0 0.0
      %566 = vmatprep.subr.mxu0 0.0
      %567 = vmatpush1.msra.mxu0 0.0
      %568 = vmatprep.subr.mxu0 0.0
      %569 = vmatpush1.msra.mxu0 0.0
      %570 = vmatprep.subr.mxu0 0.0
      %571 = vmatpush1.msra.mxu0 0.0
      %572 = vmatprep.subr.mxu0 0.0
      %573 = vmatpush1.msra.mxu0 0.0
      %574 = vmatprep.subr.mxu0 0.0
      %575 = vmatpush1.msra.mxu0 0.0
      %576 = vmatprep.subr.mxu0 0.0
      %577 = vmatpush1.msra.mxu0 0.0
      %578 = vmatprep.subr.mxu0 0.0
      %579 = vmatpush1.msra.mxu0 0.0
      %580 = vmatprep.subr.mxu0 0.0
      %581 = vmatpush1.msra.mxu0 0.0
      %582 = vmatprep.subr.mxu0 0.0
      %583 = vmatpush1.msra.mxu0 0.0
      %584 = vmatprep.subr.mxu0 0.0
      %585 = vmatpush1.msra.mxu0 0.0
      %586 = vmatprep.subr.mxu0 0.0
      %587 = vmatpush1.msra.mxu0 0.0
      %588 = vmatprep.subr.mxu0 0.0
      %589 = vmatpush1.msra.mxu0 0.0
      %590 = vmatprep.subr.mxu0 0.0
      %591 = vmatpush1.msra.mxu0 0.0
      %592 = vmatprep.subr.mxu0 0.0
      %593 = vmatpush1.msra.mxu0 0.0
      %594 = vmatprep.subr.mxu0 0.0
      %595 = vmatpush1.msra.mxu0 0.0
      %596 = vmatprep.subr.mxu0 0.0
      %597 = vmatpush1.msra.mxu0 0.0
      %598 = vmatprep.subr.mxu0 0.0
      %599 = vmatpush1.msra.mxu0 0.0
      %600 = vmatprep.subr.mxu0 0.0
      %601 = vmatpush1.msra.mxu0 0.0
      %602 = vmatprep.subr.mxu0 0.0
      %603 = vmatpush1.msra.mxu0 0.0
      %604 = vmatprep.subr.mxu0 0.0
      %605 = vmatpush1.msra.mxu0 0.0
      %606 = vmatprep.subr.mxu0 0.0
      %607 = vmatpush1.msra.mxu0 0.0
      %608 = vmatprep.subr.mxu0 0.0
      %609 = vmatpush1.msra.mxu0 0.0
      %610 = vmatprep.subr.mxu0 0.0
      %611 = vmatpush1.msra.mxu0 0.0
      %612 = vmatprep.subr.mxu0 0.0
      %613 = vmatpush1.msra.mxu0 0.0
      %614 = vmatprep.subr.mxu0 0.0
      %615 = vmatpush1.msra.mxu0 0.0
      %616 = vmatprep.subr.mxu0 0.0
      %617 = vmatpush1.msra.mxu0 0.0
      %618 = vmatprep.subr.mxu0 0.0
      %619 = vmatpush1.msra.mxu0 0.0
      %620 = vmatprep.subr.mxu0 0.0
      %621 = vmatpush1.msra.mxu0 0.0
      %622 = vmatprep.subr.mxu0 0.0
      %623 = vmatpush1.msra.mxu0 0.0
      %624 = vmatprep.mubr.f32.mxu0 0.0
      %625 = vmatmul.mubr.f32.gmra.mrb[0].mxu0 %v537
      %v626 = vpop.f32.mrb[0].mxu0
      %v627 = vadd.f32 0.0, %v626
      %v628 = vpop.f32.mrb[0].mxu0
      %629 = vmatprep.mubr.f32.mxu0 0.0
      %630 = vmatmul.mubr.f32.gmra.mrb[0].mxu0 %v540
      %v631 = vpop.f32.mrb[0].mxu0
      %v632 = vadd.f32 0.0, %v631
      %v633 = vpop.f32.mrb[0].mxu0
      %634 = vmatprep.mubr.f32.mxu0 0.0
      %635 = vmatmul.mubr.f32.gmra.mrb[0].mxu0 %v543
      %v636 = vpop.f32.mrb[0].mxu0
      %v637 = vadd.f32 0.0, %v636
      %v638 = vpop.f32.mrb[0].mxu0
      %639 = vmatprep.mubr.f32.mxu0 0.0
      %640 = vmatmul.mubr.f32.gmra.mrb[0].mxu0 %v546
      %v641 = vpop.f32.mrb[0].mxu0
      %v642 = vadd.f32 0.0, %v641
      %v643 = vpop.f32.mrb[0].mxu0
      %644 = vmatprep.mubr.f32.mxu0 0.0
      %645 = vmatmul.mubr.f32.gmra.mrb[0].mxu0 %v549
      %v646 = vpop.f32.mrb[0].mxu0
      %v647 = vadd.f32 0.0, %v646
      %v648 = vpop.f32.mrb[0].mxu0
      %649 = vmatprep.mubr.f32.mxu0 0.0
      %650 = vmatmul.mubr.f32.gmra.mrb[0].mxu0 %v552
      %v651 = vpop.f32.mrb[0].mxu0
      %v652 = vadd.f32 0.0, %v651
      %v653 = vpop.f32.mrb[0].mxu0
      %654 = vmatprep.mubr.f32.mxu0 0.0
      %655 = vmatmul.mubr.f32.gmra.mrb[0].mxu0 %v555
      %v656 = vpop.f32.mrb[0].mxu0
      %v657 = vadd.f32 0.0, %v656
      %v658 = vpop.f32.mrb[0].mxu0
      %659 = vmatprep.mubr.f32.mxu0 0.0
      %660 = vmatmul.mubr.f32.gmra.mrb[0].mxu0 %v558
      %v661 = vpop.f32.mrb[0].mxu0
      %v662 = vadd.f32 0.0, %v661
      %v663 = vpop.f32.mrb[0].mxu0
      %664 = vdwg.mxu0
      %v665 = vadd.f32 %v497, %v627
      %v666 = vadd.f32 %v502, %v632
      %v667 = vadd.f32 %v507, %v637
      %v668 = vadd.f32 %v512, %v642
      %v669 = vadd.f32 %v517, %v647
      %v670 = vadd.f32 %v522, %v652
      %v671 = vadd.f32 %v527, %v657
      %v672 = vadd.f32 %v532, %v662
      %v681 = vrot.slane %v215, 1
      %v682 = vrot.slane %v216, 1
      %v683 = vsel %vm266, %v681, %v682
      %v684 = vrot.slane %v219, 1
      %v685 = vrot.slane %v220, 1
      %v686 = vsel %vm266, %v684, %v685
      %v687 = vrot.slane %v223, 1
      %v688 = vrot.slane %v224, 1
      %v689 = vsel %vm266, %v687, %v688
      %v690 = vrot.slane %v227, 1
      %v691 = vrot.slane %v228, 1
      %v692 = vsel %vm266, %v690, %v691
      %v693 = vrot.slane %v231, 1
      %v694 = vrot.slane %v232, 1
      %v695 = vsel %vm266, %v693, %v694
      %v696 = vrot.slane %v235, 1
      %v697 = vrot.slane %v236, 1
      %v698 = vsel %vm266, %v696, %v697
      %v699 = vrot.slane %v239, 1
      %v700 = vrot.slane %v240, 1
      %v701 = vsel %vm266, %v699, %v700
      %v702 = vrot.slane %v243, 1
      %v703 = vrot.slane %v244, 1
      %v704 = vsel %vm266, %v702, %v703
      %v705 = vld [vmem:[%s1 + $0x18] sm:$0xff]
      %v706 = vsel %vm292, %v683, 0
      %v708 = vsel %vm292, %v686, 0
      %v710 = vsel %vm292, %v689, 0
      %v712 = vsel %vm292, %v692, 0
      %v714 = vsel %vm292, %v695, 0
      %v716 = vsel %vm292, %v698, 0
      %v718 = vsel %vm292, %v701, 0
      %v720 = vsel %vm292, %v704, 0
      %722 = vmatprep.subr.mxu0 0.0
      %723 = vmatpush1.msra.mxu0 %v705
      %724 = vmatprep.subr.mxu0 0.0
      %725 = vmatpush1.msra.mxu0 0.0
      %726 = vmatprep.subr.mxu0 0.0
      %727 = vmatpush1.msra.mxu0 0.0
      %728 = vmatprep.subr.mxu0 0.0
      %729 = vmatpush1.msra.mxu0 0.0
      %730 = vmatprep.subr.mxu0 0.0
      %731 = vmatpush1.msra.mxu0 0.0
      %732 = vmatprep.subr.mxu0 0.0
      %733 = vmatpush1.msra.mxu0 0.0
      %734 = vmatprep.subr.mxu0 0.0
      %735 = vmatpush1.msra.mxu0 0.0
      %736 = vmatprep.subr.mxu0 0.0
      %737 = vmatpush1.msra.mxu0 0.0
      %738 = vmatprep.subr.mxu0 0.0
      %739 = vmatpush1.msra.mxu0 0.0
      %740 = vmatprep.subr.mxu0 0.0
      %741 = vmatpush1.msra.mxu0 0.0
      %742 = vmatprep.subr.mxu0 0.0
      %743 = vmatpush1.msra.mxu0 0.0
      %744 = vmatprep.subr.mxu0 0.0
      %745 = vmatpush1.msra.mxu0 0.0
      %746 = vmatprep.subr.mxu0 0.0
      %747 = vmatpush1.msra.mxu0 0.0
      %748 = vmatprep.subr.mxu0 0.0
      %749 = vmatpush1.msra.mxu0 0.0
      %750 = vmatprep.subr.mxu0 0.0
      %751 = vmatpush1.msra.mxu0 0.0
      %752 = vmatprep.subr.mxu0 0.0
      %753 = vmatpush1.msra.mxu0 0.0
      %754 = vmatprep.subr.mxu0 0.0
      %755 = vmatpush1.msra.mxu0 0.0
      %756 = vmatprep.subr.mxu0 0.0
      %757 = vmatpush1.msra.mxu0 0.0
      %758 = vmatprep.subr.mxu0 0.0
      %759 = vmatpush1.msra.mxu0 0.0
      %760 = vmatprep.subr.mxu0 0.0
      %761 = vmatpush1.msra.mxu0 0.0
      %762 = vmatprep.subr.mxu0 0.0
      %763 = vmatpush1.msra.mxu0 0.0
      %764 = vmatprep.subr.mxu0 0.0
      %765 = vmatpush1.msra.mxu0 0.0
      %766 = vmatprep.subr.mxu0 0.0
      %767 = vmatpush1.msra.mxu0 0.0
      %768 = vmatprep.subr.mxu0 0.0
      %769 = vmatpush1.msra.mxu0 0.0
      %770 = vmatprep.subr.mxu0 0.0
      %771 = vmatpush1.msra.mxu0 0.0
      %772 = vmatprep.subr.mxu0 0.0
      %773 = vmatpush1.msra.mxu0 0.0
      %774 = vmatprep.subr.mxu0 0.0
      %775 = vmatpush1.msra.mxu0 0.0
      %776 = vmatprep.subr.mxu0 0.0
      %777 = vmatpush1.msra.mxu0 0.0
      %778 = vmatprep.subr.mxu0 0.0
      %779 = vmatpush1.msra.mxu0 0.0
      %780 = vmatprep.subr.mxu0 0.0
      %781 = vmatpush1.msra.mxu0 0.0
      %782 = vmatprep.subr.mxu0 0.0
      %783 = vmatpush1.msra.mxu0 0.0
      %784 = vmatprep.subr.mxu0 0.0
      %785 = vmatpush1.msra.mxu0 0.0
      %786 = vmatprep.mubr.f32.mxu0 0.0
      %787 = vmatmul.mubr.f32.gmra.mrb[0].mxu0 %v706
      %v788 = vpop.f32.mrb[0].mxu0
      %v789 = vadd.f32 0.0, %v788
      %v790 = vpop.f32.mrb[0].mxu0
      %791 = vmatprep.mubr.f32.mxu0 0.0
      %792 = vmatmul.mubr.f32.gmra.mrb[0].mxu0 %v708
      %v793 = vpop.f32.mrb[0].mxu0
      %v794 = vadd.f32 0.0, %v793
      %v795 = vpop.f32.mrb[0].mxu0
      %796 = vmatprep.mubr.f32.mxu0 0.0
      %797 = vmatmul.mubr.f32.gmra.mrb[0].mxu0 %v710
      %v798 = vpop.f32.mrb[0].mxu0
      %v799 = vadd.f32 0.0, %v798
      %v800 = vpop.f32.mrb[0].mxu0
      %801 = vmatprep.mubr.f32.mxu0 0.0
      %802 = vmatmul.mubr.f32.gmra.mrb[0].mxu0 %v712
      %v803 = vpop.f32.mrb[0].mxu0
      %v804 = vadd.f32 0.0, %v803
      %v805 = vpop.f32.mrb[0].mxu0
      %806 = vmatprep.mubr.f32.mxu0 0.0
      %807 = vmatmul.mubr.f32.gmra.mrb[0].mxu0 %v714
      %v808 = vpop.f32.mrb[0].mxu0
      %v809 = vadd.f32 0.0, %v808
      %v810 = vpop.f32.mrb[0].mxu0
      %811 = vmatprep.mubr.f32.mxu0 0.0
      %812 = vmatmul.mubr.f32.gmra.mrb[0].mxu0 %v716
      %v813 = vpop.f32.mrb[0].mxu0
      %v814 = vadd.f32 0.0, %v813
      %v815 = vpop.f32.mrb[0].mxu0
      %816 = vmatprep.mubr.f32.mxu0 0.0
      %817 = vmatmul.mubr.f32.gmra.mrb[0].mxu0 %v718
      %v818 = vpop.f32.mrb[0].mxu0
      %v819 = vadd.f32 0.0, %v818
      %v820 = vpop.f32.mrb[0].mxu0
      %821 = vmatprep.mubr.f32.mxu0 0.0
      %822 = vmatmul.mubr.f32.gmra.mrb[0].mxu0 %v720
      %v823 = vpop.f32.mrb[0].mxu0
      %v824 = vadd.f32 0.0, %v823
      %v825 = vpop.f32.mrb[0].mxu0
      %826 = vdwg.mxu0
      %v827 = vadd.f32 %v665, %v789
      %v828 = vadd.f32 %v666, %v794
      %v829 = vadd.f32 %v667, %v799
      %v830 = vadd.f32 %v668, %v804
      %v831 = vadd.f32 %v669, %v809
      %v832 = vadd.f32 %v670, %v814
      %v833 = vadd.f32 %v671, %v819
      %v834 = vadd.f32 %v672, %v824
      %v835 = vld [vmem:[%s1 + $0x20] sm:$0xff]
      %v837 = vsel %vm292, %v245, 0
      %839 = vmatprep.subr.mxu0 0.0
      %840 = vmatpush1.msra.mxu0 %v835
      %841 = vmatprep.subr.mxu0 0.0
      %842 = vmatpush1.msra.mxu0 0.0
      %843 = vmatprep.subr.mxu0 0.0
      %844 = vmatpush1.msra.mxu0 0.0
      %845 = vmatprep.subr.mxu0 0.0
      %846 = vmatpush1.msra.mxu0 0.0
      %847 = vmatprep.subr.mxu0 0.0
      %848 = vmatpush1.msra.mxu0 0.0
      %849 = vmatprep.subr.mxu0 0.0
      %850 = vmatpush1.msra.mxu0 0.0
      %851 = vmatprep.subr.mxu0 0.0
      %852 = vmatpush1.msra.mxu0 0.0
      %853 = vmatprep.subr.mxu0 0.0
      %854 = vmatpush1.msra.mxu0 0.0
      %855 = vmatprep.subr.mxu0 0.0
      %856 = vmatpush1.msra.mxu0 0.0
      %857 = vmatprep.subr.mxu0 0.0
      %858 = vmatpush1.msra.mxu0 0.0
      %859 = vmatprep.subr.mxu0 0.0
      %860 = vmatpush1.msra.mxu0 0.0
      %861 = vmatprep.subr.mxu0 0.0
      %862 = vmatpush1.msra.mxu0 0.0
      %863 = vmatprep.subr.mxu0 0.0
      %864 = vmatpush1.msra.mxu0 0.0
      %865 = vmatprep.subr.mxu0 0.0
      %866 = vmatpush1.msra.mxu0 0.0
      %867 = vmatprep.subr.mxu0 0.0
      %868 = vmatpush1.msra.mxu0 0.0
      %869 = vmatprep.subr.mxu0 0.0
      %870 = vmatpush1.msra.mxu0 0.0
      %871 = vmatprep.subr.mxu0 0.0
      %872 = vmatpush1.msra.mxu0 0.0
      %873 = vmatprep.subr.mxu0 0.0
      %874 = vmatpush1.msra.mxu0 0.0
      %875 = vmatprep.subr.mxu0 0.0
      %876 = vmatpush1.msra.mxu0 0.0
      %877 = vmatprep.subr.mxu0 0.0
      %878 = vmatpush1.msra.mxu0 0.0
      %879 = vmatprep.subr.mxu0 0.0
      %880 = vmatpush1.msra.mxu0 0.0
      %881 = vmatprep.subr.mxu0 0.0
      %882 = vmatpush1.msra.mxu0 0.0
      %883 = vmatprep.subr.mxu0 0.0
      %884 = vmatpush1.msra.mxu0 0.0
      %885 = vmatprep.subr.mxu0 0.0
      %886 = vmatpush1.msra.mxu0 0.0
      %887 = vmatprep.subr.mxu0 0.0
      %888 = vmatpush1.msra.mxu0 0.0
      %889 = vmatprep.subr.mxu0 0.0
      %890 = vmatpush1.msra.mxu0 0.0
      %891 = vmatprep.subr.mxu0 0.0
      %892 = vmatpush1.msra.mxu0 0.0
      %893 = vmatprep.subr.mxu0 0.0
      %894 = vmatpush1.msra.mxu0 0.0
      %895 = vmatprep.subr.mxu0 0.0
      %896 = vmatpush1.msra.mxu0 0.0
      %897 = vmatprep.subr.mxu0 0.0
      %898 = vmatpush1.msra.mxu0 0.0
      %899 = vmatprep.subr.mxu0 0.0
      %900 = vmatpush1.msra.mxu0 0.0
      %901 = vmatprep.subr.mxu0 0.0
      %902 = vmatpush1.msra.mxu0 0.0
      %903 = vmatprep.mubr.f32.mxu0 0.0
      %904 = vmatmul.mubr.f32.gmra.mrb[0].mxu0 %v416
      %v905 = vpop.f32.mrb[0].mxu0
      %v906 = vadd.f32 0.0, %v905
      %v907 = vpop.f32.mrb[0].mxu0
      %908 = vmatprep.mubr.f32.mxu0 0.0
      %909 = vmatmul.mubr.f32.gmra.mrb[0].mxu0 %v418
      %v910 = vpop.f32.mrb[0].mxu0
      %v911 = vadd.f32 0.0, %v910
      %v912 = vpop.f32.mrb[0].mxu0
      %913 = vmatprep.mubr.f32.mxu0 0.0
      %914 = vmatmul.mubr.f32.gmra.mrb[0].mxu0 %v420
      %v915 = vpop.f32.mrb[0].mxu0
      %v916 = vadd.f32 0.0, %v915
      %v917 = vpop.f32.mrb[0].mxu0
      %918 = vmatprep.mubr.f32.mxu0 0.0
      %919 = vmatmul.mubr.f32.gmra.mrb[0].mxu0 %v422
      %v920 = vpop.f32.mrb[0].mxu0
      %v921 = vadd.f32 0.0, %v920
      %v922 = vpop.f32.mrb[0].mxu0
      %923 = vmatprep.mubr.f32.mxu0 0.0
      %924 = vmatmul.mubr.f32.gmra.mrb[0].mxu0 %v424
      %v925 = vpop.f32.mrb[0].mxu0
      %v926 = vadd.f32 0.0, %v925
      %v927 = vpop.f32.mrb[0].mxu0
      %928 = vmatprep.mubr.f32.mxu0 0.0
      %929 = vmatmul.mubr.f32.gmra.mrb[0].mxu0 %v426
      %v930 = vpop.f32.mrb[0].mxu0
      %v931 = vadd.f32 0.0, %v930
      %v932 = vpop.f32.mrb[0].mxu0
      %933 = vmatprep.mubr.f32.mxu0 0.0
      %934 = vmatmul.mubr.f32.gmra.mrb[0].mxu0 %v428
      %v935 = vpop.f32.mrb[0].mxu0
      %v936 = vadd.f32 0.0, %v935
      %v937 = vpop.f32.mrb[0].mxu0
      %938 = vmatprep.mubr.f32.mxu0 0.0
      %939 = vmatmul.mubr.f32.gmra.mrb[0].mxu0 %v837
      %v940 = vpop.f32.mrb[0].mxu0
      %v941 = vadd.f32 0.0, %v940
      %v942 = vpop.f32.mrb[0].mxu0
      %943 = vdwg.mxu0
      %v944 = vadd.f32 %v827, %v906
      %v945 = vadd.f32 %v828, %v911
      %v946 = vadd.f32 %v829, %v916
      %v947 = vadd.f32 %v830, %v921
      %v948 = vadd.f32 %v831, %v926
      %v949 = vadd.f32 %v832, %v931
      %v950 = vadd.f32 %v833, %v936
      %v951 = vadd.f32 %v834, %v941
      %v953 = vrot.slane %v245, 1
      %v954 = vrot.slane %v246, 1
      %v955 = vsel %vm266, %v953, %v954
      %v956 = vld [vmem:[%s1 + $0x28] sm:$0xff]
      %v957 = vsel %vm292, %v955, 0
      %959 = vmatprep.subr.mxu0 0.0
      %960 = vmatpush1.msra.mxu0 %v956
      %961 = vmatprep.subr.mxu0 0.0
      %962 = vmatpush1.msra.mxu0 0.0
      %963 = vmatprep.subr.mxu0 0.0
      %964 = vmatpush1.msra.mxu0 0.0
      %965 = vmatprep.subr.mxu0 0.0
      %966 = vmatpush1.msra.mxu0 0.0
      %967 = vmatprep.subr.mxu0 0.0
      %968 = vmatpush1.msra.mxu0 0.0
      %969 = vmatprep.subr.mxu0 0.0
      %970 = vmatpush1.msra.mxu0 0.0
      %971 = vmatprep.subr.mxu0 0.0
      %972 = vmatpush1.msra.mxu0 0.0
      %973 = vmatprep.subr.mxu0 0.0
      %974 = vmatpush1.msra.mxu0 0.0
      %975 = vmatprep.subr.mxu0 0.0
      %976 = vmatpush1.msra.mxu0 0.0
      %977 = vmatprep.subr.mxu0 0.0
      %978 = vmatpush1.msra.mxu0 0.0
      %979 = vmatprep.subr.mxu0 0.0
      %980 = vmatpush1.msra.mxu0 0.0
      %981 = vmatprep.subr.mxu0 0.0
      %982 = vmatpush1.msra.mxu0 0.0
      %983 = vmatprep.subr.mxu0 0.0
      %984 = vmatpush1.msra.mxu0 0.0
      %985 = vmatprep.subr.mxu0 0.0
      %986 = vmatpush1.msra.mxu0 0.0
      %987 = vmatprep.subr.mxu0 0.0
      %988 = vmatpush1.msra.mxu0 0.0
      %989 = vmatprep.subr.mxu0 0.0
      %990 = vmatpush1.msra.mxu0 0.0
      %991 = vmatprep.subr.mxu0 0.0
      %992 = vmatpush1.msra.mxu0 0.0
      %993 = vmatprep.subr.mxu0 0.0
      %994 = vmatpush1.msra.mxu0 0.0
      %995 = vmatprep.subr.mxu0 0.0
      %996 = vmatpush1.msra.mxu0 0.0
      %997 = vmatprep.subr.mxu0 0.0
      %998 = vmatpush1.msra.mxu0 0.0
      %999 = vmatprep.subr.mxu0 0.0
      %1000 = vmatpush1.msra.mxu0 0.0
      %1001 = vmatprep.subr.mxu0 0.0
      %1002 = vmatpush1.msra.mxu0 0.0
      %1003 = vmatprep.subr.mxu0 0.0
      %1004 = vmatpush1.msra.mxu0 0.0
      %1005 = vmatprep.subr.mxu0 0.0
      %1006 = vmatpush1.msra.mxu0 0.0
      %1007 = vmatprep.subr.mxu0 0.0
      %1008 = vmatpush1.msra.mxu0 0.0
      %1009 = vmatprep.subr.mxu0 0.0
      %1010 = vmatpush1.msra.mxu0 0.0
      %1011 = vmatprep.subr.mxu0 0.0
      %1012 = vmatpush1.msra.mxu0 0.0
      %1013 = vmatprep.subr.mxu0 0.0
      %1014 = vmatpush1.msra.mxu0 0.0
      %1015 = vmatprep.subr.mxu0 0.0
      %1016 = vmatpush1.msra.mxu0 0.0
      %1017 = vmatprep.subr.mxu0 0.0
      %1018 = vmatpush1.msra.mxu0 0.0
      %1019 = vmatprep.subr.mxu0 0.0
      %1020 = vmatpush1.msra.mxu0 0.0
      %1021 = vmatprep.subr.mxu0 0.0
      %1022 = vmatpush1.msra.mxu0 0.0
      %1023 = vmatprep.mubr.f32.mxu0 0.0
      %1024 = vmatmul.mubr.f32.gmra.mrb[0].mxu0 %v295
      %v1025 = vpop.f32.mrb[0].mxu0
      %v1026 = vadd.f32 0.0, %v1025
      %v1027 = vpop.f32.mrb[0].mxu0
      %1028 = vmatprep.mubr.f32.mxu0 0.0
      %1029 = vmatmul.mubr.f32.gmra.mrb[0].mxu0 %v297
      %v1030 = vpop.f32.mrb[0].mxu0
      %v1031 = vadd.f32 0.0, %v1030
      %v1032 = vpop.f32.mrb[0].mxu0
      %1033 = vmatprep.mubr.f32.mxu0 0.0
      %1034 = vmatmul.mubr.f32.gmra.mrb[0].mxu0 %v299
      %v1035 = vpop.f32.mrb[0].mxu0
      %v1036 = vadd.f32 0.0, %v1035
      %v1037 = vpop.f32.mrb[0].mxu0
      %1038 = vmatprep.mubr.f32.mxu0 0.0
      %1039 = vmatmul.mubr.f32.gmra.mrb[0].mxu0 %v301
      %v1040 = vpop.f32.mrb[0].mxu0
      %v1041 = vadd.f32 0.0, %v1040
      %v1042 = vpop.f32.mrb[0].mxu0
      %1043 = vmatprep.mubr.f32.mxu0 0.0
      %1044 = vmatmul.mubr.f32.gmra.mrb[0].mxu0 %v303
      %v1045 = vpop.f32.mrb[0].mxu0
      %v1046 = vadd.f32 0.0, %v1045
      %v1047 = vpop.f32.mrb[0].mxu0
      %1048 = vmatprep.mubr.f32.mxu0 0.0
      %1049 = vmatmul.mubr.f32.gmra.mrb[0].mxu0 %v305
      %v1050 = vpop.f32.mrb[0].mxu0
      %v1051 = vadd.f32 0.0, %v1050
      %v1052 = vpop.f32.mrb[0].mxu0
      %1053 = vmatprep.mubr.f32.mxu0 0.0
      %1054 = vmatmul.mubr.f32.gmra.mrb[0].mxu0 %v307
      %v1055 = vpop.f32.mrb[0].mxu0
      %v1056 = vadd.f32 0.0, %v1055
      %v1057 = vpop.f32.mrb[0].mxu0
      %1058 = vmatprep.mubr.f32.mxu0 0.0
      %1059 = vmatmul.mubr.f32.gmra.mrb[0].mxu0 %v957
      %v1060 = vpop.f32.mrb[0].mxu0
      %v1061 = vadd.f32 0.0, %v1060
      %v1062 = vpop.f32.mrb[0].mxu0
      %1063 = vdwg.mxu0
      %v1064 = vadd.f32 %v944, %v1026
      %v1065 = vadd.f32 %v945, %v1031
      %v1066 = vadd.f32 %v946, %v1036
      %v1067 = vadd.f32 %v947, %v1041
      %v1068 = vadd.f32 %v948, %v1046
      %v1069 = vadd.f32 %v949, %v1051
      %v1070 = vadd.f32 %v950, %v1056
      %v1071 = vadd.f32 %v951, %v1061
      %v1072 = vld [vmem:[%s1 + $0x30] sm:$0xff]
      %v1074 = vsel %vm292, %v247, 0
      %1076 = vmatprep.subr.mxu0 0.0
      %1077 = vmatpush1.msra.mxu0 %v1072
      %1078 = vmatprep.subr.mxu0 0.0
      %1079 = vmatpush1.msra.mxu0 0.0
      %1080 = vmatprep.subr.mxu0 0.0
      %1081 = vmatpush1.msra.mxu0 0.0
      %1082 = vmatprep.subr.mxu0 0.0
      %1083 = vmatpush1.msra.mxu0 0.0
      %1084 = vmatprep.subr.mxu0 0.0
      %1085 = vmatpush1.msra.mxu0 0.0
      %1086 = vmatprep.subr.mxu0 0.0
      %1087 = vmatpush1.msra.mxu0 0.0
      %1088 = vmatprep.subr.mxu0 0.0
      %1089 = vmatpush1.msra.mxu0 0.0
      %1090 = vmatprep.subr.mxu0 0.0
      %1091 = vmatpush1.msra.mxu0 0.0
      %1092 = vmatprep.subr.mxu0 0.0
      %1093 = vmatpush1.msra.mxu0 0.0
      %1094 = vmatprep.subr.mxu0 0.0
      %1095 = vmatpush1.msra.mxu0 0.0
      %1096 = vmatprep.subr.mxu0 0.0
      %1097 = vmatpush1.msra.mxu0 0.0
      %1098 = vmatprep.subr.mxu0 0.0
      %1099 = vmatpush1.msra.mxu0 0.0
      %1100 = vmatprep.subr.mxu0 0.0
      %1101 = vmatpush1.msra.mxu0 0.0
      %1102 = vmatprep.subr.mxu0 0.0
      %1103 = vmatpush1.msra.mxu0 0.0
      %1104 = vmatprep.subr.mxu0 0.0
      %1105 = vmatpush1.msra.mxu0 0.0
      %1106 = vmatprep.subr.mxu0 0.0
      %1107 = vmatpush1.msra.mxu0 0.0
      %1108 = vmatprep.subr.mxu0 0.0
      %1109 = vmatpush1.msra.mxu0 0.0
      %1110 = vmatprep.subr.mxu0 0.0
      %1111 = vmatpush1.msra.mxu0 0.0
      %1112 = vmatprep.subr.mxu0 0.0
      %1113 = vmatpush1.msra.mxu0 0.0
      %1114 = vmatprep.subr.mxu0 0.0
      %1115 = vmatpush1.msra.mxu0 0.0
      %1116 = vmatprep.subr.mxu0 0.0
      %1117 = vmatpush1.msra.mxu0 0.0
      %1118 = vmatprep.subr.mxu0 0.0
      %1119 = vmatpush1.msra.mxu0 0.0
      %1120 = vmatprep.subr.mxu0 0.0
      %1121 = vmatpush1.msra.mxu0 0.0
      %1122 = vmatprep.subr.mxu0 0.0
      %1123 = vmatpush1.msra.mxu0 0.0
      %1124 = vmatprep.subr.mxu0 0.0
      %1125 = vmatpush1.msra.mxu0 0.0
      %1126 = vmatprep.subr.mxu0 0.0
      %1127 = vmatpush1.msra.mxu0 0.0
      %1128 = vmatprep.subr.mxu0 0.0
      %1129 = vmatpush1.msra.mxu0 0.0
      %1130 = vmatprep.subr.mxu0 0.0
      %1131 = vmatpush1.msra.mxu0 0.0
      %1132 = vmatprep.subr.mxu0 0.0
      %1133 = vmatpush1.msra.mxu0 0.0
      %1134 = vmatprep.subr.mxu0 0.0
      %1135 = vmatpush1.msra.mxu0 0.0
      %1136 = vmatprep.subr.mxu0 0.0
      %1137 = vmatpush1.msra.mxu0 0.0
      %1138 = vmatprep.subr.mxu0 0.0
      %1139 = vmatpush1.msra.mxu0 0.0
      %1140 = vmatprep.mubr.f32.mxu0 0.0
      %1141 = vmatmul.mubr.f32.gmra.mrb[0].mxu0 %v540
      %v1142 = vpop.f32.mrb[0].mxu0
      %v1143 = vadd.f32 0.0, %v1142
      %v1144 = vpop.f32.mrb[0].mxu0
      %1145 = vmatprep.mubr.f32.mxu0 0.0
      %1146 = vmatmul.mubr.f32.gmra.mrb[0].mxu0 %v543
      %v1147 = vpop.f32.mrb[0].mxu0
      %v1148 = vadd.f32 0.0, %v1147
      %v1149 = vpop.f32.mrb[0].mxu0
      %1150 = vmatprep.mubr.f32.mxu0 0.0
      %1151 = vmatmul.mubr.f32.gmra.mrb[0].mxu0 %v546
      %v1152 = vpop.f32.mrb[0].mxu0
      %v1153 = vadd.f32 0.0, %v1152
      %v1154 = vpop.f32.mrb[0].mxu0
      %1155 = vmatprep.mubr.f32.mxu0 0.0
      %1156 = vmatmul.mubr.f32.gmra.mrb[0].mxu0 %v549
      %v1157 = vpop.f32.mrb[0].mxu0
      %v1158 = vadd.f32 0.0, %v1157
      %v1159 = vpop.f32.mrb[0].mxu0
      %1160 = vmatprep.mubr.f32.mxu0 0.0
      %1161 = vmatmul.mubr.f32.gmra.mrb[0].mxu0 %v552
      %v1162 = vpop.f32.mrb[0].mxu0
      %v1163 = vadd.f32 0.0, %v1162
      %v1164 = vpop.f32.mrb[0].mxu0
      %1165 = vmatprep.mubr.f32.mxu0 0.0
      %1166 = vmatmul.mubr.f32.gmra.mrb[0].mxu0 %v555
      %v1167 = vpop.f32.mrb[0].mxu0
      %v1168 = vadd.f32 0.0, %v1167
      %v1169 = vpop.f32.mrb[0].mxu0
      %1170 = vmatprep.mubr.f32.mxu0 0.0
      %1171 = vmatmul.mubr.f32.gmra.mrb[0].mxu0 %v558
      %v1172 = vpop.f32.mrb[0].mxu0
      %v1173 = vadd.f32 0.0, %v1172
      %v1174 = vpop.f32.mrb[0].mxu0
      %1175 = vmatprep.mubr.f32.mxu0 0.0
      %1176 = vmatmul.mubr.f32.gmra.mrb[0].mxu0 %v1074
      %v1177 = vpop.f32.mrb[0].mxu0
      %v1178 = vadd.f32 0.0, %v1177
      %v1179 = vpop.f32.mrb[0].mxu0
      %1180 = vdwg.mxu0
      %v1181 = vadd.f32 %v1064, %v1143
      %v1182 = vadd.f32 %v1065, %v1148
      %v1183 = vadd.f32 %v1066, %v1153
      %v1184 = vadd.f32 %v1067, %v1158
      %v1185 = vadd.f32 %v1068, %v1163
      %v1186 = vadd.f32 %v1069, %v1168
      %v1187 = vadd.f32 %v1070, %v1173
      %v1188 = vadd.f32 %v1071, %v1178
      %v1190 = vrot.slane %v247, 1
      %v1191 = vrot.slane %v248, 1
      %v1192 = vsel %vm266, %v1190, %v1191
      %v1193 = vld [vmem:[%s1 + $0x38] sm:$0xff]
      %v1194 = vsel %vm292, %v1192, 0
      %1196 = vmatprep.subr.mxu0 0.0
      %1197 = vmatpush1.msra.mxu0 %v1193
      %1198 = vmatprep.subr.mxu0 0.0
      %1199 = vmatpush1.msra.mxu0 0.0
      %1200 = vmatprep.subr.mxu0 0.0
      %1201 = vmatpush1.msra.mxu0 0.0
      %1202 = vmatprep.subr.mxu0 0.0
      %1203 = vmatpush1.msra.mxu0 0.0
      %1204 = vmatprep.subr.mxu0 0.0
      %1205 = vmatpush1.msra.mxu0 0.0
      %1206 = vmatprep.subr.mxu0 0.0
      %1207 = vmatpush1.msra.mxu0 0.0
      %1208 = vmatprep.subr.mxu0 0.0
      %1209 = vmatpush1.msra.mxu0 0.0
      %1210 = vmatprep.subr.mxu0 0.0
      %1211 = vmatpush1.msra.mxu0 0.0
      %1212 = vmatprep.subr.mxu0 0.0
      %1213 = vmatpush1.msra.mxu0 0.0
      %1214 = vmatprep.subr.mxu0 0.0
      %1215 = vmatpush1.msra.mxu0 0.0
      %1216 = vmatprep.subr.mxu0 0.0
      %1217 = vmatpush1.msra.mxu0 0.0
      %1218 = vmatprep.subr.mxu0 0.0
      %1219 = vmatpush1.msra.mxu0 0.0
      %1220 = vmatprep.subr.mxu0 0.0
      %1221 = vmatpush1.msra.mxu0 0.0
      %1222 = vmatprep.subr.mxu0 0.0
      %1223 = vmatpush1.msra.mxu0 0.0
      %1224 = vmatprep.subr.mxu0 0.0
      %1225 = vmatpush1.msra.mxu0 0.0
      %1226 = vmatprep.subr.mxu0 0.0
      %1227 = vmatpush1.msra.mxu0 0.0
      %1228 = vmatprep.subr.mxu0 0.0
      %1229 = vmatpush1.msra.mxu0 0.0
      %1230 = vmatprep.subr.mxu0 0.0
      %1231 = vmatpush1.msra.mxu0 0.0
      %1232 = vmatprep.subr.mxu0 0.0
      %1233 = vmatpush1.msra.mxu0 0.0
      %1234 = vmatprep.subr.mxu0 0.0
      %1235 = vmatpush1.msra.mxu0 0.0
      %1236 = vmatprep.subr.mxu0 0.0
      %1237 = vmatpush1.msra.mxu0 0.0
      %1238 = vmatprep.subr.mxu0 0.0
      %1239 = vmatpush1.msra.mxu0 0.0
      %1240 = vmatprep.subr.mxu0 0.0
      %1241 = vmatpush1.msra.mxu0 0.0
      %1242 = vmatprep.subr.mxu0 0.0
      %1243 = vmatpush1.msra.mxu0 0.0
      %1244 = vmatprep.subr.mxu0 0.0
      %1245 = vmatpush1.msra.mxu0 0.0
      %1246 = vmatprep.subr.mxu0 0.0
      %1247 = vmatpush1.msra.mxu0 0.0
      %1248 = vmatprep.subr.mxu0 0.0
      %1249 = vmatpush1.msra.mxu0 0.0
      %1250 = vmatprep.subr.mxu0 0.0
      %1251 = vmatpush1.msra.mxu0 0.0
      %1252 = vmatprep.subr.mxu0 0.0
      %1253 = vmatpush1.msra.mxu0 0.0
      %1254 = vmatprep.subr.mxu0 0.0
      %1255 = vmatpush1.msra.mxu0 0.0
      %1256 = vmatprep.subr.mxu0 0.0
      %1257 = vmatpush1.msra.mxu0 0.0
      %1258 = vmatprep.subr.mxu0 0.0
      %1259 = vmatpush1.msra.mxu0 0.0
      %1260 = vmatprep.mubr.f32.mxu0 0.0
      %1261 = vmatmul.mubr.f32.gmra.mrb[0].mxu0 %v708
      %v1262 = vpop.f32.mrb[0].mxu0
      %v1263 = vadd.f32 0.0, %v1262
      %v1264 = vpop.f32.mrb[0].mxu0
      %1265 = vmatprep.mubr.f32.mxu0 0.0
      %1266 = vmatmul.mubr.f32.gmra.mrb[0].mxu0 %v710
      %v1267 = vpop.f32.mrb[0].mxu0
      %v1268 = vadd.f32 0.0, %v1267
      %v1269 = vpop.f32.mrb[0].mxu0
      %1270 = vmatprep.mubr.f32.mxu0 0.0
      %1271 = vmatmul.mubr.f32.gmra.mrb[0].mxu0 %v712
      %v1272 = vpop.f32.mrb[0].mxu0
      %v1273 = vadd.f32 0.0, %v1272
      %v1274 = vpop.f32.mrb[0].mxu0
      %1275 = vmatprep.mubr.f32.mxu0 0.0
      %1276 = vmatmul.mubr.f32.gmra.mrb[0].mxu0 %v714
      %v1277 = vpop.f32.mrb[0].mxu0
      %v1278 = vadd.f32 0.0, %v1277
      %v1279 = vpop.f32.mrb[0].mxu0
      %1280 = vmatprep.mubr.f32.mxu0 0.0
      %1281 = vmatmul.mubr.f32.gmra.mrb[0].mxu0 %v716
      %v1282 = vpop.f32.mrb[0].mxu0
      %v1283 = vadd.f32 0.0, %v1282
      %v1284 = vpop.f32.mrb[0].mxu0
      %1285 = vmatprep.mubr.f32.mxu0 0.0
      %1286 = vmatmul.mubr.f32.gmra.mrb[0].mxu0 %v718
      %v1287 = vpop.f32.mrb[0].mxu0
      %v1288 = vadd.f32 0.0, %v1287
      %v1289 = vpop.f32.mrb[0].mxu0
      %1290 = vmatprep.mubr.f32.mxu0 0.0
      %1291 = vmatmul.mubr.f32.gmra.mrb[0].mxu0 %v720
      %v1292 = vpop.f32.mrb[0].mxu0
      %v1293 = vadd.f32 0.0, %v1292
      %v1294 = vpop.f32.mrb[0].mxu0
      %1295 = vmatprep.mubr.f32.mxu0 0.0
      %1296 = vmatmul.mubr.f32.gmra.mrb[0].mxu0 %v1194
      %v1297 = vpop.f32.mrb[0].mxu0
      %v1298 = vadd.f32 0.0, %v1297
      %v1299 = vpop.f32.mrb[0].mxu0
      %1300 = vdwg.mxu0
      %v1301 = vadd.f32 %v1181, %v1263
      %v1302 = vadd.f32 %v1182, %v1268
      %v1303 = vadd.f32 %v1183, %v1273
      %v1304 = vadd.f32 %v1184, %v1278
      %v1305 = vadd.f32 %v1185, %v1283
      %v1306 = vadd.f32 %v1186, %v1288
      %v1307 = vadd.f32 %v1187, %v1293
      %v1308 = vadd.f32 %v1188, %v1298
      %1309 = vst [vmem:[%s204] sm:$0xff] %v1301
      %1310 = vst [vmem:[%s204 + $0x8] sm:$0xff] %v1302
      %1311 = vst [vmem:[%s204 + $0x10] sm:$0xff] %v1303
      %1312 = vst [vmem:[%s204 + $0x18] sm:$0xff] %v1304
      %1313 = vst [vmem:[%s204 + $0x20] sm:$0xff] %v1305
      %1314 = vst [vmem:[%s204 + $0x28] sm:$0xff] %v1306
      %1315 = vst [vmem:[%s204 + $0x30] sm:$0xff] %v1307
      %1316 = vst [vmem:[%s204 + $0x38] sm:$0xff] %v1308
      %v1317 = vadd.f32 %v1301, %v1302
      %v1318 = vadd.f32 %v1317, %v1303
      %v1319 = vadd.f32 %v1318, %v1304
      %v1320 = vadd.f32 %v1319, %v1305
      %v1321 = vadd.f32 %v1320, %v1306
      %v1322 = vadd.f32 %v1321, %v1307
      %v1323 = vadd.f32 %v1322, %v1308
      %v1324 = vrot.slane %v1323, 4
      %v1325 = vadd.f32 %v1323, %v1324
      %v1326 = vrot.slane %v1325, 2
      %v1327 = vadd.f32 %v1325, %v1326
      %v1328 = vrot.slane %v1327, 1
      %v1329 = vadd.f32 %v1327, %v1328
      %v1330 = vmul.f32 %v1301, %v1301
      %v1331 = vmul.f32 %v1302, %v1302
      %v1332 = vmul.f32 %v1303, %v1303
      %v1333 = vmul.f32 %v1304, %v1304
      %v1334 = vmul.f32 %v1305, %v1305
      %v1335 = vmul.f32 %v1306, %v1306
      %v1336 = vmul.f32 %v1307, %v1307
      %v1337 = vmul.f32 %v1308, %v1308
      %v1338 = vadd.f32 %v1330, %v1331
      %v1339 = vadd.f32 %v1338, %v1332
      %v1340 = vadd.f32 %v1339, %v1333
      %v1341 = vadd.f32 %v1340, %v1334
      %v1342 = vadd.f32 %v1341, %v1335
      %v1343 = vadd.f32 %v1342, %v1336
      %v1344 = vadd.f32 %v1343, %v1337
      %v1345 = vrot.slane %v1344, 4
      %v1346 = vadd.f32 %v1344, %v1345
      %v1347 = vrot.slane %v1346, 2
      %v1348 = vadd.f32 %v1346, %v1347
      %v1349 = vrot.slane %v1348, 1
      %v1350 = vadd.f32 %v1348, %v1349
      %vm1351 = vcmask 1040384
      %v1352 = vsel %vm1351, %v1329, %v1350
      %1353 = vst [vmem:[%s212] sm:$0x3] %v1352
      %s1354 = smul.u32 8, %s20
      %p1355 = scmp.lt.s32.totalorder %s19, 1
      %s1356 = scalar_select %p1355, %s19, 1
      %p1357 = scmp.lt.s32.totalorder %s1354, 7
      %s1358 = scalar_select %p1357, %s1354, 7
      %s1359 = smul.addr %s1356, 8
      %s1360 = sadd.s32 %s1358, %s1359
      %s1361 = smul.addr %s1360, 8
      %s1362 = scalar_lea.vmem %s2, %s1361
      %p1363 = scmp.lt.s32.totalorder %s19, 1
      %s1364 = scalar_select %p1363, %s19, 1
      %p1365 = scmp.lt.s32.totalorder %s20, 0
      %s1366 = scalar_select %p1365, %s20, 0
      %s1367 = sadd.s32 %s1366, %s1364
      %s1368 = smul.addr %s1367, 2
      %s1369 = scalar_lea.vmem %s3, %s1368
      // Predicated region
      $region29: #{residual_upsample_block.2} parent=27 // pred_check
        %p1370 = pneg %p94
      $region30: #{residual_upsample_block.2} parent=27 // pred_check_branch
        %1372 = sbr.rel (%p1370) target = $region32
      $region31: #{residual_upsample_block.2} parent=27 // pred_region
        %s1373 = smul.u32 8, %s20
      $region32: #{residual_upsample_block.2} parent=27 // pred_fallthru
        _
      // Predicated region
      $region33: #{residual_upsample_block.2} parent=27 // pred_check
        %p1374 = pneg %p122
      $region34: #{residual_upsample_block.2} parent=27 // pred_check_branch
        %1376 = sbr.rel (%p1374) target = $region36
      $region35: #{residual_upsample_block.2} parent=27 // pred_region
        _
      $region36: #{residual_upsample_block.2} parent=27 // pred_fallthru
        _
    $region28: #{residual_upsample_block.2} parent=5 // pred_fallthru
      _
    %p1377 = scmp.le.s32.totalorder 2, %s10
    // Predicated region
    $region37: #{residual_upsample_block.2} parent=5 // pred_check
      %p1378 = pneg %p1377
    $region38: #{residual_upsample_block.2} parent=5 // pred_check_branch
      %1380 = sbr.rel (%p1378) target = $region40
    $region39: #{residual_upsample_block.2} parent=5 // pred_region
      %s1381 = ssub.s32 %s10, 2
      // Predicated region
      $region41: #{residual_upsample_block.2} parent=39 // pred_check
        %p1382 = pneg %p100
      $region42: #{residual_upsample_block.2} parent=39 // pred_check_branch
        %1384 = sbr.rel (%p1382) target = $region44
      $region43: #{residual_upsample_block.2} parent=39 // pred_region
        %s1385 = smul.u32 8, %s22
        %p1386 = scmp.lt.s32.totalorder %s21, 1
        %s1387 = scalar_select %p1386, %s21, 1
        %p1388 = scmp.lt.s32.totalorder %s1385, 7
        %s1389 = scalar_select %p1388, %s1385, 7
        %s1390 = smul.addr %s1387, 8
        %s1391 = sadd.s32 %s1389, %s1390
        %s1392 = smul.addr %s1391, 8
        %s1393 = scalar_lea.vmem %s2, %s1392
      $region44: #{residual_upsample_block.2} parent=39 // pred_fallthru
        _
      // Predicated region
      $region45: #{residual_upsample_block.2} parent=39 // pred_check
        %p1394 = pneg %p128
      $region46: #{residual_upsample_block.2} parent=39 // pred_check_branch
        %1396 = sbr.rel (%p1394) target = $region48
      $region47: #{residual_upsample_block.2} parent=39 // pred_region
        %p1397 = scmp.lt.s32.totalorder %s21, 1
        %s1398 = scalar_select %p1397, %s21, 1
        %p1399 = scmp.lt.s32.totalorder %s22, 0
        %s1400 = scalar_select %p1399, %s22, 0
        %s1401 = sadd.s32 %s1400, %s1398
        %s1402 = smul.addr %s1401, 2
        %s1403 = scalar_lea.vmem %s3, %s1402
      $region48: #{residual_upsample_block.2} parent=39 // pred_fallthru
        _
    $region40: #{residual_upsample_block.2} parent=5 // pred_fallthru
      _
  $region6: #{residual_upsample_block.2} parent=0 // loop_footer
    %s14 = sadd.s32 1, %s10
  $region7: #{residual_upsample_block.2} parent=0 // loop_footer_branch
    %9 = sbr.rel target = $region3
  $region8: #{residual_upsample_block.2} parent=0 // loop_exit
    _

// kernel: residual_upsample_block.3
$region0: #{residual_upsample_block.3}
  #allocation0 [shape = 'u32[]', space=smem, size = 0x4, offset = 0x4, fixed_abs, tag = 'smem constant byte address 0x4 - core index']
  #allocation1 [shape = 'u32[144,128]{1,0:T(1,128)}', space=vmem, size = 0x12000, scoped, tag = 'internal scratch']
  %s0 = inlined_call_operand.vmem [shape: f32[2,10,5,256], index: 0, kind: input, shape index: {}]
  %s1 = inlined_call_operand.vmem [shape: f32[2048,128], index: 1, kind: input, shape index: {}]
  %s2 = inlined_call_operand.vmem [shape: f32[1,256], index: 2, kind: input, shape index: {}]
  %s3 = inlined_call_operand.vmem [shape: f32[1,256], index: 3, kind: input, shape index: {}]
  %s4 = inlined_call_operand.vmem [shape: f32[2,4,4,128], index: 4, kind: output, shape index: {0}]
  %s5 = inlined_call_operand.vmem [shape: f32[2,1,2,128], index: 5, kind: output, shape index: {1}]
  %6 = xla_tuple %s4, %s5
  %s7 = sld [smem:[#allocation0]]
  $region57: #{residual_upsample_block.3} parent=0
    _
  %s9 = ssub.s32 1, %s7
  %s10 = scalar_select 0, %s9, %s7
  loop: start=0, step=1, limit=4
  $region2: #{residual_upsample_block.3} parent=0 // loop_pre_header
    _
  $region3: #{residual_upsample_block.3} parent=0 // loop_header
    %s12 = sphi 0, %s16
    %p13 = scmp.ge.s32.totalorder %s12, 4
    %s19 = sphi 0, %s31
    %s20 = sphi 0, %s27
    %s21 = sphi 0, %s19
    %s22 = sphi 0, %s20
    %s23 = sphi 0, %s21
    %s24 = sphi 0, %s22
    %s34 = sphi 0, %s36
    %s37 = sphi 0, %s34
    %s38 = sphi 0, %s37
    %s54 = sphi 0, %s38
    %s58 = sphi 0, %s58
    %s60 = sphi 0, %s58
    %s61 = sphi 0, %s60
    %s75 = sphi 0, %s61
    %s79 = sphi 0, %s79
    %s81 = sphi 0, %s79
    %s82 = sphi 0, %s81
    %s96 = sphi 0, %s82
    %s100 = sphi 0, %s100
    %s102 = sphi 0, %s100
    %s103 = sphi 0, %s102
    %s117 = sphi 0, %s103
    %s125 = sphi 0, %s127
    %s128 = sphi 0, %s125
    %s129 = sphi 0, %s128
    %s145 = sphi 0, %s129
    %s153 = sphi 0, %s155
    %s156 = sphi 0, %s153
    %s157 = sphi 0, %s156
    %s173 = sphi 0, %s157
  $region4: #{residual_upsample_block.3} parent=0 // loop_header_branch
    %15 = sbr.rel (%p13) target = $region8
  $region5: #{residual_upsample_block.3} parent=0 // loop_body
    %s17 = ssub.s32 %s12, 1
    %s18 = ssub.s32 %s12, 2
    %s25 = sadd.s32 1, %s20
    %p26 = scmp.ge.s32.totalorder %s25, 1
    %s27 = scalar_select %p26, 0, %s25
    %s28 = sadd.s32 1, %s19
    %s29 = scalar_select %p26, %s28, %s19
    %p30 = scmp.ge.s32.totalorder %s29, 2
    %s31 = scalar_select %p30, 0, %s29
    %s32 = ssub.s32 %s19, %s31
    %p33 = scmp.eq.s32.totalorder %s32, 0
    %s35 = sadd.s32 %s34, 1
    %s36 = scalar_select %p33, %s34, %s35
    %p39 = pneg %p33
    %p40 = scmp.eq.s32.totalorder %s12, 1
    %p41 = por %p39, %p40
    %p42 = scmp.ne.s32.totalorder %s34, %s37
    %p43 = scmp.eq.s32.totalorder %s12, 0
    %p44 = por %p42, %p43
    %p45 = scmp.ne.s32.totalorder %s34, %s37
    %p46 = scmp.eq.s32.totalorder %s17, 1
    %p47 = por %p45, %p46
    %p48 = scmp.ne.s32.totalorder %s37, %s38
    %p49 = scmp.eq.s32.totalorder %s17, 0
    %p50 = por %p48, %p49
    %p51 = scmp.ne.s32.totalorder %s37, %s38
    %p52 = scmp.eq.s32.totalorder %s18, 1
    %p53 = por %p51, %p52
    %p55 = scmp.ne.s32.totalorder %s38, %s54
    %p56 = scmp.eq.s32.totalorder %s18, 0
    %p57 = por %p55, %p56
    %s59 = sadd.s32 %s58, 1
    %p62 = scmp.eq.s32.totalorder %s12, 1
    %p63 = scmp.ne.s32.totalorder %s58, %s60
    %p64 = scmp.eq.s32.totalorder %s12, 0
    %p65 = por %p63, %p64
    %p66 = scmp.ne.s32.totalorder %s58, %s60
    %p67 = scmp.eq.s32.totalorder %s17, 1
    %p68 = por %p66, %p67
    %p69 = scmp.ne.s32.totalorder %s60, %s61
    %p70 = scmp.eq.s32.totalorder %s17, 0
    %p71 = por %p69, %p70
    %p72 = scmp.ne.s32.totalorder %s60, %s61
    %p73 = scmp.eq.s32.totalorder %s18, 1
    %p74 = por %p72, %p73
    %p76 = scmp.ne.s32.totalorder %s61, %s75
    %p77 = scmp.eq.s32.totalorder %s18, 0
    %p78 = por %p76, %p77
    %s80 = sadd.s32 %s79, 1
    %p83 = scmp.eq.s32.totalorder %s12, 1
    %p84 = scmp.ne.s32.totalorder %s79, %s81
    %p85 = scmp.eq.s32.totalorder %s12, 0
    %p86 = por %p84, %p85
    %p87 = scmp.ne.s32.totalorder %s79, %s81
    %p88 = scmp.eq.s32.totalorder %s17, 1
    %p89 = por %p87, %p88
    %p90 = scmp.ne.s32.totalorder %s81, %s82
    %p91 = scmp.eq.s32.totalorder %s17, 0
    %p92 = por %p90, %p91
    %p93 = scmp.ne.s32.totalorder %s81, %s82
    %p94 = scmp.eq.s32.totalorder %s18, 1
    %p95 = por %p93, %p94
    %p97 = scmp.ne.s32.totalorder %s82, %s96
    %p98 = scmp.eq.s32.totalorder %s18, 0
    %p99 = por %p97, %p98
    %s101 = sadd.s32 %s100, 1
    %p104 = scmp.eq.s32.totalorder %s12, 1
    %p105 = scmp.ne.s32.totalorder %s100, %s102
    %p106 = scmp.eq.s32.totalorder %s12, 0
    %p107 = por %p105, %p106
    %p108 = scmp.ne.s32.totalorder %s100, %s102
    %p109 = scmp.eq.s32.totalorder %s17, 1
    %p110 = por %p108, %p109
    %p111 = scmp.ne.s32.totalorder %s102, %s103
    %p112 = scmp.eq.s32.totalorder %s17, 0
    %p113 = por %p111, %p112
    %p114 = scmp.ne.s32.totalorder %s102, %s103
    %p115 = scmp.eq.s32.totalorder %s18, 1
    %p116 = por %p114, %p115
    %p118 = scmp.ne.s32.totalorder %s103, %s117
    %p119 = scmp.eq.s32.totalorder %s18, 0
    %p120 = por %p118, %p119
    %s121 = ssub.s32 %s19, %s31
    %s122 = ssub.s32 %s20, %s27
    %s123 = sor.u32 %s121, %s122
    %p124 = scmp.eq.s32.totalorder %s123, 0
    %s126 = sadd.s32 %s125, 1
    %s127 = scalar_select %p124, %s125, %s126
    %p130 = pneg %p124
    %p131 = scmp.eq.s32.totalorder %s12, 1
    %p132 = por %p130, %p131
    %p133 = scmp.ne.s32.totalorder %s125, %s128
    %p134 = scmp.eq.s32.totalorder %s12, 0
    %p135 = por %p133, %p134
    %p136 = scmp.ne.s32.totalorder %s125, %s128
    %p137 = scmp.eq.s32.totalorder %s17, 1
    %p138 = por %p136, %p137
    %p139 = scmp.ne.s32.totalorder %s128, %s129
    %p140 = scmp.eq.s32.totalorder %s17, 0
    %p141 = por %p139, %p140
    %p142 = scmp.ne.s32.totalorder %s128, %s129
    %p143 = scmp.eq.s32.totalorder %s18, 1
    %p144 = por %p142, %p143
    %p146 = scmp.ne.s32.totalorder %s129, %s145
    %p147 = scmp.eq.s32.totalorder %s18, 0
    %p148 = por %p146, %p147
    %s149 = ssub.s32 %s19, %s31
    %s150 = ssub.s32 %s20, %s27
    %s151 = sor.u32 %s149, %s150
    %p152 = scmp.eq.s32.totalorder %s151, 0
    %s154 = sadd.s32 %s153, 1
    %s155 = scalar_select %p152, %s153, %s154
    %p158 = pneg %p152
    %p159 = scmp.eq.s32.totalorder %s12, 1
    %p160 = por %p158, %p159
    %p161 = scmp.ne.s32.totalorder %s153, %s156
    %p162 = scmp.eq.s32.totalorder %s12, 0
    %p163 = por %p161, %p162
    %p164 = scmp.ne.s32.totalorder %s153, %s156
    %p165 = scmp.eq.s32.totalorder %s17, 1
    %p166 = por %p164, %p165
    %p167 = scmp.ne.s32.totalorder %s156, %s157
    %p168 = scmp.eq.s32.totalorder %s17, 0
    %p169 = por %p167, %p168
    %p170 = scmp.ne.s32.totalorder %s156, %s157
    %p171 = scmp.eq.s32.totalorder %s18, 1
    %p172 = por %p170, %p171
    %p174 = scmp.ne.s32.totalorder %s157, %s173
    %p175 = scmp.eq.s32.totalorder %s18, 0
    %p176 = por %p174, %p175
    %p177 = scmp.le.s32.totalorder 1, %s12
    %p178 = scmp.lt.s32.totalorder %s12, 3
    %p179 = pnand %p177, %p178
    %p180 = pneg %p179
    // Predicated region
    $region9: #{residual_upsample_block.3} parent=5 // pred_check
      _
    $region10: #{residual_upsample_block.3} parent=5 // pred_check_branch
      %182 = sbr.rel (%p179) target = $region12
    $region11: #{residual_upsample_block.3} parent=5 // pred_region
      %s183 = ssub.s32 %s12, 1
      // Predicated region
      $region13: #{residual_upsample_block.3} parent=11 // pred_check
        %p184 = pneg %p71
      $region14: #{residual_upsample_block.3} parent=11 // pred_check_branch
        %186 = sbr.rel (%p184) target = $region16
      $region15: #{residual_upsample_block.3} parent=11 // pred_region
        _
      $region16: #{residual_upsample_block.3} parent=11 // pred_fallthru
        _
      // Predicated region
      $region17: #{residual_upsample_block.3} parent=11 // pred_check
        %p187 = pneg %p92
      $region18: #{residual_upsample_block.3} parent=11 // pred_check_branch
        %189 = sbr.rel (%p187) target = $region20
      $region19: #{residual_upsample_block.3} parent=11 // pred_region
        _
      $region20: #{residual_upsample_block.3} parent=11 // pred_fallthru
        _
      // Predicated region
      $region21: #{residual_upsample_block.3} parent=11 // pred_check
        %p190 = pneg %p113
      $region22: #{residual_upsample_block.3} parent=11 // pred_check_branch
        %192 = sbr.rel (%p190) target = $region24
      $region23: #{residual_upsample_block.3} parent=11 // pred_region
        _
      $region24: #{residual_upsample_block.3} parent=11 // pred_fallthru
        _
    $region12: #{residual_upsample_block.3} parent=5 // pred_fallthru
      _
    %p193 = scmp.lt.s32.totalorder %s12, 2
    // Predicated region
    $region25: #{residual_upsample_block.3} parent=5 // pred_check
      %p194 = pneg %p193
    $region26: #{residual_upsample_block.3} parent=5 // pred_check_branch
      %196 = sbr.rel (%p194) target = $region28
    $region27: #{residual_upsample_block.3} parent=5 // pred_region
      // Predicated region
      $region29: #{residual_upsample_block.3} parent=27 // pred_check
        %p197 = pneg %p44
      $region30: #{residual_upsample_block.3} parent=27 // pred_check_branch
        %199 = sbr.rel (%p197) target = $region32
      $region31: #{residual_upsample_block.3} parent=27 // pred_region
        %p200 = scmp.lt.s32.totalorder %s19, 1
        %s201 = scalar_select %p200, %s19, 1
        %s202 = smul.addr %s201, 20
        %s203 = smul.addr %s202, 8
        %s204 = scalar_lea.vmem %s0, %s203
      $region32: #{residual_upsample_block.3} parent=27 // pred_fallthru
        _
    $region28: #{residual_upsample_block.3} parent=5 // pred_fallthru
      _
    %p205 = scmp.le.s32.totalorder 1, %s12
    %p206 = scmp.lt.s32.totalorder %s12, 3
    %p207 = pnand %p205, %p206
    %p208 = pneg %p207
    // Predicated region
    $region33: #{residual_upsample_block.3} parent=5 // pred_check
      _
    $region34: #{residual_upsample_block.3} parent=5 // pred_check_branch
      %210 = sbr.rel (%p207) target = $region36
    $region35: #{residual_upsample_block.3} parent=5 // pred_region
      %s211 = ssub.s32 %s12, 1
      %p212 = scmp.lt.s32.totalorder %s21, 1
      %s213 = scalar_select %p212, %s21, 1
      %s214 = smul.addr %s213, 20
      %s215 = smul.addr %s214, 8
      %s216 = scalar_lea.vmem %s0, %s215
      %p217 = pneg %p50
      %p218 = pneg %p47
      %p219 = pneg %p71
      %p220 = pneg %p68
      %p221 = pneg %p92
      %p222 = pneg %p89
      %p223 = pneg %p113
      %p224 = pneg %p110
      %p225 = pneg %p141
      %p226 = pneg %p138
      %s227 = smul.u32 4, %s22
      %p228 = scmp.lt.s32.totalorder %s21, 1
      %s229 = scalar_select %p228, %s21, 1
      %p230 = scmp.lt.s32.totalorder %s227, 3
      %s231 = scalar_select %p230, %s227, 3
      %s232 = smul.addr %s229, 4
      %s233 = sadd.s32 %s231, %s232
      %s234 = smul.addr %s233, 4
      %s235 = scalar_lea.vmem %s4, %s234
      %p236 = pneg %p169
      %p237 = pneg %p166
      %p238 = scmp.lt.s32.totalorder %s21, 1
      %s239 = scalar_select %p238, %s21, 1
      %p240 = scmp.lt.s32.totalorder %s22, 0
      %s241 = scalar_select %p240, %s22, 0
      %s242 = sadd.s32 %s241, %s239
      %s243 = smul.addr %s242, 2
      %s244 = scalar_lea.vmem %s5, %s243
      %p245 = scmp.lt.s32.totalorder %s21, 1
      %s246 = scalar_select %p245, %s21, 1
      %s247 = smul.addr %s246, 20
      %s248 = smul.addr %s247, 8
      %s249 = scalar_lea.vmem %s0, %s248
      %s250 = smul.u32 4, %s22
      %p251 = scmp.lt.s32.totalorder %s21, 1
      %s252 = scalar_select %p251, %s21, 1
      %p253 = scmp.lt.s32.totalorder %s250, 3
      %s254 = scalar_select %p253, %s250, 3
      %s255 = smul.addr %s252, 4
      %s256 = sadd.s32 %s254, %s255
      %s257 = smul.addr %s256, 4
      %s258 = scalar_lea.vmem %s4, %s257
      %s259 = smul.u32 4, %s22
      %p260 = scmp.lt.s32.totalorder %s21, 1
      %s261 = scalar_select %p260, %s21, 1
      %p262 = scmp.lt.s32.totalorder %s22, 0
      %s263 = scalar_select %p262, %s22, 0
      %s264 = sadd.s32 %s263, %s261
      %s265 = smul.addr %s264, 2
      %s266 = scalar_lea.vmem %s5, %s265
      %v267 = vld [vmem:[%s249] sm:$0x1f]
      %v268 = vld [vmem:[%s249 + $0x8] sm:$0x1f]
      %v269 = vld [vmem:[%s249 + $0x10] sm:$0x1f]
      %v270 = vld [vmem:[%s249 + $0x18] sm:$0x1f]
      %v271 = vld [vmem:[%s249 + $0x20] sm:$0x1f]
      %v272 = vld [vmem:[%s249 + $0x28] sm:$0x1f]
      %v273 = vld [vmem:[%s249 + $0x30] sm:$0x1f]
      %v274 = vld [vmem:[%s249 + $0x38] sm:$0x1f]
      %v275 = vld [vmem:[%s249 + $0x40] sm:$0x1f]
      %v276 = vld [vmem:[%s249 + $0x48] sm:$0x1f]
      %v277 = vld [vmem:[%s249 + $0x50] sm:$0x1f]
      %v278 = vld [vmem:[%s249 + $0x58] sm:$0x1f]
      %v279 = vld [vmem:[%s249 + $0x60] sm:$0x1f]
      %v280 = vld [vmem:[%s249 + $0x68] sm:$0x1f]
      %v281 = vld [vmem:[%s249 + $0x70] sm:$0x1f]
      %v282 = vld [vmem:[%s249 + $0x78] sm:$0x1f]
      %v283 = vld [vmem:[%s249 + $0x80] sm:$0x1f]
      %v284 = vld [vmem:[%s249 + $0x88] sm:$0x1f]
      %v285 = vld [vmem:[%s249 + $0x90] sm:$0x1f]
      %v286 = vld [vmem:[%s249 + $0x98] sm:$0x1f]
      %v287 = vld [vmem:[%s2] sm:$0x3]
      %v289 = vlaneseq
      %v290 = vshrl.u32 %v289, 7
      %v291 = vsub.s32 0, %v290
      %v292 = vrot.slane %v287, %v291
      %v293 = vlaneseq
      %v294 = vshrl.u32 %v293, 7
      %v295 = vsub.s32 1, %v294
      %v296 = vrot.slane %v287, %v295
      %v299 = vmul.f32 %v267, %v292
      %v300 = vmul.f32 %v268, %v296
      %v301 = vmul.f32 %v269, %v292
      %v302 = vmul.f32 %v270, %v296
      %v303 = vmul.f32 %v271, %v292
      %v304 = vmul.f32 %v272, %v296
      %v305 = vmul.f32 %v273, %v292
      %v306 = vmul.f32 %v274, %v296
      %v307 = vmul.f32 %v275, %v292
      %v308 = vmul.f32 %v276, %v296
      %v309 = vmul.f32 %v277, %v292
      %v310 = vmul.f32 %v278, %v296
      %v311 = vmul.f32 %v279, %v292
      %v312 = vmul.f32 %v280, %v296
      %v313 = vmul.f32 %v281, %v292
      %v314 = vmul.f32 %v282, %v296
      %v315 = vmul.f32 %v283, %v292
      %v316 = vmul.f32 %v284, %v296
      %v317 = vmul.f32 %v285, %v292
      %v318 = vmul.f32 %v286, %v296
      %v319 = vld [vmem:[%s3] sm:$0x3]
      %v321 = vlaneseq
      %v322 = vshrl.u32 %v321, 7
      %v323 = vsub.s32 0, %v322
      %v324 = vrot.slane %v319, %v323
      %v325 = vlaneseq
      %v326 = vshrl.u32 %v325, 7
      %v327 = vsub.s32 1, %v326
      %v328 = vrot.slane %v319, %v327
      %v331 = vadd.f32 %v299, %v324
      %v332 = vadd.f32 %v300, %v328
      %v333 = vadd.f32 %v301, %v324
      %v334 = vadd.f32 %v302, %v328
      %v335 = vadd.f32 %v303, %v324
      %v336 = vadd.f32 %v304, %v328
      %v337 = vadd.f32 %v305, %v324
      %v338 = vadd.f32 %v306, %v328
      %v339 = vadd.f32 %v307, %v324
      %v340 = vadd.f32 %v308, %v328
      %v341 = vadd.f32 %v309, %v324
      %v342 = vadd.f32 %v310, %v328
      %v343 = vadd.f32 %v311, %v324
      %v344 = vadd.f32 %v312, %v328
      %v345 = vadd.f32 %v313, %v324
      %v346 = vadd.f32 %v314, %v328
      %v347 = vadd.f32 %v315, %v324
      %v348 = vadd.f32 %v316, %v328
      %v349 = vadd.f32 %v317, %v324
      %v350 = vadd.f32 %v318, %v328
      %v351 = vmax.f32 %v331, 0.0
      %v352 = vmax.f32 %v332, 0.0
      %v353 = vmax.f32 %v333, 0.0
      %v354 = vmax.f32 %v334, 0.0
      %v355 = vmax.f32 %v335, 0.0
      %v356 = vmax.f32 %v336, 0.0
      %v357 = vmax.f32 %v337, 0.0
      %v358 = vmax.f32 %v338, 0.0
      %v359 = vmax.f32 %v339, 0.0
      %v360 = vmax.f32 %v340, 0.0
      %v361 = vmax.f32 %v341, 0.0
      %v362 = vmax.f32 %v342, 0.0
      %v363 = vmax.f32 %v343, 0.0
      %v364 = vmax.f32 %v344, 0.0
      %v365 = vmax.f32 %v345, 0.0
      %v366 = vmax.f32 %v346, 0.0
      %v367 = vmax.f32 %v347, 0.0
      %v368 = vmax.f32 %v348, 0.0
      %v369 = vmax.f32 %v349, 0.0
      %v370 = vmax.f32 %v350, 0.0
      %s371 = smul.u32 %s22, 8
      %v372 = vstv %s371
      %v373 = vadd.s32 %v372, 1
      %v374 = vadd.s32 %v372, 2
      %v375 = vadd.s32 %v372, 3
      %v376 = vadd.s32 %v372, 4
      %v377 = vadd.s32 %v372, 5
      %v378 = vadd.s32 %v372, 6
      %v379 = vadd.s32 %v372, 7
      %v380 = vadd.s32 %v372, 8
      %v381 = vadd.s32 %v372, 9
      %v382 = vlaneseq
      %v383 = vshrl.u32 %v382, 7
      %v384 = vlaneseq
      %v385 = vand.u32 %v384, 127
      %v386 = vadd.s32 %v385, 128
      %vm387 = vcmp.eq.s32.totalorder %v372, 0
      %vm388 = vcmp.eq.s32.totalorder %v373, 0
      %vm389 = vcmp.eq.s32.totalorder %v374, 0
      %vm390 = vcmp.eq.s32.totalorder %v375, 0
      %vm391 = vcmp.eq.s32.totalorder %v376, 0
      %vm392 = vcmp.eq.s32.totalorder %v377, 0
      %vm393 = vcmp.eq.s32.totalorder %v378, 0
      %vm394 = vcmp.eq.s32.totalorder %v379, 0
      %vm395 = vcmp.eq.s32.totalorder %v380, 0
      %vm396 = vcmp.eq.s32.totalorder %v381, 0
      %vm397 = vcmp.eq.s32.totalorder %v372, 9
      %vm398 = vcmp.eq.s32.totalorder %v373, 9
      %vm399 = vcmp.eq.s32.totalorder %v374, 9
      %vm400 = vcmp.eq.s32.totalorder %v375, 9
      %vm401 = vcmp.eq.s32.totalorder %v376, 9
      %vm402 = vcmp.eq.s32.totalorder %v377, 9
      %vm403 = vcmp.eq.s32.totalorder %v378, 9
      %vm404 = vcmp.eq.s32.totalorder %v379, 9
      %vm405 = vcmp.eq.s32.totalorder %v380, 9
      %vm406 = vcmp.eq.s32.totalorder %v381, 9
      %vm407 = vmor %vm387, %vm397
      %vm408 = vmor %vm388, %vm398
      %vm409 = vmor %vm389, %vm399
      %vm410 = vmor %vm390, %vm400
      %vm411 = vmor %vm391, %vm401
      %vm412 = vmor %vm392, %vm402
      %vm413 = vmor %vm393, %vm403
      %vm414 = vmor %vm394, %vm404
      %vm415 = vmor %vm395, %vm405
      %vm416 = vmor %vm396, %vm406
      %vm417 = vcmp.eq.s32.totalorder %v383, 0
      %vm418 = vcmp.lt.s32.totalorder %v385, 128
      %vm419 = vcmp.lt.s32.totalorder %v386, 128
      %vm420 = vmand %vm417, %vm418
      %vm421 = vmand %vm417, %vm419
      %vm422 = vmor %vm407, %vm420
      %vm423 = vmor %vm407, %vm421
      %vm424 = vmor %vm408, %vm420
      %vm425 = vmor %vm408, %vm421
      %vm426 = vmor %vm409, %vm420
      %vm427 = vmor %vm409, %vm421
      %vm428 = vmor %vm410, %vm420
      %vm429 = vmor %vm410, %vm421
      %vm430 = vmor %vm411, %vm420
      %vm431 = vmor %vm411, %vm421
      %vm432 = vmor %vm412, %vm420
      %vm433 = vmor %vm412, %vm421
      %vm434 = vmor %vm413, %vm420
      %vm435 = vmor %vm413, %vm421
      %vm436 = vmor %vm414, %vm420
      %vm437 = vmor %vm414, %vm421
      %vm438 = vmor %vm415, %vm420
      %vm439 = vmor %vm415, %vm421
      %vm440 = vmor %vm416, %vm420
      %vm441 = vmor %vm416, %vm421
      %vm442 = vcmp.eq.s32.totalorder %v383, 4
      %vm443 = vcmp.ge.s32.totalorder %v385, 128
      %vm444 = vcmp.ge.s32.totalorder %v386, 128
      %vm445 = vmand %vm442, %vm443
      %vm446 = vmand %vm442, %vm444
      %vm447 = vmor %vm422, %vm445
      %vm448 = vmor %vm423, %vm446
      %vm449 = vmor %vm424, %vm445
      %vm450 = vmor %vm425, %vm446
      %vm451 = vmor %vm426, %vm445
      %vm452 = vmor %vm427, %vm446
      %vm453 = vmor %vm428, %vm445
      %vm454 = vmor %vm429, %vm446
      %vm455 = vmor %vm430, %vm445
      %vm456 = vmor %vm431, %vm446
      %vm457 = vmor %vm432, %vm445
      %vm458 = vmor %vm433, %vm446
      %vm459 = vmor %vm434, %vm445
      %vm460 = vmor %vm435, %vm446
      %vm461 = vmor %vm436, %vm445
      %vm462 = vmor %vm437, %vm446
      %vm463 = vmor %vm438, %vm445
      %vm464 = vmor %vm439, %vm446
      %vm465 = vmor %vm440, %vm445
      %vm466 = vmor %vm441, %vm446
      %v467 = vsel %vm447, 0.0, %v351
      %v468 = vsel %vm448, 0.0, %v352
      %v469 = vsel %vm449, 0.0, %v353
      %v470 = vsel %vm450, 0.0, %v354
      %v471 = vsel %vm451, 0.0, %v355
      %v472 = vsel %vm452, 0.0, %v356
      %v473 = vsel %vm453, 0.0, %v357
      %v474 = vsel %vm454, 0.0, %v358
      %v475 = vsel %vm455, 0.0, %v359
      %v476 = vsel %vm456, 0.0, %v360
      %v477 = vsel %vm457, 0.0, %v361
      %v478 = vsel %vm458, 0.0, %v362
      %v479 = vsel %vm459, 0.0, %v363
      %v480 = vsel %vm460, 0.0, %v364
      %v481 = vsel %vm461, 0.0, %v365
      %v482 = vsel %vm462, 0.0, %v366
      %v483 = vsel %vm463, 0.0, %v367
      %v484 = vsel %vm464, 0.0, %v368
      %v485 = vsel %vm465, 0.0, %v369
      %v486 = vsel %vm466, 0.0, %v370
      %v495 = vcombine.low %v467, %v468
      %v496 = vcombine.low %v471, %v472
      %v497 = vcombine.low %v475, %v476
      %v498 = vcombine.low %v479, %v480
      %v499 = vld [vmem:[%s1] sm:$0xff]
      %v500 = vld [vmem:[%s1 + $0x8] sm:$0xff]
      %v501 = vld [vmem:[%s1 + $0x10] sm:$0xff]
      %v502 = vld [vmem:[%s1 + $0x18] sm:$0xff]
      %v503 = vld [vmem:[%s1 + $0x20] sm:$0xff]
      %v504 = vld [vmem:[%s1 + $0x28] sm:$0xff]
      %v505 = vld [vmem:[%s1 + $0x30] sm:$0xff]
      %v506 = vld [vmem:[%s1 + $0x38] sm:$0xff]
      %v507 = vld [vmem:[%s1 + $0x40] sm:$0xff]
      %v508 = vld [vmem:[%s1 + $0x48] sm:$0xff]
      %v509 = vld [vmem:[%s1 + $0x50] sm:$0xff]
      %v510 = vld [vmem:[%s1 + $0x58] sm:$0xff]
      %v511 = vld [vmem:[%s1 + $0x60] sm:$0xff]
      %v512 = vld [vmem:[%s1 + $0x68] sm:$0xff]
      %v513 = vld [vmem:[%s1 + $0x70] sm:$0xff]
      %v514 = vld [vmem:[%s1 + $0x78] sm:$0xff]
      %v515 = vld [vmem:[%s1 + $0x80] sm:$0xff]
      %v516 = vld [vmem:[%s1 + $0x88] sm:$0xff]
      %v517 = vld [vmem:[%s1 + $0x90] sm:$0xff]
      %v518 = vld [vmem:[%s1 + $0x98] sm:$0xff]
      %v519 = vld [vmem:[%s1 + $0xa0] sm:$0xff]
      %v520 = vld [vmem:[%s1 + $0xa8] sm:$0xff]
      %v521 = vld [vmem:[%s1 + $0xb0] sm:$0xff]
      %v522 = vld [vmem:[%s1 + $0xb8] sm:$0xff]
      %v523 = vld [vmem:[%s1 + $0xc0] sm:$0xff]
      %v524 = vld [vmem:[%s1 + $0xc8] sm:$0xff]
      %v525 = vld [vmem:[%s1 + $0xd0] sm:$0xff]
      %v526 = vld [vmem:[%s1 + $0xd8] sm:$0xff]
      %v527 = vld [vmem:[%s1 + $0xe0] sm:$0xff]
      %v528 = vld [vmem:[%s1 + $0xe8] sm:$0xff]
      %v529 = vld [vmem:[%s1 + $0xf0] sm:$0xff]
      %v530 = vld [vmem:[%s1 + $0xf8] sm:$0xff]
      %v531 = vcombine.high %v467, %v468
      %v532 = vcombine.high %v471, %v472
      %v533 = vcombine.high %v475, %v476
      %v534 = vcombine.high %v479, %v480
      %vm535 = vcmask 1042432
      %vm536 = vcmask 1046532
      %vm537 = vmor %vm535, %vm536
      %v538 = vrot.slane %v495, 5
      %v539 = vrot.slane %v538, 4
      %v540 = vrot.slane %v531, 5
      %v541 = vsel %vm537, %v539, %v540
      %v542 = vrot.slane %v496, 5
      %v543 = vrot.slane %v542, 4
      %v544 = vrot.slane %v532, 5
      %v545 = vsel %vm537, %v543, %v544
      %v546 = vrot.slane %v497, 5
      %v547 = vrot.slane %v546, 4
      %v548 = vrot.slane %v533, 5
      %v549 = vsel %vm537, %v547, %v548
      %v550 = vrot.slane %v498, 5
      %v551 = vrot.slane %v550, 4
      %v552 = vrot.slane %v534, 5
      %v553 = vsel %vm537, %v551, %v552
      %v554 = vld [vmem:[%s1 + $0x100] sm:$0xff]
      %v555 = vld [vmem:[%s1 + $0x108] sm:$0xff]
      %v556 = vld [vmem:[%s1 + $0x110] sm:$0xff]
      %v557 = vld [vmem:[%s1 + $0x118] sm:$0xff]
      %v558 = vld [vmem:[%s1 + $0x120] sm:$0xff]
      %v559 = vld [vmem:[%s1 + $0x128] sm:$0xff]
      %v560 = vld [vmem:[%s1 + $0x130] sm:$0xff]
      %v561 = vld [vmem:[%s1 + $0x138] sm:$0xff]
      %v562 = vld [vmem:[%s1 + $0x140] sm:$0xff]
      %v563 = vld [vmem:[%s1 + $0x148] sm:$0xff]
      %v564 = vld [vmem:[%s1 + $0x150] sm:$0xff]
      %v565 = vld [vmem:[%s1 + $0x158] sm:$0xff]
      %v566 = vld [vmem:[%s1 + $0x160] sm:$0xff]
      %v567 = vld [vmem:[%s1 + $0x168] sm:$0xff]
      %v568 = vld [vmem:[%s1 + $0x170] sm:$0xff]
      %v569 = vld [vmem:[%s1 + $0x178] sm:$0xff]
      %v570 = vld [vmem:[%s1 + $0x180] sm:$0xff]
      %v571 = vld [vmem:[%s1 + $0x188] sm:$0xff]
      %v572 = vld [vmem:[%s1 + $0x190] sm:$0xff]
      %v573 = vld [vmem:[%s1 + $0x198] sm:$0xff]
      %v574 = vld [vmem:[%s1 + $0x1a0] sm:$0xff]
      %v575 = vld [vmem:[%s1 + $0x1a8] sm:$0xff]
      %v576 = vld [vmem:[%s1 + $0x1b0] sm:$0xff]
      %v577 = vld [vmem:[%s1 + $0x1b8] sm:$0xff]
      %v578 = vld [vmem:[%s1 + $0x1c0] sm:$0xff]
      %v579 = vld [vmem:[%s1 + $0x1c8] sm:$0xff]
      %v580 = vld [vmem:[%s1 + $0x1d0] sm:$0xff]
      %v581 = vld [vmem:[%s1 + $0x1d8] sm:$0xff]
      %v582 = vld [vmem:[%s1 + $0x1e0] sm:$0xff]
      %v583 = vld [vmem:[%s1 + $0x1e8] sm:$0xff]
      %v584 = vld [vmem:[%s1 + $0x1f0] sm:$0xff]
      %v585 = vld [vmem:[%s1 + $0x1f8] sm:$0xff]
      %v586 = vcombine.low %v541, %v545
      %v587 = vcombine.high %v541, %v545
      %v588 = vcombine.low %v549, %v553
      %v589 = vcombine.high %v549, %v553
      %594 = vmatprep.subr.mxu0 0.0
      %595 = vmatpush1.msra.mxu0 %v554
      %596 = vmatprep.subr.mxu0 0.0
      %597 = vmatpush1.msra.mxu0 %v555
      %598 = vmatprep.subr.mxu0 0.0
      %599 = vmatpush1.msra.mxu0 %v556
      %600 = vmatprep.subr.mxu0 0.0
      %601 = vmatpush1.msra.mxu0 %v557
      %602 = vmatprep.subr.mxu0 0.0
      %603 = vmatpush1.msra.mxu0 %v558
      %604 = vmatprep.subr.mxu0 0.0
      %605 = vmatpush1.msra.mxu0 %v559
      %606 = vmatprep.subr.mxu0 0.0
      %607 = vmatpush1.msra.mxu0 %v560
      %608 = vmatprep.subr.mxu0 0.0
      %609 = vmatpush1.msra.mxu0 %v561
      %610 = vmatprep.subr.mxu0 0.0
      %611 = vmatpush1.msra.mxu0 %v562
      %612 = vmatprep.subr.mxu0 0.0
      %613 = vmatpush1.msra.mxu0 %v563
      %614 = vmatprep.subr.mxu0 0.0
      %615 = vmatpush1.msra.mxu0 %v564
      %616 = vmatprep.subr.mxu0 0.0
      %617 = vmatpush1.msra.mxu0 %v565
      %618 = vmatprep.subr.mxu0 0.0
      %619 = vmatpush1.msra.mxu0 %v566
      %620 = vmatprep.subr.mxu0 0.0
      %621 = vmatpush1.msra.mxu0 %v567
      %622 = vmatprep.subr.mxu0 0.0
      %623 = vmatpush1.msra.mxu0 %v568
      %624 = vmatprep.subr.mxu0 0.0
      %625 = vmatpush1.msra.mxu0 %v569
      %626 = vmatprep.subr.mxu0 0.0
      %627 = vmatpush1.msra.mxu0 %v570
      %628 = vmatprep.subr.mxu0 0.0
      %629 = vmatpush1.msra.mxu0 %v571
      %630 = vmatprep.subr.mxu0 0.0
      %631 = vmatpush1.msra.mxu0 %v572
      %632 = vmatprep.subr.mxu0 0.0
      %633 = vmatpush1.msra.mxu0 %v573
      %634 = vmatprep.subr.mxu0 0.0
      %635 = vmatpush1.msra.mxu0 %v574
      %636 = vmatprep.subr.mxu0 0.0
      %637 = vmatpush1.msra.mxu0 %v575
      %638 = vmatprep.subr.mxu0 0.0
      %639 = vmatpush1.msra.mxu0 %v576
      %640 = vmatprep.subr.mxu0 0.0
      %641 = vmatpush1.msra.mxu0 %v577
      %642 = vmatprep.subr.mxu0 0.0
      %643 = vmatpush1.msra.mxu0 %v578
      %644 = vmatprep.subr.mxu0 0.0
      %645 = vmatpush1.msra.mxu0 %v579
      %646 = vmatprep.subr.mxu0 0.0
      %647 = vmatpush1.msra.mxu0 %v580
      %648 = vmatprep.subr.mxu0 0.0
      %649 = vmatpush1.msra.mxu0 %v581
      %650 = vmatprep.subr.mxu0 0.0
      %651 = vmatpush1.msra.mxu0 %v582
      %652 = vmatprep.subr.mxu0 0.0
      %653 = vmatpush1.msra.mxu0 %v583
      %654 = vmatprep.subr.mxu0 0.0
      %655 = vmatpush1.msra.mxu0 %v584
      %656 = vmatprep.subr.mxu0 0.0
      %657 = vmatpush1.msra.mxu0 %v585
      %658 = vmatprep.mubr.f32.mxu0 %v587
      %659 = vmatmul.mubr.f32.gmra.mrb[0].mxu0 %v586
      %v660 = vpop.f32.mrb[0].mxu0
      %v661 = vadd.f32 0.0, %v660
      %v662 = vpop.f32.mrb[0].mxu0
      %663 = vmatprep.mubr.f32.mxu0 %v589
      %664 = vmatmul.mubr.f32.gmra.mrb[0].mxu0 %v588
      %v665 = vpop.f32.mrb[0].mxu0
      %v666 = vadd.f32 0.0, %v665
      %v667 = vpop.f32.mrb[0].mxu0
      %668 = vdwg.mxu0
      %v669 = vcombine.low %v495, %v496
      %v670 = vcombine.high %v495, %v496
      %v671 = vcombine.low %v497, %v498
      %v672 = vcombine.high %v497, %v498
      %677 = vmatprep.subr.mxu0 0.0
      %678 = vmatpush1.msra.mxu0 %v499
      %679 = vmatprep.subr.mxu0 0.0
      %680 = vmatpush1.msra.mxu0 %v500
      %681 = vmatprep.subr.mxu0 0.0
      %682 = vmatpush1.msra.mxu0 %v501
      %683 = vmatprep.subr.mxu0 0.0
      %684 = vmatpush1.msra.mxu0 %v502
      %685 = vmatprep.subr.mxu0 0.0
      %686 = vmatpush1.msra.mxu0 %v503
      %687 = vmatprep.subr.mxu0 0.0
      %688 = vmatpush1.msra.mxu0 %v504
      %689 = vmatprep.subr.mxu0 0.0
      %690 = vmatpush1.msra.mxu0 %v505
      %691 = vmatprep.subr.mxu0 0.0
      %692 = vmatpush1.msra.mxu0 %v506
      %693 = vmatprep.subr.mxu0 0.0
      %694 = vmatpush1.msra.mxu0 %v507
      %695 = vmatprep.subr.mxu0 0.0
      %696 = vmatpush1.msra.mxu0 %v508
      %697 = vmatprep.subr.mxu0 0.0
      %698 = vmatpush1.msra.mxu0 %v509
      %699 = vmatprep.subr.mxu0 0.0
      %700 = vmatpush1.msra.mxu0 %v510
      %701 = vmatprep.subr.mxu0 0.0
      %702 = vmatpush1.msra.mxu0 %v511
      %703 = vmatprep.subr.mxu0 0.0
      %704 = vmatpush1.msra.mxu0 %v512
      %705 = vmatprep.subr.mxu0 0.0
      %706 = vmatpush1.msra.mxu0 %v513
      %707 = vmatprep.subr.mxu0 0.0
      %708 = vmatpush1.msra.mxu0 %v514
      %709 = vmatprep.subr.mxu0 0.0
      %710 = vmatpush1.msra.mxu0 %v515
      %711 = vmatprep.subr.mxu0 0.0
      %712 = vmatpush1.msra.mxu0 %v516
      %713 = vmatprep.subr.mxu0 0.0
      %714 = vmatpush1.msra.mxu0 %v517
      %715 = vmatprep.subr.mxu0 0.0
      %716 = vmatpush1.msra.mxu0 %v518
      %717 = vmatprep.subr.mxu0 0.0
      %718 = vmatpush1.msra.mxu0 %v519
      %719 = vmatprep.subr.mxu0 0.0
      %720 = vmatpush1.msra.mxu0 %v520
      %721 = vmatprep.subr.mxu0 0.0
      %722 = vmatpush1.msra.mxu0 %v521
      %723 = vmatprep.subr.mxu0 0.0
      %724 = vmatpush1.msra.mxu0 %v522
      %725 = vmatprep.subr.mxu0 0.0
      %726 = vmatpush1.msra.mxu0 %v523
      %727 = vmatprep.subr.mxu0 0.0
      %728 = vmatpush1.msra.mxu0 %v524
      %729 = vmatprep.subr.mxu0 0.0
      %730 = vmatpush1.msra.mxu0 %v525
      %731 = vmatprep.subr.mxu0 0.0
      %732 = vmatpush1.msra.mxu0 %v526
      %733 = vmatprep.subr.mxu0 0.0
      %734 = vmatpush1.msra.mxu0 %v527
      %735 = vmatprep.subr.mxu0 0.0
      %736 = vmatpush1.msra.mxu0 %v528
      %737 = vmatprep.subr.mxu0 0.0
      %738 = vmatpush1.msra.mxu0 %v529
      %739 = vmatprep.subr.mxu0 0.0
      %740 = vmatpush1.msra.mxu0 %v530
      %741 = vmatprep.mubr.f32.mxu0 %v670
      %742 = vmatmul.mubr.f32.gmra.mrb[0].mxu0 %v669
      %v743 = vpop.f32.mrb[0].mxu0
      %v744 = vadd.f32 %v661, %v743
      %v745 = vpop.f32.mrb[0].mxu0
      %746 = vmatprep.mubr.f32.mxu0 %v672
      %747 = vmatmul.mubr.f32.gmra.mrb[0].mxu0 %v671
      %v748 = vpop.f32.mrb[0].mxu0
      %v749 = vadd.f32 %v666, %v748
      %v750 = vpop.f32.mrb[0].mxu0
      %751 = vdwg.mxu0
      %v760 = vcombine.low %v469, %v470
      %v761 = vcombine.low %v473, %v474
      %v762 = vcombine.low %v477, %v478
      %v763 = vcombine.low %v481, %v482
      %v764 = vld [vmem:[%s1 + $0x200] sm:$0xff]
      %v765 = vld [vmem:[%s1 + $0x208] sm:$0xff]
      %v766 = vld [vmem:[%s1 + $0x210] sm:$0xff]
      %v767 = vld [vmem:[%s1 + $0x218] sm:$0xff]
      %v768 = vld [vmem:[%s1 + $0x220] sm:$0xff]
      %v769 = vld [vmem:[%s1 + $0x228] sm:$0xff]
      %v770 = vld [vmem:[%s1 + $0x230] sm:$0xff]
      %v771 = vld [vmem:[%s1 + $0x238] sm:$0xff]
      %v772 = vld [vmem:[%s1 + $0x240] sm:$0xff]
      %v773 = vld [vmem:[%s1 + $0x248] sm:$0xff]
      %v774 = vld [vmem:[%s1 + $0x250] sm:$0xff]
      %v775 = vld [vmem:[%s1 + $0x258] sm:$0xff]
      %v776 = vld [vmem:[%s1 + $0x260] sm:$0xff]
      %v777 = vld [vmem:[%s1 + $0x268] sm:$0xff]
      %v778 = vld [vmem:[%s1 + $0x270] sm:$0xff]
      %v779 = vld [vmem:[%s1 + $0x278] sm:$0xff]
      %v780 = vld [vmem:[%s1 + $0x280] sm:$0xff]
      %v781 = vld [vmem:[%s1 + $0x288] sm:$0xff]
      %v782 = vld [vmem:[%s1 + $0x290] sm:$0xff]
      %v783 = vld [vmem:[%s1 + $0x298] sm:$0xff]
      %v784 = vld [vmem:[%s1 + $0x2a0] sm:$0xff]
      %v785 = vld [vmem:[%s1 + $0x2a8] sm:$0xff]
      %v786 = vld [vmem:[%s1 + $0x2b0] sm:$0xff]
      %v787 = vld [vmem:[%s1 + $0x2b8] sm:$0xff]
      %v788 = vld [vmem:[%s1 + $0x2c0] sm:$0xff]
      %v789 = vld [vmem:[%s1 + $0x2c8] sm:$0xff]
      %v790 = vld [vmem:[%s1 + $0x2d0] sm:$0xff]
      %v791 = vld [vmem:[%s1 + $0x2d8] sm:$0xff]
      %v792 = vld [vmem:[%s1 + $0x2e0] sm:$0xff]
      %v793 = vld [vmem:[%s1 + $0x2e8] sm:$0xff]
      %v794 = vld [vmem:[%s1 + $0x2f0] sm:$0xff]
      %v795 = vld [vmem:[%s1 + $0x2f8] sm:$0xff]
      %v796 = vcombine.low %v760, %v761
      %v797 = vcombine.high %v760, %v761
      %v798 = vcombine.low %v762, %v763
      %v799 = vcombine.high %v762, %v763
      %804 = vmatprep.subr.mxu0 0.0
      %805 = vmatpush1.msra.mxu0 %v764
      %806 = vmatprep.subr.mxu0 0.0
      %807 = vmatpush1.msra.mxu0 %v765
      %808 = vmatprep.subr.mxu0 0.0
      %809 = vmatpush1.msra.mxu0 %v766
      %810 = vmatprep.subr.mxu0 0.0
      %811 = vmatpush1.msra.mxu0 %v767
      %812 = vmatprep.subr.mxu0 0.0
      %813 = vmatpush1.msra.mxu0 %v768
      %814 = vmatprep.subr.mxu0 0.0
      %815 = vmatpush1.msra.mxu0 %v769
      %816 = vmatprep.subr.mxu0 0.0
      %817 = vmatpush1.msra.mxu0 %v770
      %818 = vmatprep.subr.mxu0 0.0
      %819 = vmatpush1.msra.mxu0 %v771
      %820 = vmatprep.subr.mxu0 0.0
      %821 = vmatpush1.msra.mxu0 %v772
      %822 = vmatprep.subr.mxu0 0.0
      %823 = vmatpush1.msra.mxu0 %v773
      %824 = vmatprep.subr.mxu0 0.0
      %825 = vmatpush1.msra.mxu0 %v774
      %826 = vmatprep.subr.mxu0 0.0
      %827 = vmatpush1.msra.mxu0 %v775
      %828 = vmatprep.subr.mxu0 0.0
      %829 = vmatpush1.msra.mxu0 %v776
      %830 = vmatprep.subr.mxu0 0.0
      %831 = vmatpush1.msra.mxu0 %v777
      %832 = vmatprep.subr.mxu0 0.0
      %833 = vmatpush1.msra.mxu0 %v778
      %834 = vmatprep.subr.mxu0 0.0
      %835 = vmatpush1.msra.mxu0 %v779
      %836 = vmatprep.subr.mxu0 0.0
      %837 = vmatpush1.msra.mxu0 %v780
      %838 = vmatprep.subr.mxu0 0.0
      %839 = vmatpush1.msra.mxu0 %v781
      %840 = vmatprep.subr.mxu0 0.0
      %841 = vmatpush1.msra.mxu0 %v782
      %842 = vmatprep.subr.mxu0 0.0
      %843 = vmatpush1.msra.mxu0 %v783
      %844 = vmatprep.subr.mxu0 0.0
      %845 = vmatpush1.msra.mxu0 %v784
      %846 = vmatprep.subr.mxu0 0.0
      %847 = vmatpush1.msra.mxu0 %v785
      %848 = vmatprep.subr.mxu0 0.0
      %849 = vmatpush1.msra.mxu0 %v786
      %850 = vmatprep.subr.mxu0 0.0
      %851 = vmatpush1.msra.mxu0 %v787
      %852 = vmatprep.subr.mxu0 0.0
      %853 = vmatpush1.msra.mxu0 %v788
      %854 = vmatprep.subr.mxu0 0.0
      %855 = vmatpush1.msra.mxu0 %v789
      %856 = vmatprep.subr.mxu0 0.0
      %857 = vmatpush1.msra.mxu0 %v790
      %858 = vmatprep.subr.mxu0 0.0
      %859 = vmatpush1.msra.mxu0 %v791
      %860 = vmatprep.subr.mxu0 0.0
      %861 = vmatpush1.msra.mxu0 %v792
      %862 = vmatprep.subr.mxu0 0.0
      %863 = vmatpush1.msra.mxu0 %v793
      %864 = vmatprep.subr.mxu0 0.0
      %865 = vmatpush1.msra.mxu0 %v794
      %866 = vmatprep.subr.mxu0 0.0
      %867 = vmatpush1.msra.mxu0 %v795
      %868 = vmatprep.mubr.f32.mxu0 %v797
      %869 = vmatmul.mubr.f32.gmra.mrb[0].mxu0 %v796
      %v870 = vpop.f32.mrb[0].mxu0
      %v871 = vadd.f32 0.0, %v870
      %v872 = vpop.f32.mrb[0].mxu0
      %873 = vmatprep.mubr.f32.mxu0 %v799
      %874 = vmatmul.mubr.f32.gmra.mrb[0].mxu0 %v798
      %v875 = vpop.f32.mrb[0].mxu0
      %v876 = vadd.f32 0.0, %v875
      %v877 = vpop.f32.mrb[0].mxu0
      %878 = vdwg.mxu0
      %v879 = vadd.f32 %v744, %v871
      %v880 = vadd.f32 %v749, %v876
      %v881 = vcombine.high %v469, %v470
      %v882 = vcombine.high %v473, %v474
      %v883 = vcombine.high %v477, %v478
      %v884 = vcombine.high %v481, %v482
      %v885 = vrot.slane %v760, 5
      %v886 = vrot.slane %v885, 4
      %v887 = vrot.slane %v881, 5
      %v888 = vsel %vm537, %v886, %v887
      %v889 = vrot.slane %v761, 5
      %v890 = vrot.slane %v889, 4
      %v891 = vrot.slane %v882, 5
      %v892 = vsel %vm537, %v890, %v891
      %v893 = vrot.slane %v762, 5
      %v894 = vrot.slane %v893, 4
      %v895 = vrot.slane %v883, 5
      %v896 = vsel %vm537, %v894, %v895
      %v897 = vrot.slane %v763, 5
      %v898 = vrot.slane %v897, 4
      %v899 = vrot.slane %v884, 5
      %v900 = vsel %vm537, %v898, %v899
      %v901 = vld [vmem:[%s1 + $0x300] sm:$0xff]
      %v902 = vld [vmem:[%s1 + $0x308] sm:$0xff]
      %v903 = vld [vmem:[%s1 + $0x310] sm:$0xff]
      %v904 = vld [vmem:[%s1 + $0x318] sm:$0xff]
      %v905 = vld [vmem:[%s1 + $0x320] sm:$0xff]
      %v906 = vld [vmem:[%s1 + $0x328] sm:$0xff]
      %v907 = vld [vmem:[%s1 + $0x330] sm:$0xff]
      %v908 = vld [vmem:[%s1 + $0x338] sm:$0xff]
      %v909 = vld [vmem:[%s1 + $0x340] sm:$0xff]
      %v910 = vld [vmem:[%s1 + $0x348] sm:$0xff]
      %v911 = vld [vmem:[%s1 + $0x350] sm:$0xff]
      %v912 = vld [vmem:[%s1 + $0x358] sm:$0xff]
      %v913 = vld [vmem:[%s1 + $0x360] sm:$0xff]
      %v914 = vld [vmem:[%s1 + $0x368] sm:$0xff]
      %v915 = vld [vmem:[%s1 + $0x370] sm:$0xff]
      %v916 = vld [vmem:[%s1 + $0x378] sm:$0xff]
      %v917 = vld [vmem:[%s1 + $0x380] sm:$0xff]
      %v918 = vld [vmem:[%s1 + $0x388] sm:$0xff]
      %v919 = vld [vmem:[%s1 + $0x390] sm:$0xff]
      %v920 = vld [vmem:[%s1 + $0x398] sm:$0xff]
      %v921 = vld [vmem:[%s1 + $0x3a0] sm:$0xff]
      %v922 = vld [vmem:[%s1 + $0x3a8] sm:$0xff]
      %v923 = vld [vmem:[%s1 + $0x3b0] sm:$0xff]
      %v924 = vld [vmem:[%s1 + $0x3b8] sm:$0xff]
      %v925 = vld [vmem:[%s1 + $0x3c0] sm:$0xff]
      %v926 = vld [vmem:[%s1 + $0x3c8] sm:$0xff]
      %v927 = vld [vmem:[%s1 + $0x3d0] sm:$0xff]
      %v928 = vld [vmem:[%s1 + $0x3d8] sm:$0xff]
      %v929 = vld [vmem:[%s1 + $0x3e0] sm:$0xff]
      %v930 = vld [vmem:[%s1 + $0x3e8] sm:$0xff]
      %v931 = vld [vmem:[%s1 + $0x3f0] sm:$0xff]
      %v932 = vld [vmem:[%s1 + $0x3f8] sm:$0xff]
      %v933 = vcombine.low %v888, %v892
      %v934 = vcombine.high %v888, %v892
      %v935 = vcombine.low %v896, %v900
      %v936 = vcombine.high %v896, %v900
      %941 = vmatprep.subr.mxu0 0.0
      %942 = vmatpush1.msra.mxu0 %v901
      %943 = vmatprep.subr.mxu0 0.0
      %944 = vmatpush1.msra.mxu0 %v902
      %945 = vmatprep.subr.mxu0 0.0
      %946 = vmatpush1.msra.mxu0 %v903
      %947 = vmatprep.subr.mxu0 0.0
      %948 = vmatpush1.msra.mxu0 %v904
      %949 = vmatprep.subr.mxu0 0.0
      %950 = vmatpush1.msra.mxu0 %v905
      %951 = vmatprep.subr.mxu0 0.0
      %952 = vmatpush1.msra.mxu0 %v906
      %953 = vmatprep.subr.mxu0 0.0
      %954 = vmatpush1.msra.mxu0 %v907
      %955 = vmatprep.subr.mxu0 0.0
      %956 = vmatpush1.msra.mxu0 %v908
      %957 = vmatprep.subr.mxu0 0.0
      %958 = vmatpush1.msra.mxu0 %v909
      %959 = vmatprep.subr.mxu0 0.0
      %960 = vmatpush1.msra.mxu0 %v910
      %961 = vmatprep.subr.mxu0 0.0
      %962 = vmatpush1.msra.mxu0 %v911
      %963 = vmatprep.subr.mxu0 0.0
      %964 = vmatpush1.msra.mxu0 %v912
      %965 = vmatprep.subr.mxu0 0.0
      %966 = vmatpush1.msra.mxu0 %v913
      %967 = vmatprep.subr.mxu0 0.0
      %968 = vmatpush1.msra.mxu0 %v914
      %969 = vmatprep.subr.mxu0 0.0
      %970 = vmatpush1.msra.mxu0 %v915
      %971 = vmatprep.subr.mxu0 0.0
      %972 = vmatpush1.msra.mxu0 %v916
      %973 = vmatprep.subr.mxu0 0.0
      %974 = vmatpush1.msra.mxu0 %v917
      %975 = vmatprep.subr.mxu0 0.0
      %976 = vmatpush1.msra.mxu0 %v918
      %977 = vmatprep.subr.mxu0 0.0
      %978 = vmatpush1.msra.mxu0 %v919
      %979 = vmatprep.subr.mxu0 0.0
      %980 = vmatpush1.msra.mxu0 %v920
      %981 = vmatprep.subr.mxu0 0.0
      %982 = vmatpush1.msra.mxu0 %v921
      %983 = vmatprep.subr.mxu0 0.0
      %984 = vmatpush1.msra.mxu0 %v922
      %985 = vmatprep.subr.mxu0 0.0
      %986 = vmatpush1.msra.mxu0 %v923
      %987 = vmatprep.subr.mxu0 0.0
      %988 = vmatpush1.msra.mxu0 %v924
      %989 = vmatprep.subr.mxu0 0.0
      %990 = vmatpush1.msra.mxu0 %v925
      %991 = vmatprep.subr.mxu0 0.0
      %992 = vmatpush1.msra.mxu0 %v926
      %993 = vmatprep.subr.mxu0 0.0
      %994 = vmatpush1.msra.mxu0 %v927
      %995 = vmatprep.subr.mxu0 0.0
      %996 = vmatpush1.msra.mxu0 %v928
      %997 = vmatprep.subr.mxu0 0.0
      %998 = vmatpush1.msra.mxu0 %v929
      %999 = vmatprep.subr.mxu0 0.0
      %1000 = vmatpush1.msra.mxu0 %v930
      %1001 = vmatprep.subr.mxu0 0.0
      %1002 = vmatpush1.msra.mxu0 %v931
      %1003 = vmatprep.subr.mxu0 0.0
      %1004 = vmatpush1.msra.mxu0 %v932
      %1005 = vmatprep.mubr.f32.mxu0 %v934
      %1006 = vmatmul.mubr.f32.gmra.mrb[0].mxu0 %v933
      %v1007 = vpop.f32.mrb[0].mxu0
      %v1008 = vadd.f32 0.0, %v1007
      %v1009 = vpop.f32.mrb[0].mxu0
      %1010 = vmatprep.mubr.f32.mxu0 %v936
      %1011 = vmatmul.mubr.f32.gmra.mrb[0].mxu0 %v935
      %v1012 = vpop.f32.mrb[0].mxu0
      %v1013 = vadd.f32 0.0, %v1012
      %v1014 = vpop.f32.mrb[0].mxu0
      %1015 = vdwg.mxu0
      %v1016 = vadd.f32 %v879, %v1008
      %v1017 = vadd.f32 %v880, %v1013
      %v1020 = vcombine.low %v483, %v484
      %v1021 = vld [vmem:[%s1 + $0x400] sm:$0xff]
      %v1022 = vld [vmem:[%s1 + $0x408] sm:$0xff]
      %v1023 = vld [vmem:[%s1 + $0x410] sm:$0xff]
      %v1024 = vld [vmem:[%s1 + $0x418] sm:$0xff]
      %v1025 = vld [vmem:[%s1 + $0x420] sm:$0xff]
      %v1026 = vld [vmem:[%s1 + $0x428] sm:$0xff]
      %v1027 = vld [vmem:[%s1 + $0x430] sm:$0xff]
      %v1028 = vld [vmem:[%s1 + $0x438] sm:$0xff]
      %v1029 = vld [vmem:[%s1 + $0x440] sm:$0xff]
      %v1030 = vld [vmem:[%s1 + $0x448] sm:$0xff]
      %v1031 = vld [vmem:[%s1 + $0x450] sm:$0xff]
      %v1032 = vld [vmem:[%s1 + $0x458] sm:$0xff]
      %v1033 = vld [vmem:[%s1 + $0x460] sm:$0xff]
      %v1034 = vld [vmem:[%s1 + $0x468] sm:$0xff]
      %v1035 = vld [vmem:[%s1 + $0x470] sm:$0xff]
      %v1036 = vld [vmem:[%s1 + $0x478] sm:$0xff]
      %v1037 = vld [vmem:[%s1 + $0x480] sm:$0xff]
      %v1038 = vld [vmem:[%s1 + $0x488] sm:$0xff]
      %v1039 = vld [vmem:[%s1 + $0x490] sm:$0xff]
      %v1040 = vld [vmem:[%s1 + $0x498] sm:$0xff]
      %v1041 = vld [vmem:[%s1 + $0x4a0] sm:$0xff]
      %v1042 = vld [vmem:[%s1 + $0x4a8] sm:$0xff]
      %v1043 = vld [vmem:[%s1 + $0x4b0] sm:$0xff]
      %v1044 = vld [vmem:[%s1 + $0x4b8] sm:$0xff]
      %v1045 = vld [vmem:[%s1 + $0x4c0] sm:$0xff]
      %v1046 = vld [vmem:[%s1 + $0x4c8] sm:$0xff]
      %v1047 = vld [vmem:[%s1 + $0x4d0] sm:$0xff]
      %v1048 = vld [vmem:[%s1 + $0x4d8] sm:$0xff]
      %v1049 = vld [vmem:[%s1 + $0x4e0] sm:$0xff]
      %v1050 = vld [vmem:[%s1 + $0x4e8] sm:$0xff]
      %v1051 = vld [vmem:[%s1 + $0x4f0] sm:$0xff]
      %v1052 = vld [vmem:[%s1 + $0x4f8] sm:$0xff]
      %v1053 = vcombine.low %v496, %v497
      %v1054 = vcombine.high %v496, %v497
      %v1055 = vcombine.low %v498, %v1020
      %v1056 = vcombine.high %v498, %v1020
      %1061 = vmatprep.subr.mxu0 0.0
      %1062 = vmatpush1.msra.mxu0 %v1021
      %1063 = vmatprep.subr.mxu0 0.0
      %1064 = vmatpush1.msra.mxu0 %v1022
      %1065 = vmatprep.subr.mxu0 0.0
      %1066 = vmatpush1.msra.mxu0 %v1023
      %1067 = vmatprep.subr.mxu0 0.0
      %1068 = vmatpush1.msra.mxu0 %v1024
      %1069 = vmatprep.subr.mxu0 0.0
      %1070 = vmatpush1.msra.mxu0 %v1025
      %1071 = vmatprep.subr.mxu0 0.0
      %1072 = vmatpush1.msra.mxu0 %v1026
      %1073 = vmatprep.subr.mxu0 0.0
      %1074 = vmatpush1.msra.mxu0 %v1027
      %1075 = vmatprep.subr.mxu0 0.0
      %1076 = vmatpush1.msra.mxu0 %v1028
      %1077 = vmatprep.subr.mxu0 0.0
      %1078 = vmatpush1.msra.mxu0 %v1029
      %1079 = vmatprep.subr.mxu0 0.0
      %1080 = vmatpush1.msra.mxu0 %v1030
      %1081 = vmatprep.subr.mxu0 0.0
      %1082 = vmatpush1.msra.mxu0 %v1031
      %1083 = vmatprep.subr.mxu0 0.0
      %1084 = vmatpush1.msra.mxu0 %v1032
      %1085 = vmatprep.subr.mxu0 0.0
      %1086 = vmatpush1.msra.mxu0 %v1033
      %1087 = vmatprep.subr.mxu0 0.0
      %1088 = vmatpush1.msra.mxu0 %v1034
      %1089 = vmatprep.subr.mxu0 0.0
      %1090 = vmatpush1.msra.mxu0 %v1035
      %1091 = vmatprep.subr.mxu0 0.0
      %1092 = vmatpush1.msra.mxu0 %v1036
      %1093 = vmatprep.subr.mxu0 0.0
      %1094 = vmatpush1.msra.mxu0 %v1037
      %1095 = vmatprep.subr.mxu0 0.0
      %1096 = vmatpush1.msra.mxu0 %v1038
      %1097 = vmatprep.subr.mxu0 0.0
      %1098 = vmatpush1.msra.mxu0 %v1039
      %1099 = vmatprep.subr.mxu0 0.0
      %1100 = vmatpush1.msra.mxu0 %v1040
      %1101 = vmatprep.subr.mxu0 0.0
      %1102 = vmatpush1.msra.mxu0 %v1041
      %1103 = vmatprep.subr.mxu0 0.0
      %1104 = vmatpush1.msra.mxu0 %v1042
      %1105 = vmatprep.subr.mxu0 0.0
      %1106 = vmatpush1.msra.mxu0 %v1043
      %1107 = vmatprep.subr.mxu0 0.0
      %1108 = vmatpush1.msra.mxu0 %v1044
      %1109 = vmatprep.subr.mxu0 0.0
      %1110 = vmatpush1.msra.mxu0 %v1045
      %1111 = vmatprep.subr.mxu0 0.0
      %1112 = vmatpush1.msra.mxu0 %v1046
      %1113 = vmatprep.subr.mxu0 0.0
      %1114 = vmatpush1.msra.mxu0 %v1047
      %1115 = vmatprep.subr.mxu0 0.0
      %1116 = vmatpush1.msra.mxu0 %v1048
      %1117 = vmatprep.subr.mxu0 0.0
      %1118 = vmatpush1.msra.mxu0 %v1049
      %1119 = vmatprep.subr.mxu0 0.0
      %1120 = vmatpush1.msra.mxu0 %v1050
      %1121 = vmatprep.subr.mxu0 0.0
      %1122 = vmatpush1.msra.mxu0 %v1051
      %1123 = vmatprep.subr.mxu0 0.0
      %1124 = vmatpush1.msra.mxu0 %v1052
      %1125 = vmatprep.mubr.f32.mxu0 %v1054
      %1126 = vmatmul.mubr.f32.gmra.mrb[0].mxu0 %v1053
      %v1127 = vpop.f32.mrb[0].mxu0
      %v1128 = vadd.f32 0.0, %v1127
      %v1129 = vpop.f32.mrb[0].mxu0
      %1130 = vmatprep.mubr.f32.mxu0 %v1056
      %1131 = vmatmul.mubr.f32.gmra.mrb[0].mxu0 %v1055
      %v1132 = vpop.f32.mrb[0].mxu0
      %v1133 = vadd.f32 0.0, %v1132
      %v1134 = vpop.f32.mrb[0].mxu0
      %1135 = vdwg.mxu0
      %v1136 = vadd.f32 %v1016, %v1128
      %v1137 = vadd.f32 %v1017, %v1133
      %v1138 = vcombine.high %v483, %v484
      %v1139 = vrot.slane %v1020, 5
      %v1140 = vrot.slane %v1139, 4
      %v1141 = vrot.slane %v1138, 5
      %v1142 = vsel %vm537, %v1140, %v1141
      %v1143 = vld [vmem:[%s1 + $0x500] sm:$0xff]
      %v1144 = vld [vmem:[%s1 + $0x508] sm:$0xff]
      %v1145 = vld [vmem:[%s1 + $0x510] sm:$0xff]
      %v1146 = vld [vmem:[%s1 + $0x518] sm:$0xff]
      %v1147 = vld [vmem:[%s1 + $0x520] sm:$0xff]
      %v1148 = vld [vmem:[%s1 + $0x528] sm:$0xff]
      %v1149 = vld [vmem:[%s1 + $0x530] sm:$0xff]
      %v1150 = vld [vmem:[%s1 + $0x538] sm:$0xff]
      %v1151 = vld [vmem:[%s1 + $0x540] sm:$0xff]
      %v1152 = vld [vmem:[%s1 + $0x548] sm:$0xff]
      %v1153 = vld [vmem:[%s1 + $0x550] sm:$0xff]
      %v1154 = vld [vmem:[%s1 + $0x558] sm:$0xff]
      %v1155 = vld [vmem:[%s1 + $0x560] sm:$0xff]
      %v1156 = vld [vmem:[%s1 + $0x568] sm:$0xff]
      %v1157 = vld [vmem:[%s1 + $0x570] sm:$0xff]
      %v1158 = vld [vmem:[%s1 + $0x578] sm:$0xff]
      %v1159 = vld [vmem:[%s1 + $0x580] sm:$0xff]
      %v1160 = vld [vmem:[%s1 + $0x588] sm:$0xff]
      %v1161 = vld [vmem:[%s1 + $0x590] sm:$0xff]
      %v1162 = vld [vmem:[%s1 + $0x598] sm:$0xff]
      %v1163 = vld [vmem:[%s1 + $0x5a0] sm:$0xff]
      %v1164 = vld [vmem:[%s1 + $0x5a8] sm:$0xff]
      %v1165 = vld [vmem:[%s1 + $0x5b0] sm:$0xff]
      %v1166 = vld [vmem:[%s1 + $0x5b8] sm:$0xff]
      %v1167 = vld [vmem:[%s1 + $0x5c0] sm:$0xff]
      %v1168 = vld [vmem:[%s1 + $0x5c8] sm:$0xff]
      %v1169 = vld [vmem:[%s1 + $0x5d0] sm:$0xff]
      %v1170 = vld [vmem:[%s1 + $0x5d8] sm:$0xff]
      %v1171 = vld [vmem:[%s1 + $0x5e0] sm:$0xff]
      %v1172 = vld [vmem:[%s1 + $0x5e8] sm:$0xff]
      %v1173 = vld [vmem:[%s1 + $0x5f0] sm:$0xff]
      %v1174 = vld [vmem:[%s1 + $0x5f8] sm:$0xff]
      %v1175 = vcombine.low %v545, %v549
      %v1176 = vcombine.high %v545, %v549
      %v1177 = vcombine.low %v553, %v1142
      %v1178 = vcombine.high %v553, %v1142
      %1183 = vmatprep.subr.mxu0 0.0
      %1184 = vmatpush1.msra.mxu0 %v1143
      %1185 = vmatprep.subr.mxu0 0.0
      %1186 = vmatpush1.msra.mxu0 %v1144
      %1187 = vmatprep.subr.mxu0 0.0
      %1188 = vmatpush1.msra.mxu0 %v1145
      %1189 = vmatprep.subr.mxu0 0.0
      %1190 = vmatpush1.msra.mxu0 %v1146
      %1191 = vmatprep.subr.mxu0 0.0
      %1192 = vmatpush1.msra.mxu0 %v1147
      %1193 = vmatprep.subr.mxu0 0.0
      %1194 = vmatpush1.msra.mxu0 %v1148
      %1195 = vmatprep.subr.mxu0 0.0
      %1196 = vmatpush1.msra.mxu0 %v1149
      %1197 = vmatprep.subr.mxu0 0.0
      %1198 = vmatpush1.msra.mxu0 %v1150
      %1199 = vmatprep.subr.mxu0 0.0
      %1200 = vmatpush1.msra.mxu0 %v1151
      %1201 = vmatprep.subr.mxu0 0.0
      %1202 = vmatpush1.msra.mxu0 %v1152
      %1203 = vmatprep.subr.mxu0 0.0
      %1204 = vmatpush1.msra.mxu0 %v1153
      %1205 = vmatprep.subr.mxu0 0.0
      %1206 = vmatpush1.msra.mxu0 %v1154
      %1207 = vmatprep.subr.mxu0 0.0
      %1208 = vmatpush1.msra.mxu0 %v1155
      %1209 = vmatprep.subr.mxu0 0.0
      %1210 = vmatpush1.msra.mxu0 %v1156
      %1211 = vmatprep.subr.mxu0 0.0
      %1212 = vmatpush1.msra.mxu0 %v1157
      %1213 = vmatprep.subr.mxu0 0.0
      %1214 = vmatpush1.msra.mxu0 %v1158
      %1215 = vmatprep.subr.mxu0 0.0
      %1216 = vmatpush1.msra.mxu0 %v1159
      %1217 = vmatprep.subr.mxu0 0.0
      %1218 = vmatpush1.msra.mxu0 %v1160
      %1219 = vmatprep.subr.mxu0 0.0
      %1220 = vmatpush1.msra.mxu0 %v1161
      %1221 = vmatprep.subr.mxu0 0.0
      %1222 = vmatpush1.msra.mxu0 %v1162
      %1223 = vmatprep.subr.mxu0 0.0
      %1224 = vmatpush1.msra.mxu0 %v1163
      %1225 = vmatprep.subr.mxu0 0.0
      %1226 = vmatpush1.msra.mxu0 %v1164
      %1227 = vmatprep.subr.mxu0 0.0
      %1228 = vmatpush1.msra.mxu0 %v1165
      %1229 = vmatprep.subr.mxu0 0.0
      %1230 = vmatpush1.msra.mxu0 %v1166
      %1231 = vmatprep.subr.mxu0 0.0
      %1232 = vmatpush1.msra.mxu0 %v1167
      %1233 = vmatprep.subr.mxu0 0.0
      %1234 = vmatpush1.msra.mxu0 %v1168
      %1235 = vmatprep.subr.mxu0 0.0
      %1236 = vmatpush1.msra.mxu0 %v1169
      %1237 = vmatprep.subr.mxu0 0.0
      %1238 = vmatpush1.msra.mxu0 %v1170
      %1239 = vmatprep.subr.mxu0 0.0
      %1240 = vmatpush1.msra.mxu0 %v1171
      %1241 = vmatprep.subr.mxu0 0.0
      %1242 = vmatpush1.msra.mxu0 %v1172
      %1243 = vmatprep.subr.mxu0 0.0
      %1244 = vmatpush1.msra.mxu0 %v1173
      %1245 = vmatprep.subr.mxu0 0.0
      %1246 = vmatpush1.msra.mxu0 %v1174
      %1247 = vmatprep.mubr.f32.mxu0 %v1176
      %1248 = vmatmul.mubr.f32.gmra.mrb[0].mxu0 %v1175
      %v1249 = vpop.f32.mrb[0].mxu0
      %v1250 = vadd.f32 0.0, %v1249
      %v1251 = vpop.f32.mrb[0].mxu0
      %1252 = vmatprep.mubr.f32.mxu0 %v1178
      %1253 = vmatmul.mubr.f32.gmra.mrb[0].mxu0 %v1177
      %v1254 = vpop.f32.mrb[0].mxu0
      %v1255 = vadd.f32 0.0, %v1254
      %v1256 = vpop.f32.mrb[0].mxu0
      %1257 = vdwg.mxu0
      %v1258 = vadd.f32 %v1136, %v1250
      %v1259 = vadd.f32 %v1137, %v1255
      %v1262 = vcombine.low %v485, %v486
      %v1263 = vld [vmem:[%s1 + $0x600] sm:$0xff]
      %v1264 = vld [vmem:[%s1 + $0x608] sm:$0xff]
      %v1265 = vld [vmem:[%s1 + $0x610] sm:$0xff]
      %v1266 = vld [vmem:[%s1 + $0x618] sm:$0xff]
      %v1267 = vld [vmem:[%s1 + $0x620] sm:$0xff]
      %v1268 = vld [vmem:[%s1 + $0x628] sm:$0xff]
      %v1269 = vld [vmem:[%s1 + $0x630] sm:$0xff]
      %v1270 = vld [vmem:[%s1 + $0x638] sm:$0xff]
      %v1271 = vld [vmem:[%s1 + $0x640] sm:$0xff]
      %v1272 = vld [vmem:[%s1 + $0x648] sm:$0xff]
      %v1273 = vld [vmem:[%s1 + $0x650] sm:$0xff]
      %v1274 = vld [vmem:[%s1 + $0x658] sm:$0xff]
      %v1275 = vld [vmem:[%s1 + $0x660] sm:$0xff]
      %v1276 = vld [vmem:[%s1 + $0x668] sm:$0xff]
      %v1277 = vld [vmem:[%s1 + $0x670] sm:$0xff]
      %v1278 = vld [vmem:[%s1 + $0x678] sm:$0xff]
      %v1279 = vld [vmem:[%s1 + $0x680] sm:$0xff]
      %v1280 = vld [vmem:[%s1 + $0x688] sm:$0xff]
      %v1281 = vld [vmem:[%s1 + $0x690] sm:$0xff]
      %v1282 = vld [vmem:[%s1 + $0x698] sm:$0xff]
      %v1283 = vld [vmem:[%s1 + $0x6a0] sm:$0xff]
      %v1284 = vld [vmem:[%s1 + $0x6a8] sm:$0xff]
      %v1285 = vld [vmem:[%s1 + $0x6b0] sm:$0xff]
      %v1286 = vld [vmem:[%s1 + $0x6b8] sm:$0xff]
      %v1287 = vld [vmem:[%s1 + $0x6c0] sm:$0xff]
      %v1288 = vld [vmem:[%s1 + $0x6c8] sm:$0xff]
      %v1289 = vld [vmem:[%s1 + $0x6d0] sm:$0xff]
      %v1290 = vld [vmem:[%s1 + $0x6d8] sm:$0xff]
      %v1291 = vld [vmem:[%s1 + $0x6e0] sm:$0xff]
      %v1292 = vld [vmem:[%s1 + $0x6e8] sm:$0xff]
      %v1293 = vld [vmem:[%s1 + $0x6f0] sm:$0xff]
      %v1294 = vld [vmem:[%s1 + $0x6f8] sm:$0xff]
      %v1295 = vcombine.low %v761, %v762
      %v1296 = vcombine.high %v761, %v762
      %v1297 = vcombine.low %v763, %v1262
      %v1298 = vcombine.high %v763, %v1262
      %1303 = vmatprep.subr.mxu0 0.0
      %1304 = vmatpush1.msra.mxu0 %v1263
      %1305 = vmatprep.subr.mxu0 0.0
      %1306 = vmatpush1.msra.mxu0 %v1264
      %1307 = vmatprep.subr.mxu0 0.0
      %1308 = vmatpush1.msra.mxu0 %v1265
      %1309 = vmatprep.subr.mxu0 0.0
      %1310 = vmatpush1.msra.mxu0 %v1266
      %1311 = vmatprep.subr.mxu0 0.0
      %1312 = vmatpush1.msra.mxu0 %v1267
      %1313 = vmatprep.subr.mxu0 0.0
      %1314 = vmatpush1.msra.mxu0 %v1268
      %1315 = vmatprep.subr.mxu0 0.0
      %1316 = vmatpush1.msra.mxu0 %v1269
      %1317 = vmatprep.subr.mxu0 0.0
      %1318 = vmatpush1.msra.mxu0 %v1270
      %1319 = vmatprep.subr.mxu0 0.0
      %1320 = vmatpush1.msra.mxu0 %v1271
      %1321 = vmatprep.subr.mxu0 0.0
      %1322 = vmatpush1.msra.mxu0 %v1272
      %1323 = vmatprep.subr.mxu0 0.0
      %1324 = vmatpush1.msra.mxu0 %v1273
      %1325 = vmatprep.subr.mxu0 0.0
      %1326 = vmatpush1.msra.mxu0 %v1274
      %1327 = vmatprep.subr.mxu0 0.0
      %1328 = vmatpush1.msra.mxu0 %v1275
      %1329 = vmatprep.subr.mxu0 0.0
      %1330 = vmatpush1.msra.mxu0 %v1276
      %1331 = vmatprep.subr.mxu0 0.0
      %1332 = vmatpush1.msra.mxu0 %v1277
      %1333 = vmatprep.subr.mxu0 0.0
      %1334 = vmatpush1.msra.mxu0 %v1278
      %1335 = vmatprep.subr.mxu0 0.0
      %1336 = vmatpush1.msra.mxu0 %v1279
      %1337 = vmatprep.subr.mxu0 0.0
      %1338 = vmatpush1.msra.mxu0 %v1280
      %1339 = vmatprep.subr.mxu0 0.0
      %1340 = vmatpush1.msra.mxu0 %v1281
      %1341 = vmatprep.subr.mxu0 0.0
      %1342 = vmatpush1.msra.mxu0 %v1282
      %1343 = vmatprep.subr.mxu0 0.0
      %1344 = vmatpush1.msra.mxu0 %v1283
      %1345 = vmatprep.subr.mxu0 0.0
      %1346 = vmatpush1.msra.mxu0 %v1284
      %1347 = vmatprep.subr.mxu0 0.0
      %1348 = vmatpush1.msra.mxu0 %v1285
      %1349 = vmatprep.subr.mxu0 0.0
      %1350 = vmatpush1.msra.mxu0 %v1286
      %1351 = vmatprep.subr.mxu0 0.0
      %1352 = vmatpush1.msra.mxu0 %v1287
      %1353 = vmatprep.subr.mxu0 0.0
      %1354 = vmatpush1.msra.mxu0 %v1288
      %1355 = vmatprep.subr.mxu0 0.0
      %1356 = vmatpush1.msra.mxu0 %v1289
      %1357 = vmatprep.subr.mxu0 0.0
      %1358 = vmatpush1.msra.mxu0 %v1290
      %1359 = vmatprep.subr.mxu0 0.0
      %1360 = vmatpush1.msra.mxu0 %v1291
      %1361 = vmatprep.subr.mxu0 0.0
      %1362 = vmatpush1.msra.mxu0 %v1292
      %1363 = vmatprep.subr.mxu0 0.0
      %1364 = vmatpush1.msra.mxu0 %v1293
      %1365 = vmatprep.subr.mxu0 0.0
      %1366 = vmatpush1.msra.mxu0 %v1294
      %1367 = vmatprep.mubr.f32.mxu0 %v1296
      %1368 = vmatmul.mubr.f32.gmra.mrb[0].mxu0 %v1295
      %v1369 = vpop.f32.mrb[0].mxu0
      %v1370 = vadd.f32 0.0, %v1369
      %v1371 = vpop.f32.mrb[0].mxu0
      %1372 = vmatprep.mubr.f32.mxu0 %v1298
      %1373 = vmatmul.mubr.f32.gmra.mrb[0].mxu0 %v1297
      %v1374 = vpop.f32.mrb[0].mxu0
      %v1375 = vadd.f32 0.0, %v1374
      %v1376 = vpop.f32.mrb[0].mxu0
      %1377 = vdwg.mxu0
      %v1378 = vadd.f32 %v1258, %v1370
      %v1379 = vadd.f32 %v1259, %v1375
      %v1380 = vcombine.high %v485, %v486
      %v1381 = vrot.slane %v1262, 5
      %v1382 = vrot.slane %v1381, 4
      %v1383 = vrot.slane %v1380, 5
      %v1384 = vsel %vm537, %v1382, %v1383
      %v1385 = vld [vmem:[%s1 + $0x700] sm:$0xff]
      %v1386 = vld [vmem:[%s1 + $0x708] sm:$0xff]
      %v1387 = vld [vmem:[%s1 + $0x710] sm:$0xff]
      %v1388 = vld [vmem:[%s1 + $0x718] sm:$0xff]
      %v1389 = vld [vmem:[%s1 + $0x720] sm:$0xff]
      %v1390 = vld [vmem:[%s1 + $0x728] sm:$0xff]
      %v1391 = vld [vmem:[%s1 + $0x730] sm:$0xff]
      %v1392 = vld [vmem:[%s1 + $0x738] sm:$0xff]
      %v1393 = vld [vmem:[%s1 + $0x740] sm:$0xff]
      %v1394 = vld [vmem:[%s1 + $0x748] sm:$0xff]
      %v1395 = vld [vmem:[%s1 + $0x750] sm:$0xff]
      %v1396 = vld [vmem:[%s1 + $0x758] sm:$0xff]
      %v1397 = vld [vmem:[%s1 + $0x760] sm:$0xff]
      %v1398 = vld [vmem:[%s1 + $0x768] sm:$0xff]
      %v1399 = vld [vmem:[%s1 + $0x770] sm:$0xff]
      %v1400 = vld [vmem:[%s1 + $0x778] sm:$0xff]
      %v1401 = vld [vmem:[%s1 + $0x780] sm:$0xff]
      %v1402 = vld [vmem:[%s1 + $0x788] sm:$0xff]
      %v1403 = vld [vmem:[%s1 + $0x790] sm:$0xff]
      %v1404 = vld [vmem:[%s1 + $0x798] sm:$0xff]
      %v1405 = vld [vmem:[%s1 + $0x7a0] sm:$0xff]
      %v1406 = vld [vmem:[%s1 + $0x7a8] sm:$0xff]
      %v1407 = vld [vmem:[%s1 + $0x7b0] sm:$0xff]
      %v1408 = vld [vmem:[%s1 + $0x7b8] sm:$0xff]
      %v1409 = vld [vmem:[%s1 + $0x7c0] sm:$0xff]
      %v1410 = vld [vmem:[%s1 + $0x7c8] sm:$0xff]
      %v1411 = vld [vmem:[%s1 + $0x7d0] sm:$0xff]
      %v1412 = vld [vmem:[%s1 + $0x7d8] sm:$0xff]
      %v1413 = vld [vmem:[%s1 + $0x7e0] sm:$0xff]
      %v1414 = vld [vmem:[%s1 + $0x7e8] sm:$0xff]
      %v1415 = vld [vmem:[%s1 + $0x7f0] sm:$0xff]
      %v1416 = vld [vmem:[%s1 + $0x7f8] sm:$0xff]
      %v1417 = vcombine.low %v892, %v896
      %v1418 = vcombine.high %v892, %v896
      %v1419 = vcombine.low %v900, %v1384
      %v1420 = vcombine.high %v900, %v1384
      %1425 = vmatprep.subr.mxu0 0.0
      %1426 = vmatpush1.msra.mxu0 %v1385
      %1427 = vmatprep.subr.mxu0 0.0
      %1428 = vmatpush1.msra.mxu0 %v1386
      %1429 = vmatprep.subr.mxu0 0.0
      %1430 = vmatpush1.msra.mxu0 %v1387
      %1431 = vmatprep.subr.mxu0 0.0
      %1432 = vmatpush1.msra.mxu0 %v1388
      %1433 = vmatprep.subr.mxu0 0.0
      %1434 = vmatpush1.msra.mxu0 %v1389
      %1435 = vmatprep.subr.mxu0 0.0
      %1436 = vmatpush1.msra.mxu0 %v1390
      %1437 = vmatprep.subr.mxu0 0.0
      %1438 = vmatpush1.msra.mxu0 %v1391
      %1439 = vmatprep.subr.mxu0 0.0
      %1440 = vmatpush1.msra.mxu0 %v1392
      %1441 = vmatprep.subr.mxu0 0.0
      %1442 = vmatpush1.msra.mxu0 %v1393
      %1443 = vmatprep.subr.mxu0 0.0
      %1444 = vmatpush1.msra.mxu0 %v1394
      %1445 = vmatprep.subr.mxu0 0.0
      %1446 = vmatpush1.msra.mxu0 %v1395
      %1447 = vmatprep.subr.mxu0 0.0
      %1448 = vmatpush1.msra.mxu0 %v1396
      %1449 = vmatprep.subr.mxu0 0.0
      %1450 = vmatpush1.msra.mxu0 %v1397
      %1451 = vmatprep.subr.mxu0 0.0
      %1452 = vmatpush1.msra.mxu0 %v1398
      %1453 = vmatprep.subr.mxu0 0.0
      %1454 = vmatpush1.msra.mxu0 %v1399
      %1455 = vmatprep.subr.mxu0 0.0
      %1456 = vmatpush1.msra.mxu0 %v1400
      %1457 = vmatprep.subr.mxu0 0.0
      %1458 = vmatpush1.msra.mxu0 %v1401
      %1459 = vmatprep.subr.mxu0 0.0
      %1460 = vmatpush1.msra.mxu0 %v1402
      %1461 = vmatprep.subr.mxu0 0.0
      %1462 = vmatpush1.msra.mxu0 %v1403
      %1463 = vmatprep.subr.mxu0 0.0
      %1464 = vmatpush1.msra.mxu0 %v1404
      %1465 = vmatprep.subr.mxu0 0.0
      %1466 = vmatpush1.msra.mxu0 %v1405
      %1467 = vmatprep.subr.mxu0 0.0
      %1468 = vmatpush1.msra.mxu0 %v1406
      %1469 = vmatprep.subr.mxu0 0.0
      %1470 = vmatpush1.msra.mxu0 %v1407
      %1471 = vmatprep.subr.mxu0 0.0
      %1472 = vmatpush1.msra.mxu0 %v1408
      %1473 = vmatprep.subr.mxu0 0.0
      %1474 = vmatpush1.msra.mxu0 %v1409
      %1475 = vmatprep.subr.mxu0 0.0
      %1476 = vmatpush1.msra.mxu0 %v1410
      %1477 = vmatprep.subr.mxu0 0.0
      %1478 = vmatpush1.msra.mxu0 %v1411
      %1479 = vmatprep.subr.mxu0 0.0
      %1480 = vmatpush1.msra.mxu0 %v1412
      %1481 = vmatprep.subr.mxu0 0.0
      %1482 = vmatpush1.msra.mxu0 %v1413
      %1483 = vmatprep.subr.mxu0 0.0
      %1484 = vmatpush1.msra.mxu0 %v1414
      %1485 = vmatprep.subr.mxu0 0.0
      %1486 = vmatpush1.msra.mxu0 %v1415
      %1487 = vmatprep.subr.mxu0 0.0
      %1488 = vmatpush1.msra.mxu0 %v1416
      %1489 = vmatprep.mubr.f32.mxu0 %v1418
      %1490 = vmatmul.mubr.f32.gmra.mrb[0].mxu0 %v1417
      %v1491 = vpop.f32.mrb[0].mxu0
      %v1492 = vadd.f32 0.0, %v1491
      %v1493 = vpop.f32.mrb[0].mxu0
      %1494 = vmatprep.mubr.f32.mxu0 %v1420
      %1495 = vmatmul.mubr.f32.gmra.mrb[0].mxu0 %v1419
      %v1496 = vpop.f32.mrb[0].mxu0
      %v1497 = vadd.f32 0.0, %v1496
      %v1498 = vpop.f32.mrb[0].mxu0
      %1499 = vdwg.mxu0
      %v1500 = vadd.f32 %v1378, %v1492
      %v1501 = vadd.f32 %v1379, %v1497
      %v1504 = vcombine.high %v1500, %v1500
      %v1505 = vcombine.high %v1501, %v1501
      %1508 = vst [vmem:[%s258] sm:$0xf] %v1500
      %1509 = vst [vmem:[%s258 + $0x4] sm:$0xf] %v1504
      %1510 = vst [vmem:[%s258 + $0x8] sm:$0xf] %v1501
      %1511 = vst [vmem:[%s258 + $0xc] sm:$0xf] %v1505
      %v1512 = vadd.f32 %v1500, %v1501
      %v1513 = vrot.slane %v1512, 4
      %v1514 = vadd.f32 %v1512, %v1513
      %v1515 = vrot.slane %v1514, 2
      %v1516 = vadd.f32 %v1514, %v1515
      %v1517 = vrot.slane %v1516, 1
      %v1518 = vadd.f32 %v1516, %v1517
      %v1519 = vmul.f32 %v1500, %v1500
      %v1520 = vmul.f32 %v1501, %v1501
      %v1521 = vadd.f32 %v1519, %v1520
      %v1522 = vrot.slane %v1521, 4
      %v1523 = vadd.f32 %v1521, %v1522
      %v1524 = vrot.slane %v1523, 2
      %v1525 = vadd.f32 %v1523, %v1524
      %v1526 = vrot.slane %v1525, 1
      %v1527 = vadd.f32 %v1525, %v1526
      %vm1528 = vcmask 1040384
      %v1529 = vsel %vm1528, %v1518, %v1527
      %1530 = vst [vmem:[%s266] sm:$0x3] %v1529
      %s1531 = smul.u32 4, %s22
      %p1532 = scmp.lt.s32.totalorder %s21, 1
      %s1533 = scalar_select %p1532, %s21, 1
      %p1534 = scmp.lt.s32.totalorder %s1531, 3
      %s1535 = scalar_select %p1534, %s1531, 3
      %s1536 = smul.addr %s1533, 4
      %s1537 = sadd.s32 %s1535, %s1536
      %s1538 = smul.addr %s1537, 4
      %s1539 = scalar_lea.vmem %s4, %s1538
      %p1540 = scmp.lt.s32.totalorder %s21, 1
      %s1541 = scalar_select %p1540, %s21, 1
      %p1542 = scmp.lt.s32.totalorder %s22, 0
      %s1543 = scalar_select %p1542, %s22, 0
      %s1544 = sadd.s32 %s1543, %s1541
      %s1545 = smul.addr %s1544, 2
      %s1546 = scalar_lea.vmem %s5, %s1545
      // Predicated region
      $region37: #{residual_upsample_block.3} parent=35 // pred_check
        %p1547 = pneg %p138
      $region38: #{residual_upsample_block.3} parent=35 // pred_check_branch
        %1549 = sbr.rel (%p1547) target = $region40
      $region39: #{residual_upsample_block.3} parent=35 // pred_region
        %s1550 = smul.u32 4, %s22
      $region40: #{residual_upsample_block.3} parent=35 // pred_fallthru
        _
      // Predicated region
      $region41: #{residual_upsample_block.3} parent=35 // pred_check
        %p1551 = pneg %p166
      $region42: #{residual_upsample_block.3} parent=35 // pred_check_branch
        %1553 = sbr.rel (%p1551) target = $region44
      $region43: #{residual_upsample_block.3} parent=35 // pred_region
        _
      $region44: #{residual_upsample_block.3} parent=35 // pred_fallthru
        _
    $region36: #{residual_upsample_block.3} parent=5 // pred_fallthru
      _
    %p1554 = scmp.le.s32.totalorder 2, %s12
    // Predicated region
    $region45: #{residual_upsample_block.3} parent=5 // pred_check
      %p1555 = pneg %p1554
    $region46: #{residual_upsample_block.3} parent=5 // pred_check_branch
      %1557 = sbr.rel (%p1555) target = $region48
    $region47: #{residual_upsample_block.3} parent=5 // pred_region
      %s1558 = ssub.s32 %s12, 2
      // Predicated region
      $region49: #{residual_upsample_block.3} parent=47 // pred_check
        %p1559 = pneg %p144
      $region50: #{residual_upsample_block.3} parent=47 // pred_check_branch
        %1561 = sbr.rel (%p1559) target = $region52
      $region51: #{residual_upsample_block.3} parent=47 // pred_region
        %s1562 = smul.u32 4, %s24
        %p1563 = scmp.lt.s32.totalorder %s23, 1
        %s1564 = scalar_select %p1563, %s23, 1
        %p1565 = scmp.lt.s32.totalorder %s1562, 3
        %s1566 = scalar_select %p1565, %s1562, 3
        %s1567 = smul.addr %s1564, 4
        %s1568 = sadd.s32 %s1566, %s1567
        %s1569 = smul.addr %s1568, 4
        %s1570 = scalar_lea.vmem %s4, %s1569
      $region52: #{residual_upsample_block.3} parent=47 // pred_fallthru
        _
      // Predicated region
      $region53: #{residual_upsample_block.3} parent=47 // pred_check
        %p1571 = pneg %p172
      $region54: #{residual_upsample_block.3} parent=47 // pred_check_branch
        %1573 = sbr.rel (%p1571) target = $region56
      $region55: #{residual_upsample_block.3} parent=47 // pred_region
        %p1574 = scmp.lt.s32.totalorder %s23, 1
        %s1575 = scalar_select %p1574, %s23, 1
        %p1576 = scmp.lt.s32.totalorder %s24, 0
        %s1577 = scalar_select %p1576, %s24, 0
        %s1578 = sadd.s32 %s1577, %s1575
        %s1579 = smul.addr %s1578, 2
        %s1580 = scalar_lea.vmem %s5, %s1579
      $region56: #{residual_upsample_block.3} parent=47 // pred_fallthru
        _
    $region48: #{residual_upsample_block.3} parent=5 // pred_fallthru
      _
  $region6: #{residual_upsample_block.3} parent=0 // loop_footer
    %s16 = sadd.s32 1, %s12
  $region7: #{residual_upsample_block.3} parent=0 // loop_footer_branch
    %11 = sbr.rel target = $region3
  $region8: #{residual_upsample_block.3} parent=0 // loop_exit
    _

</llo_original>
